<compile_context>
chip_gen: v7x
topology: tpu7x:2x2x1
jax: 0.10.0
libtpu: 0.0.40
codegen_flags: <defaults>
</compile_context>

<pallas_src>
import functools

import jax
import jax.numpy as jnp
from jax.experimental import pallas as pl
from jax.experimental.pallas import tpu as pltpu


# -----------------------------------------------------------------------------
# Fused kernel: the full ReStyle loop in one kernel invocation (no scratch).
# -----------------------------------------------------------------------------
def _resetgan2_kernel(
    # inputs (all resident in VMEM for the whole call)
    x_in_ref,      # (B, P)      f32   flattened x_in (loop-invariant)
    s_ref,         # (B, Ns, D)  f32   set conditioning (loop-invariant)
    imgs0_ref,     # (2B, P)     f32   stacked [x_out0 ; y0]
    z0_ref,        # (B, D)      f32   latent_avg broadcast
    encx_w_ref,    # (P, D)      bf16  two-image encoder, x_in half (hoisted use)
    enc_w_ref,     # (P, 4D)     bf16  [enco | enc1 | enco@Wg_x | enc1@Wg_y]
    enc2_b_ref,    # (1, D)      f32
    enc1_b_ref,    # (1, D)      f32
    wg_s_ref,      # (D, D)      f32   gate weights for pooled set codes
    wg_y_ref,      # (D, D)      f32   gate weight on z_Y (hoisted fp32 use)
    wg_x_ref,      # (D, D)      f32   gate weight on z_X (hoisted fp32 use)
    bg_ref,        # (1, D)      f32
    dec_w_ref,     # (D, P)      bf16
    dec_b_ref,     # (1, P)      f32
    # per-iteration outputs
    y_out_ref,     # (iters, B, P) f32
    xout_out_ref,  # (iters, B, P) f32
    zy_out_ref,    # (iters, B, D) f32
    zx_out_ref,    # (iters, B, D) f32
    *, iters, B, D):
    f32 = jnp.float32
    bf16 = jnp.bfloat16

    # ---- hoisted loop-invariant terms (computed once per call, fp32) --------
    # x_in never changes: its encoder contribution (incl. the 2-image encoder
    # bias) is a constant additive term to z_X inside the loop.
    x_in_contrib = (
        jnp.dot(x_in_ref[...].astype(bf16), encx_w_ref[...],
                preferred_element_type=f32)
        + enc2_b_ref[...])                                          # (B, D)
    # s never changes: its pooled gate contribution (incl. gate bias) is
    # constant too (fp32, tiny).
    s_mean = jnp.mean(s_ref[...], axis=1)                           # (B, D)
    s_contrib = (
        jnp.dot(s_mean, wg_s_ref[...], preferred_element_type=f32)
        + bg_ref[...])                                              # (B, D)

    enc1_b = enc1_b_ref[...]                                        # (1, D)
    z0 = z0_ref[...]                                                # (B, D)
    wg_y = wg_y_ref[...]
    wg_x = wg_x_ref[...]

    # Running gate accumulator  g_t = z_Y_t @ Wg_y + z_X_t @ Wg_x.
    # Its initial value and its constant per-iteration increment are tiny
    # hoisted fp32 matmuls (no per-iteration DxD gate matmul remains).
    g = (jnp.dot(z0, wg_y, preferred_element_type=f32)
         + jnp.dot(z0, wg_x, preferred_element_type=f32))           # (B, D)
    g_const = (
        jnp.dot(jnp.broadcast_to(enc1_b, (B, D)), wg_y,
                preferred_element_type=f32)
        + jnp.dot(x_in_contrib, wg_x, preferred_element_type=f32))  # (B, D)

    # ---- ReStyle iterations --------------------------------------------------
    # iters is a static, tiny trip count: fully unroll at trace time; all
    # loop-carried state stays in vregs (no VMEM scratch round trips).
    imgs = imgs0_ref[...]          # (2B, P): rows [:B] = x_out, rows [B:] = y
    zy = z0
    zx = z0

    for t in range(iters):
        # ONE fused big-K encode matmul per iteration.  RHS column blocks:
        #   [0:D]    enco_w          -> z_X increment   (uses x_out rows)
        #   [D:2D]   enc1_w          -> z_Y increment   (uses y rows)
        #   [2D:3D]  enco_w @ Wg_x   -> gate increment  (uses x_out rows)
        #   [3D:4D]  enc1_w @ Wg_y   -> gate increment  (uses y rows)
        enc = jnp.dot(imgs.astype(bf16), enc_w_ref[...],
                      preferred_element_type=f32)                    # (2B, 4D)

        zx = zx + x_in_contrib + enc[:B, 0:D]
        zy = zy + enc[B:, D:2 * D] + enc1_b
        g = g + g_const + enc[:B, 2 * D:3 * D] + enc[B:, 3 * D:4 * D]

        gate = jax.nn.sigmoid(s_contrib + g)           # fp32 elementwise
        w_lat = zy + gate * (zx - zy)                  # blend z_Y <-> z_X

        # Fused decode of z_X and W with ONE stacked (2B, D) x (D, P) matmul;
        # LHS built in vregs (no scratch).  Row order [z_X ; W] so the decoded
        # stack is [x_out ; y] and can be fed straight back into the next
        # iteration's encode.
        dec_lhs = jnp.concatenate([zx, w_lat], axis=0).astype(bf16)  # (2B, D)
        imgs = jnp.tanh(
            jnp.dot(dec_lhs, dec_w_ref[...], preferred_element_type=f32)
            + dec_b_ref[...])                                        # (2B, P)

        # per-iteration outputs (static leading index; P is lane-dense)
        xout_out_ref[t] = imgs[:B]
        y_out_ref[t] = imgs[B:]
        zy_out_ref[t] = zy
        zx_out_ref[t] = zx


# -----------------------------------------------------------------------------
# jitted forward wrapper (single grid-less pallas_call; everything fits VMEM)
# -----------------------------------------------------------------------------
def _forward(params, x_in, s, x_out0, y0, iters):
    B, C, H, W = x_in.shape
    P = C * H * W
    D = params["latent_avg"].shape[1]

    def flat(img):
        return img.reshape(B, P)

    z0 = jnp.broadcast_to(params["latent_avg"], (B, D)).astype(jnp.float32)
    # Pre-stacked initial images [x_out0 ; y0]; the kernel then reuses its own
    # decoded stack as the next encode LHS (no per-iteration stacking).
    imgs0 = jnp.concatenate([flat(x_out0), flat(y0)], axis=0)        # (2B, P)

    kernel = functools.partial(_resetgan2_kernel, iters=iters, B=B, D=D)
    vmem = lambda: pl.BlockSpec(memory_space=pltpu.MemorySpace.VMEM)

    y_seq, xo_seq, zy_seq, zx_seq = pl.pallas_call(
        kernel,
        out_shape=(
            jax.ShapeDtypeStruct((iters, B, P), jnp.float32),   # Y[1:]
            jax.ShapeDtypeStruct((iters, B, P), jnp.float32),   # X_out[1:]
            jax.ShapeDtypeStruct((iters, B, D), jnp.float32),   # Z_Y[1:]
            jax.ShapeDtypeStruct((iters, B, D), jnp.float32),   # Z_X[1:]
        ),
        in_specs=[vmem() for _ in range(14)],
        out_specs=[vmem() for _ in range(4)],
    )(flat(x_in), s, imgs0, z0,
      params["encx_w"], params["k_enc_w"], params["enc2_b"], params["enc1_b"],
      params["wg_s"], params["wg_y"], params["wg_x"], params["bg"],
      params["dec_w"], params["dec_b"])

    # Reconstruct the list-of-tensors API of the original module.
    Y = [y0] + [y_seq[t].reshape(B, C, H, W) for t in range(iters)]
    X_out = [x_out0] + [xo_seq[t].reshape(B, C, H, W) for t in range(iters)]
    Z_Y = [z0] + [zy_seq[t] for t in range(iters)]
    Z_X = [z0] + [zx_seq[t] for t in range(iters)]
    return Y, X_out, Z_Y, Z_X


resetgan2_forward = jax.jit(_forward, static_argnames=("iters",))


# -----------------------------------------------------------------------------
# Synthetic "model" parameters.  Canonical weights: encoders/decoder bf16,
# gate weights fp32.  Kernel-ready fused encoder weight (P, 4D) is derived by
# composing enc @ Wg in fp32 and casting to bf16 ONCE.
# -----------------------------------------------------------------------------
def make_params(key, B, C, H, W, D):
    P = C * H * W
    ks = jax.random.split(key, 11)
    scale = 0.02
    bf16 = jnp.bfloat16

    def n(k, shape):
        return jax.random.normal(k, shape, jnp.float32) * scale

    encx_w = n(ks[1], (P, D)).astype(bf16)
    enco_w = n(ks[2], (P, D)).astype(bf16)
    enc1_w = n(ks[4], (P, D)).astype(bf16)
    wg_y = n(ks[6], (D, D))
    wg_x = n(ks[7], (D, D))
    wg_s = n(ks[8], (D, D))
    dec_w = n(ks[10], (D, P)).astype(bf16)

    # Fused in-loop encoder weight: [enco | enc1 | enco@Wg_x | enc1@Wg_y].
    # Composition in fp32, single cast to bf16 (exactly one 128-lane tile).
    enco_f = enco_w.astype(jnp.float32)
    enc1_f = enc1_w.astype(jnp.float32)
    k_enc_w = jnp.concatenate(
        [enco_f, enc1_f, enco_f @ wg_x, enc1_f @ wg_y], axis=1).astype(bf16)

    return dict(
        latent_avg=n(ks[0], (1, D)),
        encx_w=encx_w,
        enco_w=enco_w,
        enc2_b=n(ks[3], (1, D)),
        enc1_w=enc1_w,
        enc1_b=n(ks[5], (1, D)),
        wg_s=wg_s,
        wg_y=wg_y,
        wg_x=wg_x,
        bg=n(ks[9], (1, D)),
        dec_w=dec_w,
        dec_b=jnp.zeros((1, P), jnp.float32),
        k_enc_w=k_enc_w,
    )


# -----------------------------------------------------------------------------
# Pure-JAX fp32 reference (same synthetic model) for a sanity check
# -----------------------------------------------------------------------------
def resetgan2_reference(params, x_in, s, x_out0, y0, iters=3):
    B, C, H, W = x_in.shape
    D = params["latent_avg"].shape[1]
    f32 = lambda a: a.astype(jnp.float32)
    flat = lambda img: img.reshape(B, -1)
    z0 = jnp.broadcast_to(params["latent_avg"], (B, D))
    Y, X_out, Z_Y, Z_X = [y0], [x_out0], [z0], [z0]
    s_mean = jnp.mean(s, axis=1)
    for _ in range(iters):
        z_X = (Z_X[-1] + flat(x_in) @ f32(params["encx_w"])
               + flat(X_out[-1]) @ f32(params["enco_w"]) + params["enc2_b"])
        z_Y = Z_Y[-1] + flat(Y[-1]) @ f32(params["enc1_w"]) + params["enc1_b"]
        gate = jax.nn.sigmoid(s_mean @ params["wg_s"] + z_Y @ params["wg_y"]
                              + z_X @ params["wg_x"] + params["bg"])
        w_lat = z_Y + gate * (z_X - z_Y)
        y = jnp.tanh(w_lat @ f32(params["dec_w"]) + params["dec_b"])
        x_out = jnp.tanh(z_X @ f32(params["dec_w"]) + params["dec_b"])
        Y.append(y.reshape(B, C, H, W))
        X_out.append(x_out.reshape(B, C, H, W))
        Z_Y.append(z_Y)
        Z_X.append(z_X)
    return Y, X_out, Z_Y, Z_X


# -----------------------------------------------------------------------------
# main
# -----------------------------------------------------------------------------
if __name__ == "__main__":
    B, C, H, W = 2, 4, 16, 16
    D, N_s, ITERS = 32, 8, 3

    key = jax.random.PRNGKey(0)
    k_in, k_out0, k_y0, k_s, k_params = jax.random.split(key, 5)

    x_in = jax.random.normal(k_in, (B, C, H, W), jnp.float32)
    x_out0 = jax.random.normal(k_out0, (B, C, H, W), jnp.float32)
    y0 = jax.random.normal(k_y0, (B, C, H, W), jnp.float32)
    s = jax.random.normal(k_s, (B, N_s, D), jnp.float32)

    params = make_params(k_params, B, C, H, W, D)

    Y, X_out, Z_Y, Z_X = resetgan2_forward(params, x_in, s, x_out0, y0,
                                           iters=ITERS)

    for seq in (Y, X_out, Z_Y, Z_X):
        for arr in seq:
            jax.block_until_ready(arr)

    assert len(Y) == ITERS + 1 and len(X_out) == ITERS + 1
    assert len(Z_Y) == ITERS + 1 and len(Z_X) == ITERS + 1
    assert Y[-1].shape == (B, C, H, W) and X_out[-1].shape == (B, C, H, W)
    assert Z_Y[-1].shape == (B, D) and Z_X[-1].shape == (B, D)

    # Sanity check vs. pure-JAX fp32 reference.  Tolerance tightened vs. the
    # previous version (kernel uses bf16 MXU operands + one fp32->bf16
    # pre-composition of the gate columns; gate/blend math itself is fp32).
    Y_r, X_r, ZY_r, ZX_r = resetgan2_reference(params, x_in, s, x_out0, y0,
                                               iters=ITERS)
    for got, ref in ((Y, Y_r), (X_out, X_r), (Z_Y, ZY_r), (Z_X, ZX_r)):
        for g, r in zip(got[1:], ref[1:]):
            assert jnp.allclose(g, r, rtol=5e-2, atol=5e-2), float(
                jnp.max(jnp.abs(g - r)))

    print("KERNEL_OK")
</pallas_src>

<mosaic_0001>
module attributes {stable_mosaic.version = 11 : i64} {
  func.func @_resetgan2_kernel(%arg0: memref<2x1024xf32, #tpu.memory_space<vmem>>, %arg1: memref<2x8x32xf32, #tpu.memory_space<vmem>>, %arg2: memref<4x1024xf32, #tpu.memory_space<vmem>>, %arg3: memref<2x32xf32, #tpu.memory_space<vmem>>, %arg4: memref<1024x32xbf16, #tpu.memory_space<vmem>>, %arg5: memref<1024x128xbf16, #tpu.memory_space<vmem>>, %arg6: memref<1x32xf32, #tpu.memory_space<vmem>>, %arg7: memref<1x32xf32, #tpu.memory_space<vmem>>, %arg8: memref<32x32xf32, #tpu.memory_space<vmem>>, %arg9: memref<32x32xf32, #tpu.memory_space<vmem>>, %arg10: memref<32x32xf32, #tpu.memory_space<vmem>>, %arg11: memref<1x32xf32, #tpu.memory_space<vmem>>, %arg12: memref<32x1024xbf16, #tpu.memory_space<vmem>>, %arg13: memref<1x1024xf32, #tpu.memory_space<vmem>>, %arg14: memref<3x2x1024xf32, #tpu.memory_space<vmem>>, %arg15: memref<3x2x1024xf32, #tpu.memory_space<vmem>>, %arg16: memref<3x2x32xf32, #tpu.memory_space<vmem>>, %arg17: memref<3x2x32xf32, #tpu.memory_space<vmem>>) attributes {dimension_semantics = [], scalar_prefetch = 0 : i64, scratch_operands = 0 : i64, tpu.core_type = #tpu.core_type<tc>} {
    %c0 = arith.constant 0 : index
    %c0_0 = arith.constant 0 : index
    %0 = vector.load %arg0[%c0, %c0_0] : memref<2x1024xf32, #tpu.memory_space<vmem>>, vector<2x1024xf32>
    %1 = arith.truncf %0 : vector<2x1024xf32> to vector<2x1024xbf16>
    %c0_1 = arith.constant 0 : index
    %c0_2 = arith.constant 0 : index
    %2 = vector.load %arg4[%c0_1, %c0_2] : memref<1024x32xbf16, #tpu.memory_space<vmem>>, vector<1024x32xbf16>
    %cst = arith.constant dense<0.000000e+00> : vector<2x32xf32>
    %3 = tpu.matmul %1, %2, %cst {dimension_numbers = #tpu.dot_dimension_numbers<[1], [0], [0], [1], [0, 0, 1, 1], [], []>} : vector<2x1024xbf16>, vector<1024x32xbf16>, vector<2x32xf32> -> vector<2x32xf32>
    %c0_3 = arith.constant 0 : index
    %c0_4 = arith.constant 0 : index
    %4 = vector.load %arg6[%c0_3, %c0_4] : memref<1x32xf32, #tpu.memory_space<vmem>>, vector<1x32xf32>
    %5 = vector.broadcast %4 : vector<1x32xf32> to vector<2x32xf32>
    %6 = arith.addf %3, %5 : vector<2x32xf32>
    %c0_5 = arith.constant 0 : index
    %c0_6 = arith.constant 0 : index
    %c0_7 = arith.constant 0 : index
    %7 = vector.load %arg1[%c0_5, %c0_6, %c0_7] : memref<2x8x32xf32, #tpu.memory_space<vmem>>, vector<2x8x32xf32>
    %cst_8 = arith.constant dense<0.000000e+00> : vector<2x32xf32>
    %8 = vector.multi_reduction <add>, %7, %cst_8 [1] : vector<2x8x32xf32> to vector<2x32xf32>
    %cst_9 = arith.constant 8.000000e+00 : f32
    %9 = vector.broadcast %cst_9 : f32 to vector<2x32xf32>
    %10 = arith.divf %8, %9 : vector<2x32xf32>
    %c0_10 = arith.constant 0 : index
    %c0_11 = arith.constant 0 : index
    %11 = vector.load %arg8[%c0_10, %c0_11] : memref<32x32xf32, #tpu.memory_space<vmem>>, vector<32x32xf32>
    %cst_12 = arith.constant dense<0.000000e+00> : vector<2x32xf32>
    %12 = tpu.matmul %10, %11, %cst_12 {dimension_numbers = #tpu.dot_dimension_numbers<[1], [0], [0], [1], [0, 0, 1, 1], [], []>} : vector<2x32xf32>, vector<32x32xf32>, vector<2x32xf32> -> vector<2x32xf32>
    %c0_13 = arith.constant 0 : index
    %c0_14 = arith.constant 0 : index
    %13 = vector.load %arg11[%c0_13, %c0_14] : memref<1x32xf32, #tpu.memory_space<vmem>>, vector<1x32xf32>
    %14 = vector.broadcast %13 : vector<1x32xf32> to vector<2x32xf32>
    %15 = arith.addf %12, %14 : vector<2x32xf32>
    %c0_15 = arith.constant 0 : index
    %c0_16 = arith.constant 0 : index
    %16 = vector.load %arg7[%c0_15, %c0_16] : memref<1x32xf32, #tpu.memory_space<vmem>>, vector<1x32xf32>
    %c0_17 = arith.constant 0 : index
    %c0_18 = arith.constant 0 : index
    %17 = vector.load %arg3[%c0_17, %c0_18] : memref<2x32xf32, #tpu.memory_space<vmem>>, vector<2x32xf32>
    %c0_19 = arith.constant 0 : index
    %c0_20 = arith.constant 0 : index
    %18 = vector.load %arg9[%c0_19, %c0_20] : memref<32x32xf32, #tpu.memory_space<vmem>>, vector<32x32xf32>
    %c0_21 = arith.constant 0 : index
    %c0_22 = arith.constant 0 : index
    %19 = vector.load %arg10[%c0_21, %c0_22] : memref<32x32xf32, #tpu.memory_space<vmem>>, vector<32x32xf32>
    %cst_23 = arith.constant dense<0.000000e+00> : vector<2x32xf32>
    %20 = tpu.matmul %17, %18, %cst_23 {dimension_numbers = #tpu.dot_dimension_numbers<[1], [0], [0], [1], [0, 0, 1, 1], [], []>} : vector<2x32xf32>, vector<32x32xf32>, vector<2x32xf32> -> vector<2x32xf32>
    %cst_24 = arith.constant dense<0.000000e+00> : vector<2x32xf32>
    %21 = tpu.matmul %17, %19, %cst_24 {dimension_numbers = #tpu.dot_dimension_numbers<[1], [0], [0], [1], [0, 0, 1, 1], [], []>} : vector<2x32xf32>, vector<32x32xf32>, vector<2x32xf32> -> vector<2x32xf32>
    %22 = arith.addf %20, %21 : vector<2x32xf32>
    %23 = vector.shape_cast %16 : vector<1x32xf32> to vector<1x32xf32>
    %24 = vector.broadcast %23 : vector<1x32xf32> to vector<2x32xf32>
    %cst_25 = arith.constant dense<0.000000e+00> : vector<2x32xf32>
    %25 = tpu.matmul %24, %18, %cst_25 {dimension_numbers = #tpu.dot_dimension_numbers<[1], [0], [0], [1], [0, 0, 1, 1], [], []>} : vector<2x32xf32>, vector<32x32xf32>, vector<2x32xf32> -> vector<2x32xf32>
    %cst_26 = arith.constant dense<0.000000e+00> : vector<2x32xf32>
    %26 = tpu.matmul %6, %19, %cst_26 {dimension_numbers = #tpu.dot_dimension_numbers<[1], [0], [0], [1], [0, 0, 1, 1], [], []>} : vector<2x32xf32>, vector<32x32xf32>, vector<2x32xf32> -> vector<2x32xf32>
    %27 = arith.addf %25, %26 : vector<2x32xf32>
    %c0_27 = arith.constant 0 : index
    %c0_28 = arith.constant 0 : index
    %28 = vector.load %arg2[%c0_27, %c0_28] : memref<4x1024xf32, #tpu.memory_space<vmem>>, vector<4x1024xf32>
    %29 = arith.truncf %28 : vector<4x1024xf32> to vector<4x1024xbf16>
    %c0_29 = arith.constant 0 : index
    %c0_30 = arith.constant 0 : index
    %30 = vector.load %arg5[%c0_29, %c0_30] : memref<1024x128xbf16, #tpu.memory_space<vmem>>, vector<1024x128xbf16>
    %cst_31 = arith.constant dense<0.000000e+00> : vector<4x128xf32>
    %31 = tpu.matmul %29, %30, %cst_31 {dimension_numbers = #tpu.dot_dimension_numbers<[1], [0], [0], [1], [0, 0, 1, 1], [], []>} : vector<4x1024xbf16>, vector<1024x128xbf16>, vector<4x128xf32> -> vector<4x128xf32>
    %32 = arith.addf %17, %6 : vector<2x32xf32>
    %33 = vector.extract_strided_slice %31 {offsets = [0, 0], sizes = [2, 32], strides = [1, 1]} : vector<4x128xf32> to vector<2x32xf32>
    %34 = arith.addf %32, %33 : vector<2x32xf32>
    %35 = vector.extract_strided_slice %31 {offsets = [2, 32], sizes = [2, 32], strides = [1, 1]} : vector<4x128xf32> to vector<2x32xf32>
    %36 = arith.addf %17, %35 : vector<2x32xf32>
    %37 = vector.broadcast %16 : vector<1x32xf32> to vector<2x32xf32>
    %38 = arith.addf %36, %37 : vector<2x32xf32>
    %39 = arith.addf %22, %27 : vector<2x32xf32>
    %40 = vector.extract_strided_slice %31 {offsets = [0, 64], sizes = [2, 32], strides = [1, 1]} : vector<4x128xf32> to vector<2x32xf32>
    %41 = arith.addf %39, %40 : vector<2x32xf32>
    %42 = vector.extract_strided_slice %31 {offsets = [2, 96], sizes = [2, 32], strides = [1, 1]} : vector<4x128xf32> to vector<2x32xf32>
    %43 = arith.addf %41, %42 : vector<2x32xf32>
    %44 = arith.addf %15, %43 : vector<2x32xf32>
    %45 = arith.negf %44 : vector<2x32xf32>
    %46 = math.exp %45 : vector<2x32xf32>
    %cst_32 = arith.constant 1.000000e+00 : f32
    %47 = vector.broadcast %cst_32 : f32 to vector<2x32xf32>
    %48 = arith.addf %47, %46 : vector<2x32xf32>
    %49 = arith.divf %47, %48 : vector<2x32xf32>
    %50 = arith.subf %34, %38 : vector<2x32xf32>
    %51 = arith.mulf %49, %50 : vector<2x32xf32>
    %52 = arith.addf %38, %51 : vector<2x32xf32>
    %53 = tpu.concatenate %34, %52 in 0 : vector<2x32xf32>, vector<2x32xf32> -> vector<4x32xf32>
    %54 = arith.truncf %53 : vector<4x32xf32> to vector<4x32xbf16>
    %c0_33 = arith.constant 0 : index
    %c0_34 = arith.constant 0 : index
    %55 = vector.load %arg12[%c0_33, %c0_34] : memref<32x1024xbf16, #tpu.memory_space<vmem>>, vector<32x1024xbf16>
    %cst_35 = arith.constant dense<0.000000e+00> : vector<4x1024xf32>
    %56 = tpu.matmul %54, %55, %cst_35 {dimension_numbers = #tpu.dot_dimension_numbers<[1], [0], [0], [1], [0, 0, 1, 1], [], []>} : vector<4x32xbf16>, vector<32x1024xbf16>, vector<4x1024xf32> -> vector<4x1024xf32>
    %c0_36 = arith.constant 0 : index
    %c0_37 = arith.constant 0 : index
    %57 = vector.load %arg13[%c0_36, %c0_37] : memref<1x1024xf32, #tpu.memory_space<vmem>>, vector<1x1024xf32>
    %58 = vector.broadcast %57 : vector<1x1024xf32> to vector<4x1024xf32>
    %59 = arith.addf %56, %58 : vector<4x1024xf32>
    %60 = math.tanh %59 : vector<4x1024xf32>
    %61 = vector.extract_strided_slice %60 {offsets = [0, 0], sizes = [2, 1024], strides = [1, 1]} : vector<4x1024xf32> to vector<2x1024xf32>
    %c0_38 = arith.constant 0 : index
    %c0_39 = arith.constant 0 : index
    %c0_40 = arith.constant 0 : index
    %62 = vector.load %arg15[%c0_38, %c0_39, %c0_40] : memref<3x2x1024xf32, #tpu.memory_space<vmem>>, vector<1x2x1024xf32>
    %63 = vector.shape_cast %62 : vector<1x2x1024xf32> to vector<2x1024xf32>
    %64 = vector.shape_cast %61 : vector<2x1024xf32> to vector<1x2x1024xf32>
    tpu.vector_store %arg15[%c0_38, %c0_39, %c0_40], %64 {strides = array<i32>} : memref<3x2x1024xf32, #tpu.memory_space<vmem>>, vector<1x2x1024xf32>,
    %65 = vector.extract_strided_slice %60 {offsets = [2, 0], sizes = [2, 1024], strides = [1, 1]} : vector<4x1024xf32> to vector<2x1024xf32>
    %c0_41 = arith.constant 0 : index
    %c0_42 = arith.constant 0 : index
    %c0_43 = arith.constant 0 : index
    %66 = vector.load %arg14[%c0_41, %c0_42, %c0_43] : memref<3x2x1024xf32, #tpu.memory_space<vmem>>, vector<1x2x1024xf32>
    %67 = vector.shape_cast %66 : vector<1x2x1024xf32> to vector<2x1024xf32>
    %68 = vector.shape_cast %65 : vector<2x1024xf32> to vector<1x2x1024xf32>
    tpu.vector_store %arg14[%c0_41, %c0_42, %c0_43], %68 {strides = array<i32>} : memref<3x2x1024xf32, #tpu.memory_space<vmem>>, vector<1x2x1024xf32>,
    %c0_44 = arith.constant 0 : index
    %c0_45 = arith.constant 0 : index
    %c0_46 = arith.constant 0 : index
    %69 = vector.load %arg16[%c0_44, %c0_45, %c0_46] : memref<3x2x32xf32, #tpu.memory_space<vmem>>, vector<1x2x32xf32>
    %70 = vector.shape_cast %69 : vector<1x2x32xf32> to vector<2x32xf32>
    %71 = vector.shape_cast %38 : vector<2x32xf32> to vector<1x2x32xf32>
    tpu.vector_store %arg16[%c0_44, %c0_45, %c0_46], %71 {strides = array<i32>} : memref<3x2x32xf32, #tpu.memory_space<vmem>>, vector<1x2x32xf32>,
    %c0_47 = arith.constant 0 : index
    %c0_48 = arith.constant 0 : index
    %c0_49 = arith.constant 0 : index
    %72 = vector.load %arg17[%c0_47, %c0_48, %c0_49] : memref<3x2x32xf32, #tpu.memory_space<vmem>>, vector<1x2x32xf32>
    %73 = vector.shape_cast %72 : vector<1x2x32xf32> to vector<2x32xf32>
    %74 = vector.shape_cast %34 : vector<2x32xf32> to vector<1x2x32xf32>
    tpu.vector_store %arg17[%c0_47, %c0_48, %c0_49], %74 {strides = array<i32>} : memref<3x2x32xf32, #tpu.memory_space<vmem>>, vector<1x2x32xf32>,
    %75 = arith.truncf %60 : vector<4x1024xf32> to vector<4x1024xbf16>
    %c0_50 = arith.constant 0 : index
    %c0_51 = arith.constant 0 : index
    %76 = vector.load %arg5[%c0_50, %c0_51] : memref<1024x128xbf16, #tpu.memory_space<vmem>>, vector<1024x128xbf16>
    %cst_52 = arith.constant dense<0.000000e+00> : vector<4x128xf32>
    %77 = tpu.matmul %75, %76, %cst_52 {dimension_numbers = #tpu.dot_dimension_numbers<[1], [0], [0], [1], [0, 0, 1, 1], [], []>} : vector<4x1024xbf16>, vector<1024x128xbf16>, vector<4x128xf32> -> vector<4x128xf32>
    %78 = arith.addf %34, %6 : vector<2x32xf32>
    %79 = vector.extract_strided_slice %77 {offsets = [0, 0], sizes = [2, 32], strides = [1, 1]} : vector<4x128xf32> to vector<2x32xf32>
    %80 = arith.addf %78, %79 : vector<2x32xf32>
    %81 = vector.extract_strided_slice %77 {offsets = [2, 32], sizes = [2, 32], strides = [1, 1]} : vector<4x128xf32> to vector<2x32xf32>
    %82 = arith.addf %38, %81 : vector<2x32xf32>
    %83 = vector.broadcast %16 : vector<1x32xf32> to vector<2x32xf32>
    %84 = arith.addf %82, %83 : vector<2x32xf32>
    %85 = arith.addf %43, %27 : vector<2x32xf32>
    %86 = vector.extract_strided_slice %77 {offsets = [0, 64], sizes = [2, 32], strides = [1, 1]} : vector<4x128xf32> to vector<2x32xf32>
    %87 = arith.addf %85, %86 : vector<2x32xf32>
    %88 = vector.extract_strided_slice %77 {offsets = [2, 96], sizes = [2, 32], strides = [1, 1]} : vector<4x128xf32> to vector<2x32xf32>
    %89 = arith.addf %87, %88 : vector<2x32xf32>
    %90 = arith.addf %15, %89 : vector<2x32xf32>
    %91 = arith.negf %90 : vector<2x32xf32>
    %92 = math.exp %91 : vector<2x32xf32>
    %cst_53 = arith.constant 1.000000e+00 : f32
    %93 = vector.broadcast %cst_53 : f32 to vector<2x32xf32>
    %94 = arith.addf %93, %92 : vector<2x32xf32>
    %95 = arith.divf %93, %94 : vector<2x32xf32>
    %96 = arith.subf %80, %84 : vector<2x32xf32>
    %97 = arith.mulf %95, %96 : vector<2x32xf32>
    %98 = arith.addf %84, %97 : vector<2x32xf32>
    %99 = tpu.concatenate %80, %98 in 0 : vector<2x32xf32>, vector<2x32xf32> -> vector<4x32xf32>
    %100 = arith.truncf %99 : vector<4x32xf32> to vector<4x32xbf16>
    %c0_54 = arith.constant 0 : index
    %c0_55 = arith.constant 0 : index
    %101 = vector.load %arg12[%c0_54, %c0_55] : memref<32x1024xbf16, #tpu.memory_space<vmem>>, vector<32x1024xbf16>
    %cst_56 = arith.constant dense<0.000000e+00> : vector<4x1024xf32>
    %102 = tpu.matmul %100, %101, %cst_56 {dimension_numbers = #tpu.dot_dimension_numbers<[1], [0], [0], [1], [0, 0, 1, 1], [], []>} : vector<4x32xbf16>, vector<32x1024xbf16>, vector<4x1024xf32> -> vector<4x1024xf32>
    %c0_57 = arith.constant 0 : index
    %c0_58 = arith.constant 0 : index
    %103 = vector.load %arg13[%c0_57, %c0_58] : memref<1x1024xf32, #tpu.memory_space<vmem>>, vector<1x1024xf32>
    %104 = vector.broadcast %103 : vector<1x1024xf32> to vector<4x1024xf32>
    %105 = arith.addf %102, %104 : vector<4x1024xf32>
    %106 = math.tanh %105 : vector<4x1024xf32>
    %107 = vector.extract_strided_slice %106 {offsets = [0, 0], sizes = [2, 1024], strides = [1, 1]} : vector<4x1024xf32> to vector<2x1024xf32>
    %c1 = arith.constant 1 : index
    %c0_59 = arith.constant 0 : index
    %c0_60 = arith.constant 0 : index
    %108 = vector.load %arg15[%c1, %c0_59, %c0_60] : memref<3x2x1024xf32, #tpu.memory_space<vmem>>, vector<1x2x1024xf32>
    %109 = vector.shape_cast %108 : vector<1x2x1024xf32> to vector<2x1024xf32>
    %110 = vector.shape_cast %107 : vector<2x1024xf32> to vector<1x2x1024xf32>
    tpu.vector_store %arg15[%c1, %c0_59, %c0_60], %110 {strides = array<i32>} : memref<3x2x1024xf32, #tpu.memory_space<vmem>>, vector<1x2x1024xf32>,
    %111 = vector.extract_strided_slice %106 {offsets = [2, 0], sizes = [2, 1024], strides = [1, 1]} : vector<4x1024xf32> to vector<2x1024xf32>
    %c1_61 = arith.constant 1 : index
    %c0_62 = arith.constant 0 : index
    %c0_63 = arith.constant 0 : index
    %112 = vector.load %arg14[%c1_61, %c0_62, %c0_63] : memref<3x2x1024xf32, #tpu.memory_space<vmem>>, vector<1x2x1024xf32>
    %113 = vector.shape_cast %112 : vector<1x2x1024xf32> to vector<2x1024xf32>
    %114 = vector.shape_cast %111 : vector<2x1024xf32> to vector<1x2x1024xf32>
    tpu.vector_store %arg14[%c1_61, %c0_62, %c0_63], %114 {strides = array<i32>} : memref<3x2x1024xf32, #tpu.memory_space<vmem>>, vector<1x2x1024xf32>,
    %c1_64 = arith.constant 1 : index
    %c0_65 = arith.constant 0 : index
    %c0_66 = arith.constant 0 : index
    %115 = vector.load %arg16[%c1_64, %c0_65, %c0_66] : memref<3x2x32xf32, #tpu.memory_space<vmem>>, vector<1x2x32xf32>
    %116 = vector.shape_cast %115 : vector<1x2x32xf32> to vector<2x32xf32>
    %117 = vector.shape_cast %84 : vector<2x32xf32> to vector<1x2x32xf32>
    tpu.vector_store %arg16[%c1_64, %c0_65, %c0_66], %117 {strides = array<i32>} : memref<3x2x32xf32, #tpu.memory_space<vmem>>, vector<1x2x32xf32>,
    %c1_67 = arith.constant 1 : index
    %c0_68 = arith.constant 0 : index
    %c0_69 = arith.constant 0 : index
    %118 = vector.load %arg17[%c1_67, %c0_68, %c0_69] : memref<3x2x32xf32, #tpu.memory_space<vmem>>, vector<1x2x32xf32>
    %119 = vector.shape_cast %118 : vector<1x2x32xf32> to vector<2x32xf32>
    %120 = vector.shape_cast %80 : vector<2x32xf32> to vector<1x2x32xf32>
    tpu.vector_store %arg17[%c1_67, %c0_68, %c0_69], %120 {strides = array<i32>} : memref<3x2x32xf32, #tpu.memory_space<vmem>>, vector<1x2x32xf32>,
    %121 = arith.truncf %106 : vector<4x1024xf32> to vector<4x1024xbf16>
    %c0_70 = arith.constant 0 : index
    %c0_71 = arith.constant 0 : index
    %122 = vector.load %arg5[%c0_70, %c0_71] : memref<1024x128xbf16, #tpu.memory_space<vmem>>, vector<1024x128xbf16>
    %cst_72 = arith.constant dense<0.000000e+00> : vector<4x128xf32>
    %123 = tpu.matmul %121, %122, %cst_72 {dimension_numbers = #tpu.dot_dimension_numbers<[1], [0], [0], [1], [0, 0, 1, 1], [], []>} : vector<4x1024xbf16>, vector<1024x128xbf16>, vector<4x128xf32> -> vector<4x128xf32>
    %124 = arith.addf %80, %6 : vector<2x32xf32>
    %125 = vector.extract_strided_slice %123 {offsets = [0, 0], sizes = [2, 32], strides = [1, 1]} : vector<4x128xf32> to vector<2x32xf32>
    %126 = arith.addf %124, %125 : vector<2x32xf32>
    %127 = vector.extract_strided_slice %123 {offsets = [2, 32], sizes = [2, 32], strides = [1, 1]} : vector<4x128xf32> to vector<2x32xf32>
    %128 = arith.addf %84, %127 : vector<2x32xf32>
    %129 = vector.broadcast %16 : vector<1x32xf32> to vector<2x32xf32>
    %130 = arith.addf %128, %129 : vector<2x32xf32>
    %131 = arith.addf %89, %27 : vector<2x32xf32>
    %132 = vector.extract_strided_slice %123 {offsets = [0, 64], sizes = [2, 32], strides = [1, 1]} : vector<4x128xf32> to vector<2x32xf32>
    %133 = arith.addf %131, %132 : vector<2x32xf32>
    %134 = vector.extract_strided_slice %123 {offsets = [2, 96], sizes = [2, 32], strides = [1, 1]} : vector<4x128xf32> to vector<2x32xf32>
    %135 = arith.addf %133, %134 : vector<2x32xf32>
    %136 = arith.addf %15, %135 : vector<2x32xf32>
    %137 = arith.negf %136 : vector<2x32xf32>
    %138 = math.exp %137 : vector<2x32xf32>
    %cst_73 = arith.constant 1.000000e+00 : f32
    %139 = vector.broadcast %cst_73 : f32 to vector<2x32xf32>
    %140 = arith.addf %139, %138 : vector<2x32xf32>
    %141 = arith.divf %139, %140 : vector<2x32xf32>
    %142 = arith.subf %126, %130 : vector<2x32xf32>
    %143 = arith.mulf %141, %142 : vector<2x32xf32>
    %144 = arith.addf %130, %143 : vector<2x32xf32>
    %145 = tpu.concatenate %126, %144 in 0 : vector<2x32xf32>, vector<2x32xf32> -> vector<4x32xf32>
    %146 = arith.truncf %145 : vector<4x32xf32> to vector<4x32xbf16>
    %c0_74 = arith.constant 0 : index
    %c0_75 = arith.constant 0 : index
    %147 = vector.load %arg12[%c0_74, %c0_75] : memref<32x1024xbf16, #tpu.memory_space<vmem>>, vector<32x1024xbf16>
    %cst_76 = arith.constant dense<0.000000e+00> : vector<4x1024xf32>
    %148 = tpu.matmul %146, %147, %cst_76 {dimension_numbers = #tpu.dot_dimension_numbers<[1], [0], [0], [1], [0, 0, 1, 1], [], []>} : vector<4x32xbf16>, vector<32x1024xbf16>, vector<4x1024xf32> -> vector<4x1024xf32>
    %c0_77 = arith.constant 0 : index
    %c0_78 = arith.constant 0 : index
    %149 = vector.load %arg13[%c0_77, %c0_78] : memref<1x1024xf32, #tpu.memory_space<vmem>>, vector<1x1024xf32>
    %150 = vector.broadcast %149 : vector<1x1024xf32> to vector<4x1024xf32>
    %151 = arith.addf %148, %150 : vector<4x1024xf32>
    %152 = math.tanh %151 : vector<4x1024xf32>
    %153 = vector.extract_strided_slice %152 {offsets = [0, 0], sizes = [2, 1024], strides = [1, 1]} : vector<4x1024xf32> to vector<2x1024xf32>
    %c2 = arith.constant 2 : index
    %c0_79 = arith.constant 0 : index
    %c0_80 = arith.constant 0 : index
    %154 = vector.load %arg15[%c2, %c0_79, %c0_80] : memref<3x2x1024xf32, #tpu.memory_space<vmem>>, vector<1x2x1024xf32>
    %155 = vector.shape_cast %154 : vector<1x2x1024xf32> to vector<2x1024xf32>
    %156 = vector.shape_cast %153 : vector<2x1024xf32> to vector<1x2x1024xf32>
    tpu.vector_store %arg15[%c2, %c0_79, %c0_80], %156 {strides = array<i32>} : memref<3x2x1024xf32, #tpu.memory_space<vmem>>, vector<1x2x1024xf32>,
    %157 = vector.extract_strided_slice %152 {offsets = [2, 0], sizes = [2, 1024], strides = [1, 1]} : vector<4x1024xf32> to vector<2x1024xf32>
    %c2_81 = arith.constant 2 : index
    %c0_82 = arith.constant 0 : index
    %c0_83 = arith.constant 0 : index
    %158 = vector.load %arg14[%c2_81, %c0_82, %c0_83] : memref<3x2x1024xf32, #tpu.memory_space<vmem>>, vector<1x2x1024xf32>
    %159 = vector.shape_cast %158 : vector<1x2x1024xf32> to vector<2x1024xf32>
    %160 = vector.shape_cast %157 : vector<2x1024xf32> to vector<1x2x1024xf32>
    tpu.vector_store %arg14[%c2_81, %c0_82, %c0_83], %160 {strides = array<i32>} : memref<3x2x1024xf32, #tpu.memory_space<vmem>>, vector<1x2x1024xf32>,
    %c2_84 = arith.constant 2 : index
    %c0_85 = arith.constant 0 : index
    %c0_86 = arith.constant 0 : index
    %161 = vector.load %arg16[%c2_84, %c0_85, %c0_86] : memref<3x2x32xf32, #tpu.memory_space<vmem>>, vector<1x2x32xf32>
    %162 = vector.shape_cast %161 : vector<1x2x32xf32> to vector<2x32xf32>
    %163 = vector.shape_cast %130 : vector<2x32xf32> to vector<1x2x32xf32>
    tpu.vector_store %arg16[%c2_84, %c0_85, %c0_86], %163 {strides = array<i32>} : memref<3x2x32xf32, #tpu.memory_space<vmem>>, vector<1x2x32xf32>,
    %c2_87 = arith.constant 2 : index
    %c0_88 = arith.constant 0 : index
    %c0_89 = arith.constant 0 : index
    %164 = vector.load %arg17[%c2_87, %c0_88, %c0_89] : memref<3x2x32xf32, #tpu.memory_space<vmem>>, vector<1x2x32xf32>
    %165 = vector.shape_cast %164 : vector<1x2x32xf32> to vector<2x32xf32>
    %166 = vector.shape_cast %126 : vector<2x32xf32> to vector<1x2x32xf32>
    tpu.vector_store %arg17[%c2_87, %c0_88, %c0_89], %166 {strides = array<i32>} : memref<3x2x32xf32, #tpu.memory_space<vmem>>, vector<1x2x32xf32>,
    return
  }
}

</mosaic_0001>

<llo_original>
// kernel: squeeze.12
$region0: #{squeeze.12}
  %s0 = inlined_call_operand.vmem [shape: f32[1,2,1024], index: 0, kind: input, shape index: {}]
  %s1 = inlined_call_operand.hbm [shape: f32[2,4,16,16], index: 1, kind: output, shape index: {}]
  $region1: #{squeeze.12} parent=0
    #allocation0 [shape = 'u8[65536]{0}', space=vmem, size = 0x10000, scoped, tag = 'operand span for operand 1']
    #allocation1 [shape = 's32[1]{0}', space=sflag, size = 0x4, scoped, tag = 'scoped memory for squeeze.12']
    #allocation2 [shape = 'u8[32768]{0}', space=vmem, size = 0x8000, scoped, tag = 'scoped mem for input reshape']
    %2 = vsyncpa [#allocation1], 0
    %s4 = sshllo.u32 0, 2
    %s5 = smul.addr 2, 7
    %s6 = scalar_lea.vmem %s0, %s5
    %v7 = vld [vmem:[%s6] sm:%s4]
    %s8 = scalar_lea.vmem [#allocation2], 56
    %9 = vst [vmem:[%s8] sm:%s4] %v7
    %s10 = smul.addr 2, 6
    %s11 = scalar_lea.vmem %s0, %s10
    %v12 = vld [vmem:[%s11] sm:%s4]
    %s13 = scalar_lea.vmem [#allocation2], 48
    %14 = vst [vmem:[%s13] sm:%s4] %v12
    %s15 = smul.addr 2, 5
    %s16 = scalar_lea.vmem %s0, %s15
    %v17 = vld [vmem:[%s16] sm:%s4]
    %s18 = scalar_lea.vmem [#allocation2], 40
    %19 = vst [vmem:[%s18] sm:%s4] %v17
    %s20 = smul.addr 2, 4
    %s21 = scalar_lea.vmem %s0, %s20
    %v22 = vld [vmem:[%s21] sm:%s4]
    %s23 = scalar_lea.vmem [#allocation2], 32
    %24 = vst [vmem:[%s23] sm:%s4] %v22
    %s25 = smul.addr 2, 3
    %s26 = scalar_lea.vmem %s0, %s25
    %v27 = vld [vmem:[%s26] sm:%s4]
    %s28 = scalar_lea.vmem [#allocation2], 24
    %29 = vst [vmem:[%s28] sm:%s4] %v27
    %s30 = smul.addr 2, 2
    %s31 = scalar_lea.vmem %s0, %s30
    %v32 = vld [vmem:[%s31] sm:%s4]
    %s33 = scalar_lea.vmem [#allocation2], 16
    %34 = vst [vmem:[%s33] sm:%s4] %v32
    %s35 = scalar_lea.vmem %s0, 2
    %v36 = vld [vmem:[%s35] sm:%s4]
    %s37 = scalar_lea.vmem [#allocation2], 8
    %38 = vst [vmem:[%s37] sm:%s4] %v36
    %v39 = vld [vmem:[%s0] sm:%s4]
    %40 = vst [vmem:[#allocation2] sm:%s4] %v39
    %v41 = vld [vmem:[#allocation2] sm:$0x3]
    %vm42 = vcmask 130048
    %43 = vst.msk [vmem:[#allocation0] sm:$0x1] %vm42, %v41
    %s44 = scalar_lea.vmem [#allocation0], 63
    %45 = vst.msk [vmem:[%s44] sm:$0x2] %vm42, %v41
    %s46 = scalar_lea.vmem [#allocation2], 8
    %v47 = vld [vmem:[%s46] sm:$0x3]
    %vm48 = vcmask 130048
    %s49 = scalar_lea.vmem [#allocation0], 8
    %50 = vst.msk [vmem:[%s49] sm:$0x1] %vm48, %v47
    %s51 = scalar_lea.vmem [#allocation0], 71
    %52 = vst.msk [vmem:[%s51] sm:$0x2] %vm48, %v47
    %s53 = scalar_lea.vmem [#allocation2], 16
    %v54 = vld [vmem:[%s53] sm:$0x3]
    %vm55 = vcmask 130048
    %s56 = scalar_lea.vmem [#allocation0], 16
    %57 = vst.msk [vmem:[%s56] sm:$0x1] %vm55, %v54
    %s58 = scalar_lea.vmem [#allocation0], 79
    %59 = vst.msk [vmem:[%s58] sm:$0x2] %vm55, %v54
    %s60 = scalar_lea.vmem [#allocation2], 24
    %v61 = vld [vmem:[%s60] sm:$0x3]
    %vm62 = vcmask 130048
    %s63 = scalar_lea.vmem [#allocation0], 24
    %64 = vst.msk [vmem:[%s63] sm:$0x1] %vm62, %v61
    %s65 = scalar_lea.vmem [#allocation0], 87
    %66 = vst.msk [vmem:[%s65] sm:$0x2] %vm62, %v61
    %s67 = scalar_lea.vmem [#allocation2], 32
    %v68 = vld [vmem:[%s67] sm:$0x3]
    %vm69 = vcmask 130048
    %s70 = scalar_lea.vmem [#allocation0], 32
    %71 = vst.msk [vmem:[%s70] sm:$0x1] %vm69, %v68
    %s72 = scalar_lea.vmem [#allocation0], 95
    %73 = vst.msk [vmem:[%s72] sm:$0x2] %vm69, %v68
    %s74 = scalar_lea.vmem [#allocation2], 40
    %v75 = vld [vmem:[%s74] sm:$0x3]
    %vm76 = vcmask 130048
    %s77 = scalar_lea.vmem [#allocation0], 40
    %78 = vst.msk [vmem:[%s77] sm:$0x1] %vm76, %v75
    %s79 = scalar_lea.vmem [#allocation0], 103
    %80 = vst.msk [vmem:[%s79] sm:$0x2] %vm76, %v75
    %s81 = scalar_lea.vmem [#allocation2], 48
    %v82 = vld [vmem:[%s81] sm:$0x3]
    %vm83 = vcmask 130048
    %s84 = scalar_lea.vmem [#allocation0], 48
    %85 = vst.msk [vmem:[%s84] sm:$0x1] %vm83, %v82
    %s86 = scalar_lea.vmem [#allocation0], 111
    %87 = vst.msk [vmem:[%s86] sm:$0x2] %vm83, %v82
    %s88 = scalar_lea.vmem [#allocation2], 56
    %v89 = vld [vmem:[%s88] sm:$0x3]
    %vm90 = vcmask 130048
    %s91 = scalar_lea.vmem [#allocation0], 56
    %92 = vst.msk [vmem:[%s91] sm:$0x1] %vm90, %v89
    %s93 = scalar_lea.vmem [#allocation0], 119
    %94 = vst.msk [vmem:[%s93] sm:$0x2] %vm90, %v89
    %v95 = vld [vmem:[#allocation2] ss:$8 sm:$0xf]
    %s96 = scalar_lea.vmem [#allocation2], 4294967265
    %v97 = vld [vmem:[%s96] ss:$8 sm:$0xf0]
    %vm98 = vcmask 1047556
    %v99 = vsel %vm98, %v97, %v95
    %100 = vrot.lane.b32.xlu0 %v99, 112
    %v101 = vpop.permute.xlu0 %100
    %vm102 = vcmask 130048
    %s103 = scalar_lea.vmem [#allocation0], 1
    %104 = vst.msk [vmem:[%s103] ss:$8 sm:$0xf] %vm102, %v101
    %s105 = scalar_lea.vmem [#allocation0], 33
    %106 = vst.msk [vmem:[%s105] ss:$8 sm:$0xf0] %vm102, %v101
    %s107 = scalar_lea.vmem [#allocation2], 32
    %v108 = vld [vmem:[%s107] ss:$8 sm:$0xf]
    %s109 = scalar_lea.vmem [#allocation2], 1
    %v110 = vld [vmem:[%s109] ss:$8 sm:$0xf0]
    %vm111 = vcmask 1047556
    %v112 = vsel %vm111, %v110, %v108
    %113 = vrot.lane.b32.xlu0 %v112, 112
    %v114 = vpop.permute.xlu0 %113
    %vm115 = vcmask 130048
    %s116 = scalar_lea.vmem [#allocation0], 33
    %117 = vst.msk [vmem:[%s116] ss:$8 sm:$0xf] %vm115, %v114
    %s118 = scalar_lea.vmem [#allocation0], 65
    %119 = vst.msk [vmem:[%s118] ss:$8 sm:$0xf0] %vm115, %v114
    %v120 = vld [vmem:[#allocation2] ss:$8 sm:$0xf]
    %s121 = scalar_lea.vmem [#allocation2], 4294967265
    %v122 = vld [vmem:[%s121] ss:$8 sm:$0xf0]
    %vm123 = vcmask 1047556
    %v124 = vsel %vm123, %v122, %v120
    %125 = vrot.lane.b32.xlu0 %v124, 96
    %v126 = vpop.permute.xlu0 %125
    %vm127 = vcmask 130048
    %s128 = scalar_lea.vmem [#allocation0], 2
    %129 = vst.msk [vmem:[%s128] ss:$8 sm:$0xf] %vm127, %v126
    %s130 = scalar_lea.vmem [#allocation0], 34
    %131 = vst.msk [vmem:[%s130] ss:$8 sm:$0xf0] %vm127, %v126
    %s132 = scalar_lea.vmem [#allocation2], 32
    %v133 = vld [vmem:[%s132] ss:$8 sm:$0xf]
    %s134 = scalar_lea.vmem [#allocation2], 1
    %v135 = vld [vmem:[%s134] ss:$8 sm:$0xf0]
    %vm136 = vcmask 1047556
    %v137 = vsel %vm136, %v135, %v133
    %138 = vrot.lane.b32.xlu0 %v137, 96
    %v139 = vpop.permute.xlu0 %138
    %vm140 = vcmask 130048
    %s141 = scalar_lea.vmem [#allocation0], 34
    %142 = vst.msk [vmem:[%s141] ss:$8 sm:$0xf] %vm140, %v139
    %s143 = scalar_lea.vmem [#allocation0], 66
    %144 = vst.msk [vmem:[%s143] ss:$8 sm:$0xf0] %vm140, %v139
    %v145 = vld [vmem:[#allocation2] ss:$8 sm:$0xf]
    %s146 = scalar_lea.vmem [#allocation2], 4294967265
    %v147 = vld [vmem:[%s146] ss:$8 sm:$0xf0]
    %vm148 = vcmask 1047556
    %v149 = vsel %vm148, %v147, %v145
    %150 = vrot.lane.b32.xlu0 %v149, 80
    %v151 = vpop.permute.xlu0 %150
    %vm152 = vcmask 130048
    %s153 = scalar_lea.vmem [#allocation0], 3
    %154 = vst.msk [vmem:[%s153] ss:$8 sm:$0xf] %vm152, %v151
    %s155 = scalar_lea.vmem [#allocation0], 35
    %156 = vst.msk [vmem:[%s155] ss:$8 sm:$0xf0] %vm152, %v151
    %s157 = scalar_lea.vmem [#allocation2], 32
    %v158 = vld [vmem:[%s157] ss:$8 sm:$0xf]
    %s159 = scalar_lea.vmem [#allocation2], 1
    %v160 = vld [vmem:[%s159] ss:$8 sm:$0xf0]
    %vm161 = vcmask 1047556
    %v162 = vsel %vm161, %v160, %v158
    %163 = vrot.lane.b32.xlu0 %v162, 80
    %v164 = vpop.permute.xlu0 %163
    %vm165 = vcmask 130048
    %s166 = scalar_lea.vmem [#allocation0], 35
    %167 = vst.msk [vmem:[%s166] ss:$8 sm:$0xf] %vm165, %v164
    %s168 = scalar_lea.vmem [#allocation0], 67
    %169 = vst.msk [vmem:[%s168] ss:$8 sm:$0xf0] %vm165, %v164
    %v170 = vld [vmem:[#allocation2] ss:$8 sm:$0xf]
    %s171 = scalar_lea.vmem [#allocation2], 4294967265
    %v172 = vld [vmem:[%s171] ss:$8 sm:$0xf0]
    %vm173 = vcmask 1047556
    %v174 = vsel %vm173, %v172, %v170
    %175 = vrot.lane.b32.xlu0 %v174, 64
    %v176 = vpop.permute.xlu0 %175
    %vm177 = vcmask 130048
    %s178 = scalar_lea.vmem [#allocation0], 4
    %179 = vst.msk [vmem:[%s178] ss:$8 sm:$0xf] %vm177, %v176
    %s180 = scalar_lea.vmem [#allocation0], 36
    %181 = vst.msk [vmem:[%s180] ss:$8 sm:$0xf0] %vm177, %v176
    %s182 = scalar_lea.vmem [#allocation2], 32
    %v183 = vld [vmem:[%s182] ss:$8 sm:$0xf]
    %s184 = scalar_lea.vmem [#allocation2], 1
    %v185 = vld [vmem:[%s184] ss:$8 sm:$0xf0]
    %vm186 = vcmask 1047556
    %v187 = vsel %vm186, %v185, %v183
    %188 = vrot.lane.b32.xlu0 %v187, 64
    %v189 = vpop.permute.xlu0 %188
    %vm190 = vcmask 130048
    %s191 = scalar_lea.vmem [#allocation0], 36
    %192 = vst.msk [vmem:[%s191] ss:$8 sm:$0xf] %vm190, %v189
    %s193 = scalar_lea.vmem [#allocation0], 68
    %194 = vst.msk [vmem:[%s193] ss:$8 sm:$0xf0] %vm190, %v189
    %v195 = vld [vmem:[#allocation2] ss:$8 sm:$0xf]
    %s196 = scalar_lea.vmem [#allocation2], 4294967265
    %v197 = vld [vmem:[%s196] ss:$8 sm:$0xf0]
    %vm198 = vcmask 1047556
    %v199 = vsel %vm198, %v197, %v195
    %200 = vrot.lane.b32.xlu0 %v199, 48
    %v201 = vpop.permute.xlu0 %200
    %vm202 = vcmask 130048
    %s203 = scalar_lea.vmem [#allocation0], 5
    %204 = vst.msk [vmem:[%s203] ss:$8 sm:$0xf] %vm202, %v201
    %s205 = scalar_lea.vmem [#allocation0], 37
    %206 = vst.msk [vmem:[%s205] ss:$8 sm:$0xf0] %vm202, %v201
    %s207 = scalar_lea.vmem [#allocation2], 32
    %v208 = vld [vmem:[%s207] ss:$8 sm:$0xf]
    %s209 = scalar_lea.vmem [#allocation2], 1
    %v210 = vld [vmem:[%s209] ss:$8 sm:$0xf0]
    %vm211 = vcmask 1047556
    %v212 = vsel %vm211, %v210, %v208
    %213 = vrot.lane.b32.xlu0 %v212, 48
    %v214 = vpop.permute.xlu0 %213
    %vm215 = vcmask 130048
    %s216 = scalar_lea.vmem [#allocation0], 37
    %217 = vst.msk [vmem:[%s216] ss:$8 sm:$0xf] %vm215, %v214
    %s218 = scalar_lea.vmem [#allocation0], 69
    %219 = vst.msk [vmem:[%s218] ss:$8 sm:$0xf0] %vm215, %v214
    %v220 = vld [vmem:[#allocation2] ss:$8 sm:$0xf]
    %s221 = scalar_lea.vmem [#allocation2], 4294967265
    %v222 = vld [vmem:[%s221] ss:$8 sm:$0xf0]
    %vm223 = vcmask 1047556
    %v224 = vsel %vm223, %v222, %v220
    %225 = vrot.lane.b32.xlu0 %v224, 32
    %v226 = vpop.permute.xlu0 %225
    %vm227 = vcmask 130048
    %s228 = scalar_lea.vmem [#allocation0], 6
    %229 = vst.msk [vmem:[%s228] ss:$8 sm:$0xf] %vm227, %v226
    %s230 = scalar_lea.vmem [#allocation0], 38
    %231 = vst.msk [vmem:[%s230] ss:$8 sm:$0xf0] %vm227, %v226
    %s232 = scalar_lea.vmem [#allocation2], 32
    %v233 = vld [vmem:[%s232] ss:$8 sm:$0xf]
    %s234 = scalar_lea.vmem [#allocation2], 1
    %v235 = vld [vmem:[%s234] ss:$8 sm:$0xf0]
    %vm236 = vcmask 1047556
    %v237 = vsel %vm236, %v235, %v233
    %238 = vrot.lane.b32.xlu0 %v237, 32
    %v239 = vpop.permute.xlu0 %238
    %vm240 = vcmask 130048
    %s241 = scalar_lea.vmem [#allocation0], 38
    %242 = vst.msk [vmem:[%s241] ss:$8 sm:$0xf] %vm240, %v239
    %s243 = scalar_lea.vmem [#allocation0], 70
    %244 = vst.msk [vmem:[%s243] ss:$8 sm:$0xf0] %vm240, %v239
    %v245 = vld [vmem:[#allocation2] ss:$8 sm:$0xf]
    %s246 = scalar_lea.vmem [#allocation2], 4294967265
    %v247 = vld [vmem:[%s246] ss:$8 sm:$0xf0]
    %vm248 = vcmask 1047556
    %v249 = vsel %vm248, %v247, %v245
    %250 = vrot.lane.b32.xlu0 %v249, 16
    %v251 = vpop.permute.xlu0 %250
    %vm252 = vcmask 130048
    %s253 = scalar_lea.vmem [#allocation0], 7
    %254 = vst.msk [vmem:[%s253] ss:$8 sm:$0xf] %vm252, %v251
    %s255 = scalar_lea.vmem [#allocation0], 39
    %256 = vst.msk [vmem:[%s255] ss:$8 sm:$0xf0] %vm252, %v251
    %s257 = scalar_lea.vmem [#allocation2], 32
    %v258 = vld [vmem:[%s257] ss:$8 sm:$0xf]
    %s259 = scalar_lea.vmem [#allocation2], 1
    %v260 = vld [vmem:[%s259] ss:$8 sm:$0xf0]
    %vm261 = vcmask 1047556
    %v262 = vsel %vm261, %v260, %v258
    %263 = vrot.lane.b32.xlu0 %v262, 16
    %v264 = vpop.permute.xlu0 %263
    %vm265 = vcmask 130048
    %s266 = scalar_lea.vmem [#allocation0], 39
    %267 = vst.msk [vmem:[%s266] ss:$8 sm:$0xf] %vm265, %v264
    %s268 = scalar_lea.vmem [#allocation0], 71
    %269 = vst.msk [vmem:[%s268] ss:$8 sm:$0xf0] %vm265, %v264
    %s271 = ssub.s32 2048, 2048
    %272 = vsyncadd [#allocation1], %s271
    %s274 = sshll.u32 [#allocation0], 4
    %s275 = int_to_ptr.vmem [resolvable:$true] %s274
    %277 = dma.vmem_to_hbm [thread:$0]  %s275, 2048, %s1, [#allocation1]
    %278 = dma.done [#allocation1], 2048
    %279 = vsyncpa [#allocation1], 1

// kernel: _forward.1
$region0: #{_forward.1}
  #allocation0 [shape = 'u32[]', space=smem, size = 0x4, offset = 0x4, fixed_abs, tag = 'smem constant byte address 0x4 - core index']
  #allocation1 [shape = 'u32[144,128]{1,0:T(1,128)}', space=vmem, size = 0x12000, scoped, tag = 'internal scratch']
  %s0 = inlined_call_operand.vmem [shape: f32[2,1024], index: 0, kind: input, shape index: {}]
  %s1 = inlined_call_operand.vmem [shape: f32[2,8,32], index: 1, kind: input, shape index: {}]
  %s2 = inlined_call_operand.vmem [shape: f32[4,1024], index: 2, kind: input, shape index: {}]
  %s3 = inlined_call_operand.vmem [shape: f32[2,32], index: 3, kind: input, shape index: {}]
  %s4 = inlined_call_operand.vmem [shape: bf16[1024,32], index: 4, kind: input, shape index: {}]
  %s5 = inlined_call_operand.vmem [shape: bf16[1024,128], index: 5, kind: input, shape index: {}]
  %s6 = inlined_call_operand.vmem [shape: f32[1,32], index: 6, kind: input, shape index: {}]
  %s7 = inlined_call_operand.vmem [shape: f32[1,32], index: 7, kind: input, shape index: {}]
  %s8 = inlined_call_operand.vmem [shape: f32[32,32], index: 8, kind: input, shape index: {}]
  %s9 = inlined_call_operand.vmem [shape: f32[32,32], index: 9, kind: input, shape index: {}]
  %s10 = inlined_call_operand.vmem [shape: f32[32,32], index: 10, kind: input, shape index: {}]
  %s11 = inlined_call_operand.vmem [shape: f32[1,32], index: 11, kind: input, shape index: {}]
  %s12 = inlined_call_operand.vmem [shape: bf16[32,1024], index: 12, kind: input, shape index: {}]
  %s13 = inlined_call_operand.vmem [shape: f32[1,1024], index: 13, kind: input, shape index: {}]
  %s14 = inlined_call_operand.vmem [shape: f32[3,2,1024], index: 14, kind: output, shape index: {0}]
  %s15 = inlined_call_operand.vmem [shape: f32[3,2,1024], index: 15, kind: output, shape index: {1}]
  %s16 = inlined_call_operand.vmem [shape: f32[3,2,32], index: 16, kind: output, shape index: {2}]
  %s17 = inlined_call_operand.vmem [shape: f32[3,2,32], index: 17, kind: output, shape index: {3}]
  %18 = xla_tuple %s14, %s15, %s16, %s17
  %s19 = sld [smem:[#allocation0]]
  $region90: #{_forward.1} parent=0
    _
  %s21 = ssub.s32 1, %s19
  %s22 = scalar_select 0, %s21, %s19
  // Predicated region
  $region2: #{_forward.1} parent=0 // pred_check
    _
  $region3: #{_forward.1} parent=0 // pred_check_branch
    %24 = sbr.rel (0) target = $region5
  $region4: #{_forward.1} parent=0 // pred_region
    _
  $region5: #{_forward.1} parent=0 // pred_fallthru
    _
  // Predicated region
  $region6: #{_forward.1} parent=0 // pred_check
    _
  $region7: #{_forward.1} parent=0 // pred_check_branch
    %26 = sbr.rel (0) target = $region9
  $region8: #{_forward.1} parent=0 // pred_region
    _
  $region9: #{_forward.1} parent=0 // pred_fallthru
    _
  // Predicated region
  $region10: #{_forward.1} parent=0 // pred_check
    _
  $region11: #{_forward.1} parent=0 // pred_check_branch
    %28 = sbr.rel (0) target = $region13
  $region12: #{_forward.1} parent=0 // pred_region
    _
  $region13: #{_forward.1} parent=0 // pred_fallthru
    _
  // Predicated region
  $region14: #{_forward.1} parent=0 // pred_check
    _
  $region15: #{_forward.1} parent=0 // pred_check_branch
    %30 = sbr.rel (0) target = $region17
  $region16: #{_forward.1} parent=0 // pred_region
    _
  $region17: #{_forward.1} parent=0 // pred_fallthru
    _
  // Predicated region
  $region18: #{_forward.1} parent=0 // pred_check
    _
  $region19: #{_forward.1} parent=0 // pred_check_branch
    %32 = sbr.rel (0) target = $region21
  $region20: #{_forward.1} parent=0 // pred_region
    _
  $region21: #{_forward.1} parent=0 // pred_fallthru
    _
  // Predicated region
  $region22: #{_forward.1} parent=0 // pred_check
    _
  $region23: #{_forward.1} parent=0 // pred_check_branch
    %34 = sbr.rel (0) target = $region25
  $region24: #{_forward.1} parent=0 // pred_region
    _
  $region25: #{_forward.1} parent=0 // pred_fallthru
    _
  // Predicated region
  $region26: #{_forward.1} parent=0 // pred_check
    _
  $region27: #{_forward.1} parent=0 // pred_check_branch
    %36 = sbr.rel (0) target = $region29
  $region28: #{_forward.1} parent=0 // pred_region
    _
  $region29: #{_forward.1} parent=0 // pred_fallthru
    _
  // Predicated region
  $region30: #{_forward.1} parent=0 // pred_check
    _
  $region31: #{_forward.1} parent=0 // pred_check_branch
    %38 = sbr.rel (0) target = $region33
  $region32: #{_forward.1} parent=0 // pred_region
    _
  $region33: #{_forward.1} parent=0 // pred_fallthru
    _
  // Predicated region
  $region34: #{_forward.1} parent=0 // pred_check
    _
  $region35: #{_forward.1} parent=0 // pred_check_branch
    %40 = sbr.rel (0) target = $region37
  $region36: #{_forward.1} parent=0 // pred_region
    _
  $region37: #{_forward.1} parent=0 // pred_fallthru
    _
  // Predicated region
  $region38: #{_forward.1} parent=0 // pred_check
    _
  $region39: #{_forward.1} parent=0 // pred_check_branch
    %42 = sbr.rel (0) target = $region41
  $region40: #{_forward.1} parent=0 // pred_region
    _
  $region41: #{_forward.1} parent=0 // pred_fallthru
    _
  // Predicated region
  $region42: #{_forward.1} parent=0 // pred_check
    _
  $region43: #{_forward.1} parent=0 // pred_check_branch
    %44 = sbr.rel (0) target = $region45
  $region44: #{_forward.1} parent=0 // pred_region
    _
  $region45: #{_forward.1} parent=0 // pred_fallthru
    _
  // Predicated region
  $region46: #{_forward.1} parent=0 // pred_check
    _
  $region47: #{_forward.1} parent=0 // pred_check_branch
    %46 = sbr.rel (0) target = $region49
  $region48: #{_forward.1} parent=0 // pred_region
    _
  $region49: #{_forward.1} parent=0 // pred_fallthru
    _
  // Predicated region
  $region50: #{_forward.1} parent=0 // pred_check
    _
  $region51: #{_forward.1} parent=0 // pred_check_branch
    %48 = sbr.rel (0) target = $region53
  $region52: #{_forward.1} parent=0 // pred_region
    _
  $region53: #{_forward.1} parent=0 // pred_fallthru
    _
  // Predicated region
  $region54: #{_forward.1} parent=0 // pred_check
    _
  $region55: #{_forward.1} parent=0 // pred_check_branch
    %50 = sbr.rel (0) target = $region57
  $region56: #{_forward.1} parent=0 // pred_region
    _
  $region57: #{_forward.1} parent=0 // pred_fallthru
    _
  %v52 = vld [vmem:[%s0] sm:$0xff]
  %v53 = vld [vmem:[%s0 + $0x8] sm:$0xff]
  %v56 = vcombine.high %v52, %v52
  %v58 = vunpack.c.l.s4 1983009808
  %v59 = vunpack.c.0.s8 %v58
  %v60 = vlaneseq
  %v61 = vshrl.u32 %v60, 7
  %v62 = vsub.s32 %v59, %v61
  %v63 = vrot.slane %v52, %v62
  %v65 = vunpack.c.l.s4 1983009808
  %v66 = vunpack.c.0.s8 %v65
  %v67 = vlaneseq
  %v68 = vshrl.u32 %v67, 7
  %v69 = vsub.s32 %v66, %v68
  %v70 = vrot.slane %v56, %v69
  %v71 = vcombine.high %v63, %v63
  %v72 = vcombine.high %v70, %v70
  %v73 = vcombine.high %v53, %v53
  %v75 = vunpack.c.l.s4 1983009808
  %v76 = vunpack.c.0.s8 %v75
  %v77 = vlaneseq
  %v78 = vshrl.u32 %v77, 7
  %v79 = vsub.s32 %v76, %v78
  %v80 = vrot.slane %v53, %v79
  %v82 = vunpack.c.l.s4 1983009808
  %v83 = vunpack.c.0.s8 %v82
  %v84 = vlaneseq
  %v85 = vshrl.u32 %v84, 7
  %v86 = vsub.s32 %v83, %v85
  %v87 = vrot.slane %v73, %v86
  %v88 = vcombine.high %v80, %v80
  %v89 = vcombine.high %v87, %v87
  %v98 = vpack.c.bf16 %v63, %v63
  %v99 = vpack.c.bf16 %v71, %v71
  %v100 = vpack.c.bf16 %v70, %v70
  %v101 = vpack.c.bf16 %v72, %v72
  %v102 = vpack.c.bf16 %v80, %v80
  %v103 = vpack.c.bf16 %v88, %v88
  %v104 = vpack.c.bf16 %v87, %v87
  %v105 = vpack.c.bf16 %v89, %v89
  %v106 = vld [vmem:[%s4] sm:$0xf]
  %v107 = vld [vmem:[%s4 + $0x4] sm:$0xf]
  %v108 = vld [vmem:[%s4 + $0x8] sm:$0xf]
  %v109 = vld [vmem:[%s4 + $0xc] sm:$0xf]
  %v110 = vld [vmem:[%s4 + $0x10] sm:$0xf]
  %v111 = vld [vmem:[%s4 + $0x14] sm:$0xf]
  %v112 = vld [vmem:[%s4 + $0x18] sm:$0xf]
  %v113 = vld [vmem:[%s4 + $0x1c] sm:$0xf]
  %v114 = vld [vmem:[%s4 + $0x20] sm:$0xf]
  %v115 = vld [vmem:[%s4 + $0x24] sm:$0xf]
  %v116 = vld [vmem:[%s4 + $0x28] sm:$0xf]
  %v117 = vld [vmem:[%s4 + $0x2c] sm:$0xf]
  %v118 = vld [vmem:[%s4 + $0x30] sm:$0xf]
  %v119 = vld [vmem:[%s4 + $0x34] sm:$0xf]
  %v120 = vld [vmem:[%s4 + $0x38] sm:$0xf]
  %v121 = vld [vmem:[%s4 + $0x3c] sm:$0xf]
  %v122 = vld [vmem:[%s4 + $0x40] sm:$0xf]
  %v123 = vld [vmem:[%s4 + $0x44] sm:$0xf]
  %v124 = vld [vmem:[%s4 + $0x48] sm:$0xf]
  %v125 = vld [vmem:[%s4 + $0x4c] sm:$0xf]
  %v126 = vld [vmem:[%s4 + $0x50] sm:$0xf]
  %v127 = vld [vmem:[%s4 + $0x54] sm:$0xf]
  %v128 = vld [vmem:[%s4 + $0x58] sm:$0xf]
  %v129 = vld [vmem:[%s4 + $0x5c] sm:$0xf]
  %v130 = vld [vmem:[%s4 + $0x60] sm:$0xf]
  %v131 = vld [vmem:[%s4 + $0x64] sm:$0xf]
  %v132 = vld [vmem:[%s4 + $0x68] sm:$0xf]
  %v133 = vld [vmem:[%s4 + $0x6c] sm:$0xf]
  %v134 = vld [vmem:[%s4 + $0x70] sm:$0xf]
  %v135 = vld [vmem:[%s4 + $0x74] sm:$0xf]
  %v136 = vld [vmem:[%s4 + $0x78] sm:$0xf]
  %v137 = vld [vmem:[%s4 + $0x7c] sm:$0xf]
  %v138 = vld [vmem:[%s4 + $0x80] sm:$0xf]
  %v139 = vld [vmem:[%s4 + $0x84] sm:$0xf]
  %v140 = vld [vmem:[%s4 + $0x88] sm:$0xf]
  %v141 = vld [vmem:[%s4 + $0x8c] sm:$0xf]
  %v142 = vld [vmem:[%s4 + $0x90] sm:$0xf]
  %v143 = vld [vmem:[%s4 + $0x94] sm:$0xf]
  %v144 = vld [vmem:[%s4 + $0x98] sm:$0xf]
  %v145 = vld [vmem:[%s4 + $0x9c] sm:$0xf]
  %v146 = vld [vmem:[%s4 + $0xa0] sm:$0xf]
  %v147 = vld [vmem:[%s4 + $0xa4] sm:$0xf]
  %v148 = vld [vmem:[%s4 + $0xa8] sm:$0xf]
  %v149 = vld [vmem:[%s4 + $0xac] sm:$0xf]
  %v150 = vld [vmem:[%s4 + $0xb0] sm:$0xf]
  %v151 = vld [vmem:[%s4 + $0xb4] sm:$0xf]
  %v152 = vld [vmem:[%s4 + $0xb8] sm:$0xf]
  %v153 = vld [vmem:[%s4 + $0xbc] sm:$0xf]
  %v154 = vld [vmem:[%s4 + $0xc0] sm:$0xf]
  %v155 = vld [vmem:[%s4 + $0xc4] sm:$0xf]
  %v156 = vld [vmem:[%s4 + $0xc8] sm:$0xf]
  %v157 = vld [vmem:[%s4 + $0xcc] sm:$0xf]
  %v158 = vld [vmem:[%s4 + $0xd0] sm:$0xf]
  %v159 = vld [vmem:[%s4 + $0xd4] sm:$0xf]
  %v160 = vld [vmem:[%s4 + $0xd8] sm:$0xf]
  %v161 = vld [vmem:[%s4 + $0xdc] sm:$0xf]
  %v162 = vld [vmem:[%s4 + $0xe0] sm:$0xf]
  %v163 = vld [vmem:[%s4 + $0xe4] sm:$0xf]
  %v164 = vld [vmem:[%s4 + $0xe8] sm:$0xf]
  %v165 = vld [vmem:[%s4 + $0xec] sm:$0xf]
  %v166 = vld [vmem:[%s4 + $0xf0] sm:$0xf]
  %v167 = vld [vmem:[%s4 + $0xf4] sm:$0xf]
  %v168 = vld [vmem:[%s4 + $0xf8] sm:$0xf]
  %v169 = vld [vmem:[%s4 + $0xfc] sm:$0xf]
  %v170 = vld [vmem:[%s4 + $0x100] sm:$0xf]
  %v171 = vld [vmem:[%s4 + $0x104] sm:$0xf]
  %v172 = vld [vmem:[%s4 + $0x108] sm:$0xf]
  %v173 = vld [vmem:[%s4 + $0x10c] sm:$0xf]
  %v174 = vld [vmem:[%s4 + $0x110] sm:$0xf]
  %v175 = vld [vmem:[%s4 + $0x114] sm:$0xf]
  %v176 = vld [vmem:[%s4 + $0x118] sm:$0xf]
  %v177 = vld [vmem:[%s4 + $0x11c] sm:$0xf]
  %v178 = vld [vmem:[%s4 + $0x120] sm:$0xf]
  %v179 = vld [vmem:[%s4 + $0x124] sm:$0xf]
  %v180 = vld [vmem:[%s4 + $0x128] sm:$0xf]
  %v181 = vld [vmem:[%s4 + $0x12c] sm:$0xf]
  %v182 = vld [vmem:[%s4 + $0x130] sm:$0xf]
  %v183 = vld [vmem:[%s4 + $0x134] sm:$0xf]
  %v184 = vld [vmem:[%s4 + $0x138] sm:$0xf]
  %v185 = vld [vmem:[%s4 + $0x13c] sm:$0xf]
  %v186 = vld [vmem:[%s4 + $0x140] sm:$0xf]
  %v187 = vld [vmem:[%s4 + $0x144] sm:$0xf]
  %v188 = vld [vmem:[%s4 + $0x148] sm:$0xf]
  %v189 = vld [vmem:[%s4 + $0x14c] sm:$0xf]
  %v190 = vld [vmem:[%s4 + $0x150] sm:$0xf]
  %v191 = vld [vmem:[%s4 + $0x154] sm:$0xf]
  %v192 = vld [vmem:[%s4 + $0x158] sm:$0xf]
  %v193 = vld [vmem:[%s4 + $0x15c] sm:$0xf]
  %v194 = vld [vmem:[%s4 + $0x160] sm:$0xf]
  %v195 = vld [vmem:[%s4 + $0x164] sm:$0xf]
  %v196 = vld [vmem:[%s4 + $0x168] sm:$0xf]
  %v197 = vld [vmem:[%s4 + $0x16c] sm:$0xf]
  %v198 = vld [vmem:[%s4 + $0x170] sm:$0xf]
  %v199 = vld [vmem:[%s4 + $0x174] sm:$0xf]
  %v200 = vld [vmem:[%s4 + $0x178] sm:$0xf]
  %v201 = vld [vmem:[%s4 + $0x17c] sm:$0xf]
  %v202 = vld [vmem:[%s4 + $0x180] sm:$0xf]
  %v203 = vld [vmem:[%s4 + $0x184] sm:$0xf]
  %v204 = vld [vmem:[%s4 + $0x188] sm:$0xf]
  %v205 = vld [vmem:[%s4 + $0x18c] sm:$0xf]
  %v206 = vld [vmem:[%s4 + $0x190] sm:$0xf]
  %v207 = vld [vmem:[%s4 + $0x194] sm:$0xf]
  %v208 = vld [vmem:[%s4 + $0x198] sm:$0xf]
  %v209 = vld [vmem:[%s4 + $0x19c] sm:$0xf]
  %v210 = vld [vmem:[%s4 + $0x1a0] sm:$0xf]
  %v211 = vld [vmem:[%s4 + $0x1a4] sm:$0xf]
  %v212 = vld [vmem:[%s4 + $0x1a8] sm:$0xf]
  %v213 = vld [vmem:[%s4 + $0x1ac] sm:$0xf]
  %v214 = vld [vmem:[%s4 + $0x1b0] sm:$0xf]
  %v215 = vld [vmem:[%s4 + $0x1b4] sm:$0xf]
  %v216 = vld [vmem:[%s4 + $0x1b8] sm:$0xf]
  %v217 = vld [vmem:[%s4 + $0x1bc] sm:$0xf]
  %v218 = vld [vmem:[%s4 + $0x1c0] sm:$0xf]
  %v219 = vld [vmem:[%s4 + $0x1c4] sm:$0xf]
  %v220 = vld [vmem:[%s4 + $0x1c8] sm:$0xf]
  %v221 = vld [vmem:[%s4 + $0x1cc] sm:$0xf]
  %v222 = vld [vmem:[%s4 + $0x1d0] sm:$0xf]
  %v223 = vld [vmem:[%s4 + $0x1d4] sm:$0xf]
  %v224 = vld [vmem:[%s4 + $0x1d8] sm:$0xf]
  %v225 = vld [vmem:[%s4 + $0x1dc] sm:$0xf]
  %v226 = vld [vmem:[%s4 + $0x1e0] sm:$0xf]
  %v227 = vld [vmem:[%s4 + $0x1e4] sm:$0xf]
  %v228 = vld [vmem:[%s4 + $0x1e8] sm:$0xf]
  %v229 = vld [vmem:[%s4 + $0x1ec] sm:$0xf]
  %v230 = vld [vmem:[%s4 + $0x1f0] sm:$0xf]
  %v231 = vld [vmem:[%s4 + $0x1f4] sm:$0xf]
  %v232 = vld [vmem:[%s4 + $0x1f8] sm:$0xf]
  %v233 = vld [vmem:[%s4 + $0x1fc] sm:$0xf]
  %v234 = vld [vmem:[%s6] sm:$0x1]
  %v236 = vlaneseq
  %v237 = vshrl.u32 %v236, 7
  %v238 = vsub.s32 0, %v237
  %v239 = vrot.slane %v234, %v238
  %v369 = vunpack.c.l.b16 %v106
  %v370 = vunpack.c.l.b16 %v107
  %v371 = vunpack.c.l.b16 %v108
  %v372 = vunpack.c.l.b16 %v109
  %v373 = vunpack.c.l.b16 %v110
  %v374 = vunpack.c.l.b16 %v111
  %v375 = vunpack.c.l.b16 %v112
  %v376 = vunpack.c.l.b16 %v113
  %v377 = vunpack.c.l.b16 %v114
  %v378 = vunpack.c.l.b16 %v115
  %v379 = vunpack.c.l.b16 %v116
  %v380 = vunpack.c.l.b16 %v117
  %v381 = vunpack.c.l.b16 %v118
  %v382 = vunpack.c.l.b16 %v119
  %v383 = vunpack.c.l.b16 %v120
  %v384 = vunpack.c.l.b16 %v121
  %v385 = vunpack.c.l.b16 %v122
  %v386 = vunpack.c.l.b16 %v123
  %v387 = vunpack.c.l.b16 %v124
  %v388 = vunpack.c.l.b16 %v125
  %v389 = vunpack.c.l.b16 %v126
  %v390 = vunpack.c.l.b16 %v127
  %v391 = vunpack.c.l.b16 %v128
  %v392 = vunpack.c.l.b16 %v129
  %v393 = vunpack.c.l.b16 %v130
  %v394 = vunpack.c.l.b16 %v131
  %v395 = vunpack.c.l.b16 %v132
  %v396 = vunpack.c.l.b16 %v133
  %v397 = vunpack.c.l.b16 %v134
  %v398 = vunpack.c.l.b16 %v135
  %v399 = vunpack.c.l.b16 %v136
  %v400 = vunpack.c.l.b16 %v137
  %v401 = vunpack.c.l.b16 %v138
  %v402 = vunpack.c.l.b16 %v139
  %v403 = vunpack.c.l.b16 %v140
  %v404 = vunpack.c.l.b16 %v141
  %v405 = vunpack.c.l.b16 %v142
  %v406 = vunpack.c.l.b16 %v143
  %v407 = vunpack.c.l.b16 %v144
  %v408 = vunpack.c.l.b16 %v145
  %v409 = vunpack.c.l.b16 %v146
  %v410 = vunpack.c.l.b16 %v147
  %v411 = vunpack.c.l.b16 %v148
  %v412 = vunpack.c.l.b16 %v149
  %v413 = vunpack.c.l.b16 %v150
  %v414 = vunpack.c.l.b16 %v151
  %v415 = vunpack.c.l.b16 %v152
  %v416 = vunpack.c.l.b16 %v153
  %v417 = vunpack.c.l.b16 %v154
  %v418 = vunpack.c.l.b16 %v155
  %v419 = vunpack.c.l.b16 %v156
  %v420 = vunpack.c.l.b16 %v157
  %v421 = vunpack.c.l.b16 %v158
  %v422 = vunpack.c.l.b16 %v159
  %v423 = vunpack.c.l.b16 %v160
  %v424 = vunpack.c.l.b16 %v161
  %v425 = vunpack.c.l.b16 %v162
  %v426 = vunpack.c.l.b16 %v163
  %v427 = vunpack.c.l.b16 %v164
  %v428 = vunpack.c.l.b16 %v165
  %v429 = vunpack.c.l.b16 %v166
  %v430 = vunpack.c.l.b16 %v167
  %v431 = vunpack.c.l.b16 %v168
  %v432 = vunpack.c.l.b16 %v169
  %v433 = vunpack.c.l.b16 %v170
  %v434 = vunpack.c.l.b16 %v171
  %v435 = vunpack.c.l.b16 %v172
  %v436 = vunpack.c.l.b16 %v173
  %v437 = vunpack.c.l.b16 %v174
  %v438 = vunpack.c.l.b16 %v175
  %v439 = vunpack.c.l.b16 %v176
  %v440 = vunpack.c.l.b16 %v177
  %v441 = vunpack.c.l.b16 %v178
  %v442 = vunpack.c.l.b16 %v179
  %v443 = vunpack.c.l.b16 %v180
  %v444 = vunpack.c.l.b16 %v181
  %v445 = vunpack.c.l.b16 %v182
  %v446 = vunpack.c.l.b16 %v183
  %v447 = vunpack.c.l.b16 %v184
  %v448 = vunpack.c.l.b16 %v185
  %v449 = vunpack.c.l.b16 %v186
  %v450 = vunpack.c.l.b16 %v187
  %v451 = vunpack.c.l.b16 %v188
  %v452 = vunpack.c.l.b16 %v189
  %v453 = vunpack.c.l.b16 %v190
  %v454 = vunpack.c.l.b16 %v191
  %v455 = vunpack.c.l.b16 %v192
  %v456 = vunpack.c.l.b16 %v193
  %v457 = vunpack.c.l.b16 %v194
  %v458 = vunpack.c.l.b16 %v195
  %v459 = vunpack.c.l.b16 %v196
  %v460 = vunpack.c.l.b16 %v197
  %v461 = vunpack.c.l.b16 %v198
  %v462 = vunpack.c.l.b16 %v199
  %v463 = vunpack.c.l.b16 %v200
  %v464 = vunpack.c.l.b16 %v201
  %v465 = vunpack.c.l.b16 %v202
  %v466 = vunpack.c.l.b16 %v203
  %v467 = vunpack.c.l.b16 %v204
  %v468 = vunpack.c.l.b16 %v205
  %v469 = vunpack.c.l.b16 %v206
  %v470 = vunpack.c.l.b16 %v207
  %v471 = vunpack.c.l.b16 %v208
  %v472 = vunpack.c.l.b16 %v209
  %v473 = vunpack.c.l.b16 %v210
  %v474 = vunpack.c.l.b16 %v211
  %v475 = vunpack.c.l.b16 %v212
  %v476 = vunpack.c.l.b16 %v213
  %v477 = vunpack.c.l.b16 %v214
  %v478 = vunpack.c.l.b16 %v215
  %v479 = vunpack.c.l.b16 %v216
  %v480 = vunpack.c.l.b16 %v217
  %v481 = vunpack.c.l.b16 %v218
  %v482 = vunpack.c.l.b16 %v219
  %v483 = vunpack.c.l.b16 %v220
  %v484 = vunpack.c.l.b16 %v221
  %v485 = vunpack.c.l.b16 %v222
  %v486 = vunpack.c.l.b16 %v223
  %v487 = vunpack.c.l.b16 %v224
  %v488 = vunpack.c.l.b16 %v225
  %v489 = vunpack.c.l.b16 %v226
  %v490 = vunpack.c.l.b16 %v227
  %v491 = vunpack.c.l.b16 %v228
  %v492 = vunpack.c.l.b16 %v229
  %v493 = vunpack.c.l.b16 %v230
  %v494 = vunpack.c.l.b16 %v231
  %v495 = vunpack.c.l.b16 %v232
  %v496 = vunpack.c.l.b16 %v233
  %v497 = vpack.c.b16 %v370, %v369
  %v498 = vpack.c.b16 %v372, %v371
  %v499 = vpack.c.b16 %v374, %v373
  %v500 = vpack.c.b16 %v376, %v375
  %v501 = vpack.c.b16 %v378, %v377
  %v502 = vpack.c.b16 %v380, %v379
  %v503 = vpack.c.b16 %v382, %v381
  %v504 = vpack.c.b16 %v384, %v383
  %v505 = vpack.c.b16 %v386, %v385
  %v506 = vpack.c.b16 %v388, %v387
  %v507 = vpack.c.b16 %v390, %v389
  %v508 = vpack.c.b16 %v392, %v391
  %v509 = vpack.c.b16 %v394, %v393
  %v510 = vpack.c.b16 %v396, %v395
  %v511 = vpack.c.b16 %v398, %v397
  %v512 = vpack.c.b16 %v400, %v399
  %v513 = vpack.c.b16 %v402, %v401
  %v514 = vpack.c.b16 %v404, %v403
  %v515 = vpack.c.b16 %v406, %v405
  %v516 = vpack.c.b16 %v408, %v407
  %v517 = vpack.c.b16 %v410, %v409
  %v518 = vpack.c.b16 %v412, %v411
  %v519 = vpack.c.b16 %v414, %v413
  %v520 = vpack.c.b16 %v416, %v415
  %v521 = vpack.c.b16 %v418, %v417
  %v522 = vpack.c.b16 %v420, %v419
  %v523 = vpack.c.b16 %v422, %v421
  %v524 = vpack.c.b16 %v424, %v423
  %v525 = vpack.c.b16 %v426, %v425
  %v526 = vpack.c.b16 %v428, %v427
  %v527 = vpack.c.b16 %v430, %v429
  %v528 = vpack.c.b16 %v432, %v431
  %v529 = vpack.c.b16 %v434, %v433
  %v530 = vpack.c.b16 %v436, %v435
  %v531 = vpack.c.b16 %v438, %v437
  %v532 = vpack.c.b16 %v440, %v439
  %v533 = vpack.c.b16 %v442, %v441
  %v534 = vpack.c.b16 %v444, %v443
  %v535 = vpack.c.b16 %v446, %v445
  %v536 = vpack.c.b16 %v448, %v447
  %v537 = vpack.c.b16 %v450, %v449
  %v538 = vpack.c.b16 %v452, %v451
  %v539 = vpack.c.b16 %v454, %v453
  %v540 = vpack.c.b16 %v456, %v455
  %v541 = vpack.c.b16 %v458, %v457
  %v542 = vpack.c.b16 %v460, %v459
  %v543 = vpack.c.b16 %v462, %v461
  %v544 = vpack.c.b16 %v464, %v463
  %v545 = vpack.c.b16 %v466, %v465
  %v546 = vpack.c.b16 %v468, %v467
  %v547 = vpack.c.b16 %v470, %v469
  %v548 = vpack.c.b16 %v472, %v471
  %v549 = vpack.c.b16 %v474, %v473
  %v550 = vpack.c.b16 %v476, %v475
  %v551 = vpack.c.b16 %v478, %v477
  %v552 = vpack.c.b16 %v480, %v479
  %v553 = vpack.c.b16 %v482, %v481
  %v554 = vpack.c.b16 %v484, %v483
  %v555 = vpack.c.b16 %v486, %v485
  %v556 = vpack.c.b16 %v488, %v487
  %v557 = vpack.c.b16 %v490, %v489
  %v558 = vpack.c.b16 %v492, %v491
  %v559 = vpack.c.b16 %v494, %v493
  %v560 = vpack.c.b16 %v496, %v495
  %625 = vmatprep.subr.bf16.mxu0 0
  %626 = vmatpush1.bf16.msra.mxu0 %v497
  %627 = vmatprep.subr.bf16.mxu0 0
  %628 = vmatpush1.bf16.msra.mxu0 %v498
  %629 = vmatprep.subr.bf16.mxu0 0
  %630 = vmatpush1.bf16.msra.mxu0 %v499
  %631 = vmatprep.subr.bf16.mxu0 0
  %632 = vmatpush1.bf16.msra.mxu0 %v500
  %633 = vmatprep.subr.bf16.mxu0 0
  %634 = vmatpush1.bf16.msra.mxu0 %v501
  %635 = vmatprep.subr.bf16.mxu0 0
  %636 = vmatpush1.bf16.msra.mxu0 %v502
  %637 = vmatprep.subr.bf16.mxu0 0
  %638 = vmatpush1.bf16.msra.mxu0 %v503
  %639 = vmatprep.subr.bf16.mxu0 0
  %640 = vmatpush1.bf16.msra.mxu0 %v504
  %641 = vmatprep.subr.bf16.mxu0 0
  %642 = vmatpush1.bf16.msra.mxu0 %v505
  %643 = vmatprep.subr.bf16.mxu0 0
  %644 = vmatpush1.bf16.msra.mxu0 %v506
  %645 = vmatprep.subr.bf16.mxu0 0
  %646 = vmatpush1.bf16.msra.mxu0 %v507
  %647 = vmatprep.subr.bf16.mxu0 0
  %648 = vmatpush1.bf16.msra.mxu0 %v508
  %649 = vmatprep.subr.bf16.mxu0 0
  %650 = vmatpush1.bf16.msra.mxu0 %v509
  %651 = vmatprep.subr.bf16.mxu0 0
  %652 = vmatpush1.bf16.msra.mxu0 %v510
  %653 = vmatprep.subr.bf16.mxu0 0
  %654 = vmatpush1.bf16.msra.mxu0 %v511
  %655 = vmatprep.subr.bf16.mxu0 0
  %656 = vmatpush1.bf16.msra.mxu0 %v512
  %657 = vmatprep.mubr.bf16.mxu0 %v99
  %658 = vmatmul.mubr.bf16.gmra.mrb[0].mxu0 %v98
  %v659 = vpop.f32.mrb[0].mxu0
  %v660 = vadd.f32 %v239, %v659
  %v661 = vpop.f32.mrb[0].mxu0
  %v662 = vpop.f32.mrb[0].mxu0
  %v663 = vpop.f32.mrb[0].mxu0
  %664 = vdwg.mxu0
  %665 = vmatprep.subr.bf16.mxu0 0
  %666 = vmatpush1.bf16.msra.mxu0 %v513
  %667 = vmatprep.subr.bf16.mxu0 0
  %668 = vmatpush1.bf16.msra.mxu0 %v514
  %669 = vmatprep.subr.bf16.mxu0 0
  %670 = vmatpush1.bf16.msra.mxu0 %v515
  %671 = vmatprep.subr.bf16.mxu0 0
  %672 = vmatpush1.bf16.msra.mxu0 %v516
  %673 = vmatprep.subr.bf16.mxu0 0
  %674 = vmatpush1.bf16.msra.mxu0 %v517
  %675 = vmatprep.subr.bf16.mxu0 0
  %676 = vmatpush1.bf16.msra.mxu0 %v518
  %677 = vmatprep.subr.bf16.mxu0 0
  %678 = vmatpush1.bf16.msra.mxu0 %v519
  %679 = vmatprep.subr.bf16.mxu0 0
  %680 = vmatpush1.bf16.msra.mxu0 %v520
  %681 = vmatprep.subr.bf16.mxu0 0
  %682 = vmatpush1.bf16.msra.mxu0 %v521
  %683 = vmatprep.subr.bf16.mxu0 0
  %684 = vmatpush1.bf16.msra.mxu0 %v522
  %685 = vmatprep.subr.bf16.mxu0 0
  %686 = vmatpush1.bf16.msra.mxu0 %v523
  %687 = vmatprep.subr.bf16.mxu0 0
  %688 = vmatpush1.bf16.msra.mxu0 %v524
  %689 = vmatprep.subr.bf16.mxu0 0
  %690 = vmatpush1.bf16.msra.mxu0 %v525
  %691 = vmatprep.subr.bf16.mxu0 0
  %692 = vmatpush1.bf16.msra.mxu0 %v526
  %693 = vmatprep.subr.bf16.mxu0 0
  %694 = vmatpush1.bf16.msra.mxu0 %v527
  %695 = vmatprep.subr.bf16.mxu0 0
  %696 = vmatpush1.bf16.msra.mxu0 %v528
  %697 = vmatprep.mubr.bf16.mxu0 %v101
  %698 = vmatmul.mubr.bf16.gmra.mrb[0].mxu0 %v100
  %v699 = vpop.f32.mrb[0].mxu0
  %v700 = vadd.f32 %v660, %v699
  %v701 = vpop.f32.mrb[0].mxu0
  %v702 = vpop.f32.mrb[0].mxu0
  %v703 = vpop.f32.mrb[0].mxu0
  %704 = vdwg.mxu0
  %705 = vmatprep.subr.bf16.mxu0 0
  %706 = vmatpush1.bf16.msra.mxu0 %v529
  %707 = vmatprep.subr.bf16.mxu0 0
  %708 = vmatpush1.bf16.msra.mxu0 %v530
  %709 = vmatprep.subr.bf16.mxu0 0
  %710 = vmatpush1.bf16.msra.mxu0 %v531
  %711 = vmatprep.subr.bf16.mxu0 0
  %712 = vmatpush1.bf16.msra.mxu0 %v532
  %713 = vmatprep.subr.bf16.mxu0 0
  %714 = vmatpush1.bf16.msra.mxu0 %v533
  %715 = vmatprep.subr.bf16.mxu0 0
  %716 = vmatpush1.bf16.msra.mxu0 %v534
  %717 = vmatprep.subr.bf16.mxu0 0
  %718 = vmatpush1.bf16.msra.mxu0 %v535
  %719 = vmatprep.subr.bf16.mxu0 0
  %720 = vmatpush1.bf16.msra.mxu0 %v536
  %721 = vmatprep.subr.bf16.mxu0 0
  %722 = vmatpush1.bf16.msra.mxu0 %v537
  %723 = vmatprep.subr.bf16.mxu0 0
  %724 = vmatpush1.bf16.msra.mxu0 %v538
  %725 = vmatprep.subr.bf16.mxu0 0
  %726 = vmatpush1.bf16.msra.mxu0 %v539
  %727 = vmatprep.subr.bf16.mxu0 0
  %728 = vmatpush1.bf16.msra.mxu0 %v540
  %729 = vmatprep.subr.bf16.mxu0 0
  %730 = vmatpush1.bf16.msra.mxu0 %v541
  %731 = vmatprep.subr.bf16.mxu0 0
  %732 = vmatpush1.bf16.msra.mxu0 %v542
  %733 = vmatprep.subr.bf16.mxu0 0
  %734 = vmatpush1.bf16.msra.mxu0 %v543
  %735 = vmatprep.subr.bf16.mxu0 0
  %736 = vmatpush1.bf16.msra.mxu0 %v544
  %737 = vmatprep.mubr.bf16.mxu0 %v103
  %738 = vmatmul.mubr.bf16.gmra.mrb[0].mxu0 %v102
  %v739 = vpop.f32.mrb[0].mxu0
  %v740 = vadd.f32 %v700, %v739
  %v741 = vpop.f32.mrb[0].mxu0
  %v742 = vpop.f32.mrb[0].mxu0
  %v743 = vpop.f32.mrb[0].mxu0
  %744 = vdwg.mxu0
  %745 = vmatprep.subr.bf16.mxu0 0
  %746 = vmatpush1.bf16.msra.mxu0 %v545
  %747 = vmatprep.subr.bf16.mxu0 0
  %748 = vmatpush1.bf16.msra.mxu0 %v546
  %749 = vmatprep.subr.bf16.mxu0 0
  %750 = vmatpush1.bf16.msra.mxu0 %v547
  %751 = vmatprep.subr.bf16.mxu0 0
  %752 = vmatpush1.bf16.msra.mxu0 %v548
  %753 = vmatprep.subr.bf16.mxu0 0
  %754 = vmatpush1.bf16.msra.mxu0 %v549
  %755 = vmatprep.subr.bf16.mxu0 0
  %756 = vmatpush1.bf16.msra.mxu0 %v550
  %757 = vmatprep.subr.bf16.mxu0 0
  %758 = vmatpush1.bf16.msra.mxu0 %v551
  %759 = vmatprep.subr.bf16.mxu0 0
  %760 = vmatpush1.bf16.msra.mxu0 %v552
  %761 = vmatprep.subr.bf16.mxu0 0
  %762 = vmatpush1.bf16.msra.mxu0 %v553
  %763 = vmatprep.subr.bf16.mxu0 0
  %764 = vmatpush1.bf16.msra.mxu0 %v554
  %765 = vmatprep.subr.bf16.mxu0 0
  %766 = vmatpush1.bf16.msra.mxu0 %v555
  %767 = vmatprep.subr.bf16.mxu0 0
  %768 = vmatpush1.bf16.msra.mxu0 %v556
  %769 = vmatprep.subr.bf16.mxu0 0
  %770 = vmatpush1.bf16.msra.mxu0 %v557
  %771 = vmatprep.subr.bf16.mxu0 0
  %772 = vmatpush1.bf16.msra.mxu0 %v558
  %773 = vmatprep.subr.bf16.mxu0 0
  %774 = vmatpush1.bf16.msra.mxu0 %v559
  %775 = vmatprep.subr.bf16.mxu0 0
  %776 = vmatpush1.bf16.msra.mxu0 %v560
  %777 = vmatprep.mubr.bf16.mxu0 %v105
  %778 = vmatmul.mubr.bf16.gmra.mrb[0].mxu0 %v104
  %v779 = vpop.f32.mrb[0].mxu0
  %v780 = vadd.f32 %v740, %v779
  %v781 = vpop.f32.mrb[0].mxu0
  %v782 = vpop.f32.mrb[0].mxu0
  %v783 = vpop.f32.mrb[0].mxu0
  %784 = vdwg.mxu0
  %v785 = vld [vmem:[%s1] sm:$0xff]
  %v786 = vld [vmem:[%s1 + $0x8] sm:$0xff]
  %vm787 = vcmask 261120
  %v788 = vsel %vm787, %v785, 0.0
  %v789 = vrot.slane %v788, 4
  %v790 = vadd.f32 %v788, %v789
  %v791 = vrot.slane %v790, 2
  %v792 = vadd.f32 %v790, %v791
  %v793 = vrot.slane %v792, 1
  %v794 = vadd.f32 %v792, %v793
  %v795 = vsel %vm787, %v786, 0.0
  %v796 = vrot.slane %v795, 4
  %v797 = vadd.f32 %v795, %v796
  %v798 = vrot.slane %v797, 2
  %v799 = vadd.f32 %v797, %v798
  %v800 = vrot.slane %v799, 1
  %v801 = vadd.f32 %v799, %v800
  %v802 = vrcp.pop 8.0
  %v803 = vmul.f32 %v794, %v802
  %v804 = vmul.f32 %v801, %v802
  %v805 = vld [vmem:[%s8] sm:$0xff]
  %v806 = vld [vmem:[%s8 + $0x8] sm:$0xff]
  %v807 = vld [vmem:[%s8 + $0x10] sm:$0xff]
  %v808 = vld [vmem:[%s8 + $0x18] sm:$0xff]
  %v809 = vld [vmem:[%s11] sm:$0x1]
  %v811 = vlaneseq
  %v812 = vshrl.u32 %v811, 7
  %v813 = vsub.s32 0, %v812
  %v814 = vrot.slane %v809, %v813
  %vm818 = vcmask 1041409
  %v819 = vsel %vm818, %v804, %v803
  %v820 = vsel %vm787, %v819, 0
  %822 = vmatprep.subr.mxu0 0.0
  %823 = vmatpush1.msra.mxu0 %v805
  %824 = vmatprep.subr.mxu0 0.0
  %825 = vmatpush1.msra.mxu0 %v806
  %826 = vmatprep.subr.mxu0 0.0
  %827 = vmatpush1.msra.mxu0 %v807
  %828 = vmatprep.subr.mxu0 0.0
  %829 = vmatpush1.msra.mxu0 %v808
  %830 = vmatprep.subr.mxu0 0.0
  %831 = vmatpush1.msra.mxu0 0.0
  %832 = vmatprep.subr.mxu0 0.0
  %833 = vmatpush1.msra.mxu0 0.0
  %834 = vmatprep.subr.mxu0 0.0
  %835 = vmatpush1.msra.mxu0 0.0
  %836 = vmatprep.subr.mxu0 0.0
  %837 = vmatpush1.msra.mxu0 0.0
  %838 = vmatprep.subr.mxu0 0.0
  %839 = vmatpush1.msra.mxu0 0.0
  %840 = vmatprep.subr.mxu0 0.0
  %841 = vmatpush1.msra.mxu0 0.0
  %842 = vmatprep.subr.mxu0 0.0
  %843 = vmatpush1.msra.mxu0 0.0
  %844 = vmatprep.subr.mxu0 0.0
  %845 = vmatpush1.msra.mxu0 0.0
  %846 = vmatprep.subr.mxu0 0.0
  %847 = vmatpush1.msra.mxu0 0.0
  %848 = vmatprep.subr.mxu0 0.0
  %849 = vmatpush1.msra.mxu0 0.0
  %850 = vmatprep.subr.mxu0 0.0
  %851 = vmatpush1.msra.mxu0 0.0
  %852 = vmatprep.subr.mxu0 0.0
  %853 = vmatpush1.msra.mxu0 0.0
  %854 = vmatprep.subr.mxu0 0.0
  %855 = vmatpush1.msra.mxu0 0.0
  %856 = vmatprep.subr.mxu0 0.0
  %857 = vmatpush1.msra.mxu0 0.0
  %858 = vmatprep.subr.mxu0 0.0
  %859 = vmatpush1.msra.mxu0 0.0
  %860 = vmatprep.subr.mxu0 0.0
  %861 = vmatpush1.msra.mxu0 0.0
  %862 = vmatprep.subr.mxu0 0.0
  %863 = vmatpush1.msra.mxu0 0.0
  %864 = vmatprep.subr.mxu0 0.0
  %865 = vmatpush1.msra.mxu0 0.0
  %866 = vmatprep.subr.mxu0 0.0
  %867 = vmatpush1.msra.mxu0 0.0
  %868 = vmatprep.subr.mxu0 0.0
  %869 = vmatpush1.msra.mxu0 0.0
  %870 = vmatprep.subr.mxu0 0.0
  %871 = vmatpush1.msra.mxu0 0.0
  %872 = vmatprep.subr.mxu0 0.0
  %873 = vmatpush1.msra.mxu0 0.0
  %874 = vmatprep.subr.mxu0 0.0
  %875 = vmatpush1.msra.mxu0 0.0
  %876 = vmatprep.subr.mxu0 0.0
  %877 = vmatpush1.msra.mxu0 0.0
  %878 = vmatprep.subr.mxu0 0.0
  %879 = vmatpush1.msra.mxu0 0.0
  %880 = vmatprep.subr.mxu0 0.0
  %881 = vmatpush1.msra.mxu0 0.0
  %882 = vmatprep.subr.mxu0 0.0
  %883 = vmatpush1.msra.mxu0 0.0
  %884 = vmatprep.subr.mxu0 0.0
  %885 = vmatpush1.msra.mxu0 0.0
  %886 = vmatprep.mubr.f32.mxu0 0.0
  %887 = vmatmul.mubr.f32.gmra.mrb[0].mxu0 %v820
  %v888 = vpop.f32.mrb[0].mxu0
  %v889 = vadd.f32 %v814, %v888
  %v890 = vpop.f32.mrb[0].mxu0
  %891 = vdwg.mxu0
  %v892 = vld [vmem:[%s7] sm:$0x1]
  %v893 = vld [vmem:[%s3] sm:$0x3]
  %v894 = vld [vmem:[%s9] sm:$0xff]
  %v895 = vld [vmem:[%s9 + $0x8] sm:$0xff]
  %v896 = vld [vmem:[%s9 + $0x10] sm:$0xff]
  %v897 = vld [vmem:[%s9 + $0x18] sm:$0xff]
  %v898 = vld [vmem:[%s10] sm:$0xff]
  %v899 = vld [vmem:[%s10 + $0x8] sm:$0xff]
  %v900 = vld [vmem:[%s10 + $0x10] sm:$0xff]
  %v901 = vld [vmem:[%s10 + $0x18] sm:$0xff]
  %v903 = vsel %vm787, %v893, 0
  %905 = vmatprep.subr.mxu0 0.0
  %906 = vmatpush1.msra.mxu0 %v898
  %907 = vmatprep.subr.mxu0 0.0
  %908 = vmatpush1.msra.mxu0 %v899
  %909 = vmatprep.subr.mxu0 0.0
  %910 = vmatpush1.msra.mxu0 %v900
  %911 = vmatprep.subr.mxu0 0.0
  %912 = vmatpush1.msra.mxu0 %v901
  %913 = vmatprep.subr.mxu0 0.0
  %914 = vmatpush1.msra.mxu0 0.0
  %915 = vmatprep.subr.mxu0 0.0
  %916 = vmatpush1.msra.mxu0 0.0
  %917 = vmatprep.subr.mxu0 0.0
  %918 = vmatpush1.msra.mxu0 0.0
  %919 = vmatprep.subr.mxu0 0.0
  %920 = vmatpush1.msra.mxu0 0.0
  %921 = vmatprep.subr.mxu0 0.0
  %922 = vmatpush1.msra.mxu0 0.0
  %923 = vmatprep.subr.mxu0 0.0
  %924 = vmatpush1.msra.mxu0 0.0
  %925 = vmatprep.subr.mxu0 0.0
  %926 = vmatpush1.msra.mxu0 0.0
  %927 = vmatprep.subr.mxu0 0.0
  %928 = vmatpush1.msra.mxu0 0.0
  %929 = vmatprep.subr.mxu0 0.0
  %930 = vmatpush1.msra.mxu0 0.0
  %931 = vmatprep.subr.mxu0 0.0
  %932 = vmatpush1.msra.mxu0 0.0
  %933 = vmatprep.subr.mxu0 0.0
  %934 = vmatpush1.msra.mxu0 0.0
  %935 = vmatprep.subr.mxu0 0.0
  %936 = vmatpush1.msra.mxu0 0.0
  %937 = vmatprep.subr.mxu0 0.0
  %938 = vmatpush1.msra.mxu0 0.0
  %939 = vmatprep.subr.mxu0 0.0
  %940 = vmatpush1.msra.mxu0 0.0
  %941 = vmatprep.subr.mxu0 0.0
  %942 = vmatpush1.msra.mxu0 0.0
  %943 = vmatprep.subr.mxu0 0.0
  %944 = vmatpush1.msra.mxu0 0.0
  %945 = vmatprep.subr.mxu0 0.0
  %946 = vmatpush1.msra.mxu0 0.0
  %947 = vmatprep.subr.mxu0 0.0
  %948 = vmatpush1.msra.mxu0 0.0
  %949 = vmatprep.subr.mxu0 0.0
  %950 = vmatpush1.msra.mxu0 0.0
  %951 = vmatprep.subr.mxu0 0.0
  %952 = vmatpush1.msra.mxu0 0.0
  %953 = vmatprep.subr.mxu0 0.0
  %954 = vmatpush1.msra.mxu0 0.0
  %955 = vmatprep.subr.mxu0 0.0
  %956 = vmatpush1.msra.mxu0 0.0
  %957 = vmatprep.subr.mxu0 0.0
  %958 = vmatpush1.msra.mxu0 0.0
  %959 = vmatprep.subr.mxu0 0.0
  %960 = vmatpush1.msra.mxu0 0.0
  %961 = vmatprep.subr.mxu0 0.0
  %962 = vmatpush1.msra.mxu0 0.0
  %963 = vmatprep.subr.mxu0 0.0
  %964 = vmatpush1.msra.mxu0 0.0
  %965 = vmatprep.subr.mxu0 0.0
  %966 = vmatpush1.msra.mxu0 0.0
  %967 = vmatprep.subr.mxu0 0.0
  %968 = vmatpush1.msra.mxu0 0.0
  %969 = vmatprep.mubr.f32.mxu0 0.0
  %970 = vmatmul.mubr.f32.gmra.mrb[0].mxu0 %v903
  %v971 = vpop.f32.mrb[0].mxu0
  %v972 = vadd.f32 0.0, %v971
  %v973 = vpop.f32.mrb[0].mxu0
  %974 = vdwg.mxu0
  %975 = vmatprep.subr.mxu0 0.0
  %976 = vmatpush1.msra.mxu0 %v894
  %977 = vmatprep.subr.mxu0 0.0
  %978 = vmatpush1.msra.mxu0 %v895
  %979 = vmatprep.subr.mxu0 0.0
  %980 = vmatpush1.msra.mxu0 %v896
  %981 = vmatprep.subr.mxu0 0.0
  %982 = vmatpush1.msra.mxu0 %v897
  %983 = vmatprep.subr.mxu0 0.0
  %984 = vmatpush1.msra.mxu0 0.0
  %985 = vmatprep.subr.mxu0 0.0
  %986 = vmatpush1.msra.mxu0 0.0
  %987 = vmatprep.subr.mxu0 0.0
  %988 = vmatpush1.msra.mxu0 0.0
  %989 = vmatprep.subr.mxu0 0.0
  %990 = vmatpush1.msra.mxu0 0.0
  %991 = vmatprep.subr.mxu0 0.0
  %992 = vmatpush1.msra.mxu0 0.0
  %993 = vmatprep.subr.mxu0 0.0
  %994 = vmatpush1.msra.mxu0 0.0
  %995 = vmatprep.subr.mxu0 0.0
  %996 = vmatpush1.msra.mxu0 0.0
  %997 = vmatprep.subr.mxu0 0.0
  %998 = vmatpush1.msra.mxu0 0.0
  %999 = vmatprep.subr.mxu0 0.0
  %1000 = vmatpush1.msra.mxu0 0.0
  %1001 = vmatprep.subr.mxu0 0.0
  %1002 = vmatpush1.msra.mxu0 0.0
  %1003 = vmatprep.subr.mxu0 0.0
  %1004 = vmatpush1.msra.mxu0 0.0
  %1005 = vmatprep.subr.mxu0 0.0
  %1006 = vmatpush1.msra.mxu0 0.0
  %1007 = vmatprep.subr.mxu0 0.0
  %1008 = vmatpush1.msra.mxu0 0.0
  %1009 = vmatprep.subr.mxu0 0.0
  %1010 = vmatpush1.msra.mxu0 0.0
  %1011 = vmatprep.subr.mxu0 0.0
  %1012 = vmatpush1.msra.mxu0 0.0
  %1013 = vmatprep.subr.mxu0 0.0
  %1014 = vmatpush1.msra.mxu0 0.0
  %1015 = vmatprep.subr.mxu0 0.0
  %1016 = vmatpush1.msra.mxu0 0.0
  %1017 = vmatprep.subr.mxu0 0.0
  %1018 = vmatpush1.msra.mxu0 0.0
  %1019 = vmatprep.subr.mxu0 0.0
  %1020 = vmatpush1.msra.mxu0 0.0
  %1021 = vmatprep.subr.mxu0 0.0
  %1022 = vmatpush1.msra.mxu0 0.0
  %1023 = vmatprep.subr.mxu0 0.0
  %1024 = vmatpush1.msra.mxu0 0.0
  %1025 = vmatprep.subr.mxu0 0.0
  %1026 = vmatpush1.msra.mxu0 0.0
  %1027 = vmatprep.subr.mxu0 0.0
  %1028 = vmatpush1.msra.mxu0 0.0
  %1029 = vmatprep.subr.mxu0 0.0
  %1030 = vmatpush1.msra.mxu0 0.0
  %1031 = vmatprep.subr.mxu0 0.0
  %1032 = vmatpush1.msra.mxu0 0.0
  %1033 = vmatprep.subr.mxu0 0.0
  %1034 = vmatpush1.msra.mxu0 0.0
  %1035 = vmatprep.subr.mxu0 0.0
  %1036 = vmatpush1.msra.mxu0 0.0
  %1037 = vmatprep.subr.mxu0 0.0
  %1038 = vmatpush1.msra.mxu0 0.0
  %1039 = vmatprep.mubr.f32.mxu0 0.0
  %1040 = vmatmul.mubr.f32.gmra.mrb[0].mxu0 %v903
  %v1041 = vpop.f32.mrb[0].mxu0
  %v1042 = vadd.f32 %v972, %v1041
  %v1043 = vpop.f32.mrb[0].mxu0
  %1044 = vdwg.mxu0
  %v1046 = vlaneseq
  %v1047 = vshrl.u32 %v1046, 7
  %v1048 = vsub.s32 0, %v1047
  %v1049 = vrot.slane %v892, %v1048
  %v1052 = vsel %vm787, %v780, 0
  %1054 = vmatprep.subr.mxu0 0.0
  %1055 = vmatpush1.msra.mxu0 %v898
  %1056 = vmatprep.subr.mxu0 0.0
  %1057 = vmatpush1.msra.mxu0 %v899
  %1058 = vmatprep.subr.mxu0 0.0
  %1059 = vmatpush1.msra.mxu0 %v900
  %1060 = vmatprep.subr.mxu0 0.0
  %1061 = vmatpush1.msra.mxu0 %v901
  %1062 = vmatprep.subr.mxu0 0.0
  %1063 = vmatpush1.msra.mxu0 0.0
  %1064 = vmatprep.subr.mxu0 0.0
  %1065 = vmatpush1.msra.mxu0 0.0
  %1066 = vmatprep.subr.mxu0 0.0
  %1067 = vmatpush1.msra.mxu0 0.0
  %1068 = vmatprep.subr.mxu0 0.0
  %1069 = vmatpush1.msra.mxu0 0.0
  %1070 = vmatprep.subr.mxu0 0.0
  %1071 = vmatpush1.msra.mxu0 0.0
  %1072 = vmatprep.subr.mxu0 0.0
  %1073 = vmatpush1.msra.mxu0 0.0
  %1074 = vmatprep.subr.mxu0 0.0
  %1075 = vmatpush1.msra.mxu0 0.0
  %1076 = vmatprep.subr.mxu0 0.0
  %1077 = vmatpush1.msra.mxu0 0.0
  %1078 = vmatprep.subr.mxu0 0.0
  %1079 = vmatpush1.msra.mxu0 0.0
  %1080 = vmatprep.subr.mxu0 0.0
  %1081 = vmatpush1.msra.mxu0 0.0
  %1082 = vmatprep.subr.mxu0 0.0
  %1083 = vmatpush1.msra.mxu0 0.0
  %1084 = vmatprep.subr.mxu0 0.0
  %1085 = vmatpush1.msra.mxu0 0.0
  %1086 = vmatprep.subr.mxu0 0.0
  %1087 = vmatpush1.msra.mxu0 0.0
  %1088 = vmatprep.subr.mxu0 0.0
  %1089 = vmatpush1.msra.mxu0 0.0
  %1090 = vmatprep.subr.mxu0 0.0
  %1091 = vmatpush1.msra.mxu0 0.0
  %1092 = vmatprep.subr.mxu0 0.0
  %1093 = vmatpush1.msra.mxu0 0.0
  %1094 = vmatprep.subr.mxu0 0.0
  %1095 = vmatpush1.msra.mxu0 0.0
  %1096 = vmatprep.subr.mxu0 0.0
  %1097 = vmatpush1.msra.mxu0 0.0
  %1098 = vmatprep.subr.mxu0 0.0
  %1099 = vmatpush1.msra.mxu0 0.0
  %1100 = vmatprep.subr.mxu0 0.0
  %1101 = vmatpush1.msra.mxu0 0.0
  %1102 = vmatprep.subr.mxu0 0.0
  %1103 = vmatpush1.msra.mxu0 0.0
  %1104 = vmatprep.subr.mxu0 0.0
  %1105 = vmatpush1.msra.mxu0 0.0
  %1106 = vmatprep.subr.mxu0 0.0
  %1107 = vmatpush1.msra.mxu0 0.0
  %1108 = vmatprep.subr.mxu0 0.0
  %1109 = vmatpush1.msra.mxu0 0.0
  %1110 = vmatprep.subr.mxu0 0.0
  %1111 = vmatpush1.msra.mxu0 0.0
  %1112 = vmatprep.subr.mxu0 0.0
  %1113 = vmatpush1.msra.mxu0 0.0
  %1114 = vmatprep.subr.mxu0 0.0
  %1115 = vmatpush1.msra.mxu0 0.0
  %1116 = vmatprep.subr.mxu0 0.0
  %1117 = vmatpush1.msra.mxu0 0.0
  %1118 = vmatprep.mubr.f32.mxu0 0.0
  %1119 = vmatmul.mubr.f32.gmra.mrb[0].mxu0 %v1052
  %v1120 = vpop.f32.mrb[0].mxu0
  %v1121 = vadd.f32 0.0, %v1120
  %v1122 = vpop.f32.mrb[0].mxu0
  %1123 = vdwg.mxu0
  %v1124 = vsel %vm787, %v1049, 0
  %1126 = vmatprep.subr.mxu0 0.0
  %1127 = vmatpush1.msra.mxu0 %v894
  %1128 = vmatprep.subr.mxu0 0.0
  %1129 = vmatpush1.msra.mxu0 %v895
  %1130 = vmatprep.subr.mxu0 0.0
  %1131 = vmatpush1.msra.mxu0 %v896
  %1132 = vmatprep.subr.mxu0 0.0
  %1133 = vmatpush1.msra.mxu0 %v897
  %1134 = vmatprep.subr.mxu0 0.0
  %1135 = vmatpush1.msra.mxu0 0.0
  %1136 = vmatprep.subr.mxu0 0.0
  %1137 = vmatpush1.msra.mxu0 0.0
  %1138 = vmatprep.subr.mxu0 0.0
  %1139 = vmatpush1.msra.mxu0 0.0
  %1140 = vmatprep.subr.mxu0 0.0
  %1141 = vmatpush1.msra.mxu0 0.0
  %1142 = vmatprep.subr.mxu0 0.0
  %1143 = vmatpush1.msra.mxu0 0.0
  %1144 = vmatprep.subr.mxu0 0.0
  %1145 = vmatpush1.msra.mxu0 0.0
  %1146 = vmatprep.subr.mxu0 0.0
  %1147 = vmatpush1.msra.mxu0 0.0
  %1148 = vmatprep.subr.mxu0 0.0
  %1149 = vmatpush1.msra.mxu0 0.0
  %1150 = vmatprep.subr.mxu0 0.0
  %1151 = vmatpush1.msra.mxu0 0.0
  %1152 = vmatprep.subr.mxu0 0.0
  %1153 = vmatpush1.msra.mxu0 0.0
  %1154 = vmatprep.subr.mxu0 0.0
  %1155 = vmatpush1.msra.mxu0 0.0
  %1156 = vmatprep.subr.mxu0 0.0
  %1157 = vmatpush1.msra.mxu0 0.0
  %1158 = vmatprep.subr.mxu0 0.0
  %1159 = vmatpush1.msra.mxu0 0.0
  %1160 = vmatprep.subr.mxu0 0.0
  %1161 = vmatpush1.msra.mxu0 0.0
  %1162 = vmatprep.subr.mxu0 0.0
  %1163 = vmatpush1.msra.mxu0 0.0
  %1164 = vmatprep.subr.mxu0 0.0
  %1165 = vmatpush1.msra.mxu0 0.0
  %1166 = vmatprep.subr.mxu0 0.0
  %1167 = vmatpush1.msra.mxu0 0.0
  %1168 = vmatprep.subr.mxu0 0.0
  %1169 = vmatpush1.msra.mxu0 0.0
  %1170 = vmatprep.subr.mxu0 0.0
  %1171 = vmatpush1.msra.mxu0 0.0
  %1172 = vmatprep.subr.mxu0 0.0
  %1173 = vmatpush1.msra.mxu0 0.0
  %1174 = vmatprep.subr.mxu0 0.0
  %1175 = vmatpush1.msra.mxu0 0.0
  %1176 = vmatprep.subr.mxu0 0.0
  %1177 = vmatpush1.msra.mxu0 0.0
  %1178 = vmatprep.subr.mxu0 0.0
  %1179 = vmatpush1.msra.mxu0 0.0
  %1180 = vmatprep.subr.mxu0 0.0
  %1181 = vmatpush1.msra.mxu0 0.0
  %1182 = vmatprep.subr.mxu0 0.0
  %1183 = vmatpush1.msra.mxu0 0.0
  %1184 = vmatprep.subr.mxu0 0.0
  %1185 = vmatpush1.msra.mxu0 0.0
  %1186 = vmatprep.subr.mxu0 0.0
  %1187 = vmatpush1.msra.mxu0 0.0
  %1188 = vmatprep.subr.mxu0 0.0
  %1189 = vmatpush1.msra.mxu0 0.0
  %1190 = vmatprep.mubr.f32.mxu0 0.0
  %1191 = vmatmul.mubr.f32.gmra.mrb[0].mxu0 %v1124
  %v1192 = vpop.f32.mrb[0].mxu0
  %v1193 = vadd.f32 %v1121, %v1192
  %v1194 = vpop.f32.mrb[0].mxu0
  %1195 = vdwg.mxu0
  %v1196 = vld [vmem:[%s2] sm:$0xff]
  %v1197 = vld [vmem:[%s2 + $0x8] sm:$0xff]
  %v1198 = vld [vmem:[%s2 + $0x10] sm:$0xff]
  %v1199 = vld [vmem:[%s2 + $0x18] sm:$0xff]
  %v1204 = vcombine.high %v1196, %v1196
  %v1205 = vcombine.high %v1197, %v1197
  %v1206 = vcombine.high %v1198, %v1198
  %v1207 = vcombine.high %v1199, %v1199
  %v1212 = vpack.c.bf16 %v1196, %v1196
  %v1213 = vpack.c.bf16 %v1204, %v1204
  %v1214 = vpack.c.bf16 %v1197, %v1197
  %v1215 = vpack.c.bf16 %v1205, %v1205
  %v1216 = vpack.c.bf16 %v1198, %v1198
  %v1217 = vpack.c.bf16 %v1206, %v1206
  %v1218 = vpack.c.bf16 %v1199, %v1199
  %v1219 = vpack.c.bf16 %v1207, %v1207
  %v1220 = vld [vmem:[%s5] sm:$0xf]
  %v1221 = vld [vmem:[%s5 + $0x4] sm:$0xf]
  %v1222 = vld [vmem:[%s5 + $0x8] sm:$0xf]
  %v1223 = vld [vmem:[%s5 + $0xc] sm:$0xf]
  %v1224 = vld [vmem:[%s5 + $0x10] sm:$0xf]
  %v1225 = vld [vmem:[%s5 + $0x14] sm:$0xf]
  %v1226 = vld [vmem:[%s5 + $0x18] sm:$0xf]
  %v1227 = vld [vmem:[%s5 + $0x1c] sm:$0xf]
  %v1228 = vld [vmem:[%s5 + $0x20] sm:$0xf]
  %v1229 = vld [vmem:[%s5 + $0x24] sm:$0xf]
  %v1230 = vld [vmem:[%s5 + $0x28] sm:$0xf]
  %v1231 = vld [vmem:[%s5 + $0x2c] sm:$0xf]
  %v1232 = vld [vmem:[%s5 + $0x30] sm:$0xf]
  %v1233 = vld [vmem:[%s5 + $0x34] sm:$0xf]
  %v1234 = vld [vmem:[%s5 + $0x38] sm:$0xf]
  %v1235 = vld [vmem:[%s5 + $0x3c] sm:$0xf]
  %v1236 = vld [vmem:[%s5 + $0x40] sm:$0xf]
  %v1237 = vld [vmem:[%s5 + $0x44] sm:$0xf]
  %v1238 = vld [vmem:[%s5 + $0x48] sm:$0xf]
  %v1239 = vld [vmem:[%s5 + $0x4c] sm:$0xf]
  %v1240 = vld [vmem:[%s5 + $0x50] sm:$0xf]
  %v1241 = vld [vmem:[%s5 + $0x54] sm:$0xf]
  %v1242 = vld [vmem:[%s5 + $0x58] sm:$0xf]
  %v1243 = vld [vmem:[%s5 + $0x5c] sm:$0xf]
  %v1244 = vld [vmem:[%s5 + $0x60] sm:$0xf]
  %v1245 = vld [vmem:[%s5 + $0x64] sm:$0xf]
  %v1246 = vld [vmem:[%s5 + $0x68] sm:$0xf]
  %v1247 = vld [vmem:[%s5 + $0x6c] sm:$0xf]
  %v1248 = vld [vmem:[%s5 + $0x70] sm:$0xf]
  %v1249 = vld [vmem:[%s5 + $0x74] sm:$0xf]
  %v1250 = vld [vmem:[%s5 + $0x78] sm:$0xf]
  %v1251 = vld [vmem:[%s5 + $0x7c] sm:$0xf]
  %v1252 = vld [vmem:[%s5 + $0x80] sm:$0xf]
  %v1253 = vld [vmem:[%s5 + $0x84] sm:$0xf]
  %v1254 = vld [vmem:[%s5 + $0x88] sm:$0xf]
  %v1255 = vld [vmem:[%s5 + $0x8c] sm:$0xf]
  %v1256 = vld [vmem:[%s5 + $0x90] sm:$0xf]
  %v1257 = vld [vmem:[%s5 + $0x94] sm:$0xf]
  %v1258 = vld [vmem:[%s5 + $0x98] sm:$0xf]
  %v1259 = vld [vmem:[%s5 + $0x9c] sm:$0xf]
  %v1260 = vld [vmem:[%s5 + $0xa0] sm:$0xf]
  %v1261 = vld [vmem:[%s5 + $0xa4] sm:$0xf]
  %v1262 = vld [vmem:[%s5 + $0xa8] sm:$0xf]
  %v1263 = vld [vmem:[%s5 + $0xac] sm:$0xf]
  %v1264 = vld [vmem:[%s5 + $0xb0] sm:$0xf]
  %v1265 = vld [vmem:[%s5 + $0xb4] sm:$0xf]
  %v1266 = vld [vmem:[%s5 + $0xb8] sm:$0xf]
  %v1267 = vld [vmem:[%s5 + $0xbc] sm:$0xf]
  %v1268 = vld [vmem:[%s5 + $0xc0] sm:$0xf]
  %v1269 = vld [vmem:[%s5 + $0xc4] sm:$0xf]
  %v1270 = vld [vmem:[%s5 + $0xc8] sm:$0xf]
  %v1271 = vld [vmem:[%s5 + $0xcc] sm:$0xf]
  %v1272 = vld [vmem:[%s5 + $0xd0] sm:$0xf]
  %v1273 = vld [vmem:[%s5 + $0xd4] sm:$0xf]
  %v1274 = vld [vmem:[%s5 + $0xd8] sm:$0xf]
  %v1275 = vld [vmem:[%s5 + $0xdc] sm:$0xf]
  %v1276 = vld [vmem:[%s5 + $0xe0] sm:$0xf]
  %v1277 = vld [vmem:[%s5 + $0xe4] sm:$0xf]
  %v1278 = vld [vmem:[%s5 + $0xe8] sm:$0xf]
  %v1279 = vld [vmem:[%s5 + $0xec] sm:$0xf]
  %v1280 = vld [vmem:[%s5 + $0xf0] sm:$0xf]
  %v1281 = vld [vmem:[%s5 + $0xf4] sm:$0xf]
  %v1282 = vld [vmem:[%s5 + $0xf8] sm:$0xf]
  %v1283 = vld [vmem:[%s5 + $0xfc] sm:$0xf]
  %v1284 = vld [vmem:[%s5 + $0x100] sm:$0xf]
  %v1285 = vld [vmem:[%s5 + $0x104] sm:$0xf]
  %v1286 = vld [vmem:[%s5 + $0x108] sm:$0xf]
  %v1287 = vld [vmem:[%s5 + $0x10c] sm:$0xf]
  %v1288 = vld [vmem:[%s5 + $0x110] sm:$0xf]
  %v1289 = vld [vmem:[%s5 + $0x114] sm:$0xf]
  %v1290 = vld [vmem:[%s5 + $0x118] sm:$0xf]
  %v1291 = vld [vmem:[%s5 + $0x11c] sm:$0xf]
  %v1292 = vld [vmem:[%s5 + $0x120] sm:$0xf]
  %v1293 = vld [vmem:[%s5 + $0x124] sm:$0xf]
  %v1294 = vld [vmem:[%s5 + $0x128] sm:$0xf]
  %v1295 = vld [vmem:[%s5 + $0x12c] sm:$0xf]
  %v1296 = vld [vmem:[%s5 + $0x130] sm:$0xf]
  %v1297 = vld [vmem:[%s5 + $0x134] sm:$0xf]
  %v1298 = vld [vmem:[%s5 + $0x138] sm:$0xf]
  %v1299 = vld [vmem:[%s5 + $0x13c] sm:$0xf]
  %v1300 = vld [vmem:[%s5 + $0x140] sm:$0xf]
  %v1301 = vld [vmem:[%s5 + $0x144] sm:$0xf]
  %v1302 = vld [vmem:[%s5 + $0x148] sm:$0xf]
  %v1303 = vld [vmem:[%s5 + $0x14c] sm:$0xf]
  %v1304 = vld [vmem:[%s5 + $0x150] sm:$0xf]
  %v1305 = vld [vmem:[%s5 + $0x154] sm:$0xf]
  %v1306 = vld [vmem:[%s5 + $0x158] sm:$0xf]
  %v1307 = vld [vmem:[%s5 + $0x15c] sm:$0xf]
  %v1308 = vld [vmem:[%s5 + $0x160] sm:$0xf]
  %v1309 = vld [vmem:[%s5 + $0x164] sm:$0xf]
  %v1310 = vld [vmem:[%s5 + $0x168] sm:$0xf]
  %v1311 = vld [vmem:[%s5 + $0x16c] sm:$0xf]
  %v1312 = vld [vmem:[%s5 + $0x170] sm:$0xf]
  %v1313 = vld [vmem:[%s5 + $0x174] sm:$0xf]
  %v1314 = vld [vmem:[%s5 + $0x178] sm:$0xf]
  %v1315 = vld [vmem:[%s5 + $0x17c] sm:$0xf]
  %v1316 = vld [vmem:[%s5 + $0x180] sm:$0xf]
  %v1317 = vld [vmem:[%s5 + $0x184] sm:$0xf]
  %v1318 = vld [vmem:[%s5 + $0x188] sm:$0xf]
  %v1319 = vld [vmem:[%s5 + $0x18c] sm:$0xf]
  %v1320 = vld [vmem:[%s5 + $0x190] sm:$0xf]
  %v1321 = vld [vmem:[%s5 + $0x194] sm:$0xf]
  %v1322 = vld [vmem:[%s5 + $0x198] sm:$0xf]
  %v1323 = vld [vmem:[%s5 + $0x19c] sm:$0xf]
  %v1324 = vld [vmem:[%s5 + $0x1a0] sm:$0xf]
  %v1325 = vld [vmem:[%s5 + $0x1a4] sm:$0xf]
  %v1326 = vld [vmem:[%s5 + $0x1a8] sm:$0xf]
  %v1327 = vld [vmem:[%s5 + $0x1ac] sm:$0xf]
  %v1328 = vld [vmem:[%s5 + $0x1b0] sm:$0xf]
  %v1329 = vld [vmem:[%s5 + $0x1b4] sm:$0xf]
  %v1330 = vld [vmem:[%s5 + $0x1b8] sm:$0xf]
  %v1331 = vld [vmem:[%s5 + $0x1bc] sm:$0xf]
  %v1332 = vld [vmem:[%s5 + $0x1c0] sm:$0xf]
  %v1333 = vld [vmem:[%s5 + $0x1c4] sm:$0xf]
  %v1334 = vld [vmem:[%s5 + $0x1c8] sm:$0xf]
  %v1335 = vld [vmem:[%s5 + $0x1cc] sm:$0xf]
  %v1336 = vld [vmem:[%s5 + $0x1d0] sm:$0xf]
  %v1337 = vld [vmem:[%s5 + $0x1d4] sm:$0xf]
  %v1338 = vld [vmem:[%s5 + $0x1d8] sm:$0xf]
  %v1339 = vld [vmem:[%s5 + $0x1dc] sm:$0xf]
  %v1340 = vld [vmem:[%s5 + $0x1e0] sm:$0xf]
  %v1341 = vld [vmem:[%s5 + $0x1e4] sm:$0xf]
  %v1342 = vld [vmem:[%s5 + $0x1e8] sm:$0xf]
  %v1343 = vld [vmem:[%s5 + $0x1ec] sm:$0xf]
  %v1344 = vld [vmem:[%s5 + $0x1f0] sm:$0xf]
  %v1345 = vld [vmem:[%s5 + $0x1f4] sm:$0xf]
  %v1346 = vld [vmem:[%s5 + $0x1f8] sm:$0xf]
  %v1347 = vld [vmem:[%s5 + $0x1fc] sm:$0xf]
  %v1476 = vunpack.c.l.b16 %v1220
  %v1477 = vunpack.c.l.b16 %v1221
  %v1478 = vunpack.c.l.b16 %v1222
  %v1479 = vunpack.c.l.b16 %v1223
  %v1480 = vunpack.c.l.b16 %v1224
  %v1481 = vunpack.c.l.b16 %v1225
  %v1482 = vunpack.c.l.b16 %v1226
  %v1483 = vunpack.c.l.b16 %v1227
  %v1484 = vunpack.c.l.b16 %v1228
  %v1485 = vunpack.c.l.b16 %v1229
  %v1486 = vunpack.c.l.b16 %v1230
  %v1487 = vunpack.c.l.b16 %v1231
  %v1488 = vunpack.c.l.b16 %v1232
  %v1489 = vunpack.c.l.b16 %v1233
  %v1490 = vunpack.c.l.b16 %v1234
  %v1491 = vunpack.c.l.b16 %v1235
  %v1492 = vunpack.c.l.b16 %v1236
  %v1493 = vunpack.c.l.b16 %v1237
  %v1494 = vunpack.c.l.b16 %v1238
  %v1495 = vunpack.c.l.b16 %v1239
  %v1496 = vunpack.c.l.b16 %v1240
  %v1497 = vunpack.c.l.b16 %v1241
  %v1498 = vunpack.c.l.b16 %v1242
  %v1499 = vunpack.c.l.b16 %v1243
  %v1500 = vunpack.c.l.b16 %v1244
  %v1501 = vunpack.c.l.b16 %v1245
  %v1502 = vunpack.c.l.b16 %v1246
  %v1503 = vunpack.c.l.b16 %v1247
  %v1504 = vunpack.c.l.b16 %v1248
  %v1505 = vunpack.c.l.b16 %v1249
  %v1506 = vunpack.c.l.b16 %v1250
  %v1507 = vunpack.c.l.b16 %v1251
  %v1508 = vunpack.c.l.b16 %v1252
  %v1509 = vunpack.c.l.b16 %v1253
  %v1510 = vunpack.c.l.b16 %v1254
  %v1511 = vunpack.c.l.b16 %v1255
  %v1512 = vunpack.c.l.b16 %v1256
  %v1513 = vunpack.c.l.b16 %v1257
  %v1514 = vunpack.c.l.b16 %v1258
  %v1515 = vunpack.c.l.b16 %v1259
  %v1516 = vunpack.c.l.b16 %v1260
  %v1517 = vunpack.c.l.b16 %v1261
  %v1518 = vunpack.c.l.b16 %v1262
  %v1519 = vunpack.c.l.b16 %v1263
  %v1520 = vunpack.c.l.b16 %v1264
  %v1521 = vunpack.c.l.b16 %v1265
  %v1522 = vunpack.c.l.b16 %v1266
  %v1523 = vunpack.c.l.b16 %v1267
  %v1524 = vunpack.c.l.b16 %v1268
  %v1525 = vunpack.c.l.b16 %v1269
  %v1526 = vunpack.c.l.b16 %v1270
  %v1527 = vunpack.c.l.b16 %v1271
  %v1528 = vunpack.c.l.b16 %v1272
  %v1529 = vunpack.c.l.b16 %v1273
  %v1530 = vunpack.c.l.b16 %v1274
  %v1531 = vunpack.c.l.b16 %v1275
  %v1532 = vunpack.c.l.b16 %v1276
  %v1533 = vunpack.c.l.b16 %v1277
  %v1534 = vunpack.c.l.b16 %v1278
  %v1535 = vunpack.c.l.b16 %v1279
  %v1536 = vunpack.c.l.b16 %v1280
  %v1537 = vunpack.c.l.b16 %v1281
  %v1538 = vunpack.c.l.b16 %v1282
  %v1539 = vunpack.c.l.b16 %v1283
  %v1540 = vunpack.c.l.b16 %v1284
  %v1541 = vunpack.c.l.b16 %v1285
  %v1542 = vunpack.c.l.b16 %v1286
  %v1543 = vunpack.c.l.b16 %v1287
  %v1544 = vunpack.c.l.b16 %v1288
  %v1545 = vunpack.c.l.b16 %v1289
  %v1546 = vunpack.c.l.b16 %v1290
  %v1547 = vunpack.c.l.b16 %v1291
  %v1548 = vunpack.c.l.b16 %v1292
  %v1549 = vunpack.c.l.b16 %v1293
  %v1550 = vunpack.c.l.b16 %v1294
  %v1551 = vunpack.c.l.b16 %v1295
  %v1552 = vunpack.c.l.b16 %v1296
  %v1553 = vunpack.c.l.b16 %v1297
  %v1554 = vunpack.c.l.b16 %v1298
  %v1555 = vunpack.c.l.b16 %v1299
  %v1556 = vunpack.c.l.b16 %v1300
  %v1557 = vunpack.c.l.b16 %v1301
  %v1558 = vunpack.c.l.b16 %v1302
  %v1559 = vunpack.c.l.b16 %v1303
  %v1560 = vunpack.c.l.b16 %v1304
  %v1561 = vunpack.c.l.b16 %v1305
  %v1562 = vunpack.c.l.b16 %v1306
  %v1563 = vunpack.c.l.b16 %v1307
  %v1564 = vunpack.c.l.b16 %v1308
  %v1565 = vunpack.c.l.b16 %v1309
  %v1566 = vunpack.c.l.b16 %v1310
  %v1567 = vunpack.c.l.b16 %v1311
  %v1568 = vunpack.c.l.b16 %v1312
  %v1569 = vunpack.c.l.b16 %v1313
  %v1570 = vunpack.c.l.b16 %v1314
  %v1571 = vunpack.c.l.b16 %v1315
  %v1572 = vunpack.c.l.b16 %v1316
  %v1573 = vunpack.c.l.b16 %v1317
  %v1574 = vunpack.c.l.b16 %v1318
  %v1575 = vunpack.c.l.b16 %v1319
  %v1576 = vunpack.c.l.b16 %v1320
  %v1577 = vunpack.c.l.b16 %v1321
  %v1578 = vunpack.c.l.b16 %v1322
  %v1579 = vunpack.c.l.b16 %v1323
  %v1580 = vunpack.c.l.b16 %v1324
  %v1581 = vunpack.c.l.b16 %v1325
  %v1582 = vunpack.c.l.b16 %v1326
  %v1583 = vunpack.c.l.b16 %v1327
  %v1584 = vunpack.c.l.b16 %v1328
  %v1585 = vunpack.c.l.b16 %v1329
  %v1586 = vunpack.c.l.b16 %v1330
  %v1587 = vunpack.c.l.b16 %v1331
  %v1588 = vunpack.c.l.b16 %v1332
  %v1589 = vunpack.c.l.b16 %v1333
  %v1590 = vunpack.c.l.b16 %v1334
  %v1591 = vunpack.c.l.b16 %v1335
  %v1592 = vunpack.c.l.b16 %v1336
  %v1593 = vunpack.c.l.b16 %v1337
  %v1594 = vunpack.c.l.b16 %v1338
  %v1595 = vunpack.c.l.b16 %v1339
  %v1596 = vunpack.c.l.b16 %v1340
  %v1597 = vunpack.c.l.b16 %v1341
  %v1598 = vunpack.c.l.b16 %v1342
  %v1599 = vunpack.c.l.b16 %v1343
  %v1600 = vunpack.c.l.b16 %v1344
  %v1601 = vunpack.c.l.b16 %v1345
  %v1602 = vunpack.c.l.b16 %v1346
  %v1603 = vunpack.c.l.b16 %v1347
  %v1604 = vpack.c.b16 %v1477, %v1476
  %v1605 = vpack.c.b16 %v1479, %v1478
  %v1606 = vpack.c.b16 %v1481, %v1480
  %v1607 = vpack.c.b16 %v1483, %v1482
  %v1608 = vpack.c.b16 %v1485, %v1484
  %v1609 = vpack.c.b16 %v1487, %v1486
  %v1610 = vpack.c.b16 %v1489, %v1488
  %v1611 = vpack.c.b16 %v1491, %v1490
  %v1612 = vpack.c.b16 %v1493, %v1492
  %v1613 = vpack.c.b16 %v1495, %v1494
  %v1614 = vpack.c.b16 %v1497, %v1496
  %v1615 = vpack.c.b16 %v1499, %v1498
  %v1616 = vpack.c.b16 %v1501, %v1500
  %v1617 = vpack.c.b16 %v1503, %v1502
  %v1618 = vpack.c.b16 %v1505, %v1504
  %v1619 = vpack.c.b16 %v1507, %v1506
  %v1620 = vpack.c.b16 %v1509, %v1508
  %v1621 = vpack.c.b16 %v1511, %v1510
  %v1622 = vpack.c.b16 %v1513, %v1512
  %v1623 = vpack.c.b16 %v1515, %v1514
  %v1624 = vpack.c.b16 %v1517, %v1516
  %v1625 = vpack.c.b16 %v1519, %v1518
  %v1626 = vpack.c.b16 %v1521, %v1520
  %v1627 = vpack.c.b16 %v1523, %v1522
  %v1628 = vpack.c.b16 %v1525, %v1524
  %v1629 = vpack.c.b16 %v1527, %v1526
  %v1630 = vpack.c.b16 %v1529, %v1528
  %v1631 = vpack.c.b16 %v1531, %v1530
  %v1632 = vpack.c.b16 %v1533, %v1532
  %v1633 = vpack.c.b16 %v1535, %v1534
  %v1634 = vpack.c.b16 %v1537, %v1536
  %v1635 = vpack.c.b16 %v1539, %v1538
  %v1636 = vpack.c.b16 %v1541, %v1540
  %v1637 = vpack.c.b16 %v1543, %v1542
  %v1638 = vpack.c.b16 %v1545, %v1544
  %v1639 = vpack.c.b16 %v1547, %v1546
  %v1640 = vpack.c.b16 %v1549, %v1548
  %v1641 = vpack.c.b16 %v1551, %v1550
  %v1642 = vpack.c.b16 %v1553, %v1552
  %v1643 = vpack.c.b16 %v1555, %v1554
  %v1644 = vpack.c.b16 %v1557, %v1556
  %v1645 = vpack.c.b16 %v1559, %v1558
  %v1646 = vpack.c.b16 %v1561, %v1560
  %v1647 = vpack.c.b16 %v1563, %v1562
  %v1648 = vpack.c.b16 %v1565, %v1564
  %v1649 = vpack.c.b16 %v1567, %v1566
  %v1650 = vpack.c.b16 %v1569, %v1568
  %v1651 = vpack.c.b16 %v1571, %v1570
  %v1652 = vpack.c.b16 %v1573, %v1572
  %v1653 = vpack.c.b16 %v1575, %v1574
  %v1654 = vpack.c.b16 %v1577, %v1576
  %v1655 = vpack.c.b16 %v1579, %v1578
  %v1656 = vpack.c.b16 %v1581, %v1580
  %v1657 = vpack.c.b16 %v1583, %v1582
  %v1658 = vpack.c.b16 %v1585, %v1584
  %v1659 = vpack.c.b16 %v1587, %v1586
  %v1660 = vpack.c.b16 %v1589, %v1588
  %v1661 = vpack.c.b16 %v1591, %v1590
  %v1662 = vpack.c.b16 %v1593, %v1592
  %v1663 = vpack.c.b16 %v1595, %v1594
  %v1664 = vpack.c.b16 %v1597, %v1596
  %v1665 = vpack.c.b16 %v1599, %v1598
  %v1666 = vpack.c.b16 %v1601, %v1600
  %v1667 = vpack.c.b16 %v1603, %v1602
  %1732 = vmatprep.subr.bf16.mxu0 0
  %1733 = vmatpush1.bf16.msra.mxu0 %v1604
  %1734 = vmatprep.subr.bf16.mxu0 0
  %1735 = vmatpush1.bf16.msra.mxu0 %v1605
  %1736 = vmatprep.subr.bf16.mxu0 0
  %1737 = vmatpush1.bf16.msra.mxu0 %v1606
  %1738 = vmatprep.subr.bf16.mxu0 0
  %1739 = vmatpush1.bf16.msra.mxu0 %v1607
  %1740 = vmatprep.subr.bf16.mxu0 0
  %1741 = vmatpush1.bf16.msra.mxu0 %v1608
  %1742 = vmatprep.subr.bf16.mxu0 0
  %1743 = vmatpush1.bf16.msra.mxu0 %v1609
  %1744 = vmatprep.subr.bf16.mxu0 0
  %1745 = vmatpush1.bf16.msra.mxu0 %v1610
  %1746 = vmatprep.subr.bf16.mxu0 0
  %1747 = vmatpush1.bf16.msra.mxu0 %v1611
  %1748 = vmatprep.subr.bf16.mxu0 0
  %1749 = vmatpush1.bf16.msra.mxu0 %v1612
  %1750 = vmatprep.subr.bf16.mxu0 0
  %1751 = vmatpush1.bf16.msra.mxu0 %v1613
  %1752 = vmatprep.subr.bf16.mxu0 0
  %1753 = vmatpush1.bf16.msra.mxu0 %v1614
  %1754 = vmatprep.subr.bf16.mxu0 0
  %1755 = vmatpush1.bf16.msra.mxu0 %v1615
  %1756 = vmatprep.subr.bf16.mxu0 0
  %1757 = vmatpush1.bf16.msra.mxu0 %v1616
  %1758 = vmatprep.subr.bf16.mxu0 0
  %1759 = vmatpush1.bf16.msra.mxu0 %v1617
  %1760 = vmatprep.subr.bf16.mxu0 0
  %1761 = vmatpush1.bf16.msra.mxu0 %v1618
  %1762 = vmatprep.subr.bf16.mxu0 0
  %1763 = vmatpush1.bf16.msra.mxu0 %v1619
  %1764 = vmatprep.mubr.bf16.mxu0 %v1213
  %1765 = vmatmul.mubr.bf16.gmra.mrb[0].mxu0 %v1212
  %v1766 = vpop.f32.mrb[0].mxu0
  %v1767 = vadd.f32 0.0, %v1766
  %v1768 = vpop.f32.mrb[0].mxu0
  %v1769 = vpop.f32.mrb[0].mxu0
  %v1770 = vpop.f32.mrb[0].mxu0
  %1771 = vdwg.mxu0
  %1772 = vmatprep.subr.bf16.mxu0 0
  %1773 = vmatpush1.bf16.msra.mxu0 %v1620
  %1774 = vmatprep.subr.bf16.mxu0 0
  %1775 = vmatpush1.bf16.msra.mxu0 %v1621
  %1776 = vmatprep.subr.bf16.mxu0 0
  %1777 = vmatpush1.bf16.msra.mxu0 %v1622
  %1778 = vmatprep.subr.bf16.mxu0 0
  %1779 = vmatpush1.bf16.msra.mxu0 %v1623
  %1780 = vmatprep.subr.bf16.mxu0 0
  %1781 = vmatpush1.bf16.msra.mxu0 %v1624
  %1782 = vmatprep.subr.bf16.mxu0 0
  %1783 = vmatpush1.bf16.msra.mxu0 %v1625
  %1784 = vmatprep.subr.bf16.mxu0 0
  %1785 = vmatpush1.bf16.msra.mxu0 %v1626
  %1786 = vmatprep.subr.bf16.mxu0 0
  %1787 = vmatpush1.bf16.msra.mxu0 %v1627
  %1788 = vmatprep.subr.bf16.mxu0 0
  %1789 = vmatpush1.bf16.msra.mxu0 %v1628
  %1790 = vmatprep.subr.bf16.mxu0 0
  %1791 = vmatpush1.bf16.msra.mxu0 %v1629
  %1792 = vmatprep.subr.bf16.mxu0 0
  %1793 = vmatpush1.bf16.msra.mxu0 %v1630
  %1794 = vmatprep.subr.bf16.mxu0 0
  %1795 = vmatpush1.bf16.msra.mxu0 %v1631
  %1796 = vmatprep.subr.bf16.mxu0 0
  %1797 = vmatpush1.bf16.msra.mxu0 %v1632
  %1798 = vmatprep.subr.bf16.mxu0 0
  %1799 = vmatpush1.bf16.msra.mxu0 %v1633
  %1800 = vmatprep.subr.bf16.mxu0 0
  %1801 = vmatpush1.bf16.msra.mxu0 %v1634
  %1802 = vmatprep.subr.bf16.mxu0 0
  %1803 = vmatpush1.bf16.msra.mxu0 %v1635
  %1804 = vmatprep.mubr.bf16.mxu0 %v1215
  %1805 = vmatmul.mubr.bf16.gmra.mrb[0].mxu0 %v1214
  %v1806 = vpop.f32.mrb[0].mxu0
  %v1807 = vadd.f32 %v1767, %v1806
  %v1808 = vpop.f32.mrb[0].mxu0
  %v1809 = vpop.f32.mrb[0].mxu0
  %v1810 = vpop.f32.mrb[0].mxu0
  %1811 = vdwg.mxu0
  %1812 = vmatprep.subr.bf16.mxu0 0
  %1813 = vmatpush1.bf16.msra.mxu0 %v1636
  %1814 = vmatprep.subr.bf16.mxu0 0
  %1815 = vmatpush1.bf16.msra.mxu0 %v1637
  %1816 = vmatprep.subr.bf16.mxu0 0
  %1817 = vmatpush1.bf16.msra.mxu0 %v1638
  %1818 = vmatprep.subr.bf16.mxu0 0
  %1819 = vmatpush1.bf16.msra.mxu0 %v1639
  %1820 = vmatprep.subr.bf16.mxu0 0
  %1821 = vmatpush1.bf16.msra.mxu0 %v1640
  %1822 = vmatprep.subr.bf16.mxu0 0
  %1823 = vmatpush1.bf16.msra.mxu0 %v1641
  %1824 = vmatprep.subr.bf16.mxu0 0
  %1825 = vmatpush1.bf16.msra.mxu0 %v1642
  %1826 = vmatprep.subr.bf16.mxu0 0
  %1827 = vmatpush1.bf16.msra.mxu0 %v1643
  %1828 = vmatprep.subr.bf16.mxu0 0
  %1829 = vmatpush1.bf16.msra.mxu0 %v1644
  %1830 = vmatprep.subr.bf16.mxu0 0
  %1831 = vmatpush1.bf16.msra.mxu0 %v1645
  %1832 = vmatprep.subr.bf16.mxu0 0
  %1833 = vmatpush1.bf16.msra.mxu0 %v1646
  %1834 = vmatprep.subr.bf16.mxu0 0
  %1835 = vmatpush1.bf16.msra.mxu0 %v1647
  %1836 = vmatprep.subr.bf16.mxu0 0
  %1837 = vmatpush1.bf16.msra.mxu0 %v1648
  %1838 = vmatprep.subr.bf16.mxu0 0
  %1839 = vmatpush1.bf16.msra.mxu0 %v1649
  %1840 = vmatprep.subr.bf16.mxu0 0
  %1841 = vmatpush1.bf16.msra.mxu0 %v1650
  %1842 = vmatprep.subr.bf16.mxu0 0
  %1843 = vmatpush1.bf16.msra.mxu0 %v1651
  %1844 = vmatprep.mubr.bf16.mxu0 %v1217
  %1845 = vmatmul.mubr.bf16.gmra.mrb[0].mxu0 %v1216
  %v1846 = vpop.f32.mrb[0].mxu0
  %v1847 = vadd.f32 %v1807, %v1846
  %v1848 = vpop.f32.mrb[0].mxu0
  %v1849 = vpop.f32.mrb[0].mxu0
  %v1850 = vpop.f32.mrb[0].mxu0
  %1851 = vdwg.mxu0
  %1852 = vmatprep.subr.bf16.mxu0 0
  %1853 = vmatpush1.bf16.msra.mxu0 %v1652
  %1854 = vmatprep.subr.bf16.mxu0 0
  %1855 = vmatpush1.bf16.msra.mxu0 %v1653
  %1856 = vmatprep.subr.bf16.mxu0 0
  %1857 = vmatpush1.bf16.msra.mxu0 %v1654
  %1858 = vmatprep.subr.bf16.mxu0 0
  %1859 = vmatpush1.bf16.msra.mxu0 %v1655
  %1860 = vmatprep.subr.bf16.mxu0 0
  %1861 = vmatpush1.bf16.msra.mxu0 %v1656
  %1862 = vmatprep.subr.bf16.mxu0 0
  %1863 = vmatpush1.bf16.msra.mxu0 %v1657
  %1864 = vmatprep.subr.bf16.mxu0 0
  %1865 = vmatpush1.bf16.msra.mxu0 %v1658
  %1866 = vmatprep.subr.bf16.mxu0 0
  %1867 = vmatpush1.bf16.msra.mxu0 %v1659
  %1868 = vmatprep.subr.bf16.mxu0 0
  %1869 = vmatpush1.bf16.msra.mxu0 %v1660
  %1870 = vmatprep.subr.bf16.mxu0 0
  %1871 = vmatpush1.bf16.msra.mxu0 %v1661
  %1872 = vmatprep.subr.bf16.mxu0 0
  %1873 = vmatpush1.bf16.msra.mxu0 %v1662
  %1874 = vmatprep.subr.bf16.mxu0 0
  %1875 = vmatpush1.bf16.msra.mxu0 %v1663
  %1876 = vmatprep.subr.bf16.mxu0 0
  %1877 = vmatpush1.bf16.msra.mxu0 %v1664
  %1878 = vmatprep.subr.bf16.mxu0 0
  %1879 = vmatpush1.bf16.msra.mxu0 %v1665
  %1880 = vmatprep.subr.bf16.mxu0 0
  %1881 = vmatpush1.bf16.msra.mxu0 %v1666
  %1882 = vmatprep.subr.bf16.mxu0 0
  %1883 = vmatpush1.bf16.msra.mxu0 %v1667
  %1884 = vmatprep.mubr.bf16.mxu0 %v1219
  %1885 = vmatmul.mubr.bf16.gmra.mrb[0].mxu0 %v1218
  %v1886 = vpop.f32.mrb[0].mxu0
  %v1887 = vadd.f32 %v1847, %v1886
  %v1888 = vpop.f32.mrb[0].mxu0
  %v1889 = vpop.f32.mrb[0].mxu0
  %v1890 = vpop.f32.mrb[0].mxu0
  %1891 = vdwg.mxu0
  %v1892 = vadd.f32 %v893, %v780
  %v1893 = vadd.f32 %v1892, %v1887
  %v1895 = vrot.slane %v1887, 2
  %1896 = vrot.lane.b32.xlu0 %v1895, 96
  %v1897 = vpop.permute.xlu0 %1896
  %v1899 = vadd.f32 %v893, %v1897
  %v1900 = vadd.f32 %v1899, %v1049
  %v1901 = vadd.f32 %v1042, %v1193
  %1902 = vrot.lane.b32.xlu0 %v1887, 64
  %v1903 = vpop.permute.xlu0 %1902
  %v1905 = vadd.f32 %v1901, %v1903
  %1906 = vrot.lane.b32.xlu0 %v1895, 32
  %v1907 = vpop.permute.xlu0 %1906
  %v1909 = vadd.f32 %v1905, %v1907
  %v1910 = vadd.f32 %v889, %v1909
  %v1911 = vxor.u32 %v1910, 2147483648
  %v1912 = vmul.f32 %v1911, 1.442695
  %v1913 = vpow.pop %v1912
  %v1914 = vadd.f32 %v1913, 1.0
  %v1915 = vrcp.pop %v1914
  %v1916 = vmul.f32 1.0, %v1915
  %v1917 = vsub.f32 %v1893, %v1900
  %v1918 = vmul.f32 %v1916, %v1917
  %v1919 = vadd.f32 %v1900, %v1918
  %v1921 = vrot.slane %v1919, 6
  %vm1923 = vcmask 1041408
  %v1924 = vsel %vm1923, %v1893, %v1921
  %v1925 = vpack.c.bf16 %v1924, %v1924
  %v1926 = vld [vmem:[%s12] sm:$0xff]
  %v1927 = vld [vmem:[%s12 + $0x8] sm:$0xff]
  %v1928 = vld [vmem:[%s12 + $0x10] sm:$0xff]
  %v1929 = vld [vmem:[%s12 + $0x18] sm:$0xff]
  %v1930 = vld [vmem:[%s12 + $0x20] sm:$0xff]
  %v1931 = vld [vmem:[%s12 + $0x28] sm:$0xff]
  %v1932 = vld [vmem:[%s12 + $0x30] sm:$0xff]
  %v1933 = vld [vmem:[%s12 + $0x38] sm:$0xff]
  %v1934 = vld [vmem:[%s12 + $0x40] sm:$0xff]
  %v1935 = vld [vmem:[%s12 + $0x48] sm:$0xff]
  %v1936 = vld [vmem:[%s12 + $0x50] sm:$0xff]
  %v1937 = vld [vmem:[%s12 + $0x58] sm:$0xff]
  %v1938 = vld [vmem:[%s12 + $0x60] sm:$0xff]
  %v1939 = vld [vmem:[%s12 + $0x68] sm:$0xff]
  %v1940 = vld [vmem:[%s12 + $0x70] sm:$0xff]
  %v1941 = vld [vmem:[%s12 + $0x78] sm:$0xff]
  %v1942 = vld [vmem:[%s13] sm:$0xff]
  %v1944 = vlaneseq
  %v1945 = vshrl.u32 %v1944, 7
  %v1946 = vsub.s32 0, %v1945
  %v1947 = vrot.slane %v1942, %v1946
  %v1948 = vlaneseq
  %v1949 = vshrl.u32 %v1948, 7
  %v1950 = vsub.s32 1, %v1949
  %v1951 = vrot.slane %v1942, %v1950
  %v1952 = vlaneseq
  %v1953 = vshrl.u32 %v1952, 7
  %v1954 = vsub.s32 2, %v1953
  %v1955 = vrot.slane %v1942, %v1954
  %v1956 = vlaneseq
  %v1957 = vshrl.u32 %v1956, 7
  %v1958 = vsub.s32 3, %v1957
  %v1959 = vrot.slane %v1942, %v1958
  %v1960 = vlaneseq
  %v1961 = vshrl.u32 %v1960, 7
  %v1962 = vsub.s32 4, %v1961
  %v1963 = vrot.slane %v1942, %v1962
  %v1964 = vlaneseq
  %v1965 = vshrl.u32 %v1964, 7
  %v1966 = vsub.s32 5, %v1965
  %v1967 = vrot.slane %v1942, %v1966
  %v1968 = vlaneseq
  %v1969 = vshrl.u32 %v1968, 7
  %v1970 = vsub.s32 6, %v1969
  %v1971 = vrot.slane %v1942, %v1970
  %v1972 = vlaneseq
  %v1973 = vshrl.u32 %v1972, 7
  %v1974 = vsub.s32 7, %v1973
  %v1975 = vrot.slane %v1942, %v1974
  %v2000 = vunpack.c.l.b16 %v1926
  %v2001 = vunpack.c.h.b16 %v1926
  %v2002 = vunpack.c.l.b16 %v1927
  %v2003 = vunpack.c.h.b16 %v1927
  %v2004 = vunpack.c.l.b16 %v1928
  %v2005 = vunpack.c.h.b16 %v1928
  %v2006 = vunpack.c.l.b16 %v1929
  %v2007 = vunpack.c.h.b16 %v1929
  %v2008 = vunpack.c.l.b16 %v1930
  %v2009 = vunpack.c.h.b16 %v1930
  %v2010 = vunpack.c.l.b16 %v1931
  %v2011 = vunpack.c.h.b16 %v1931
  %v2012 = vunpack.c.l.b16 %v1932
  %v2013 = vunpack.c.h.b16 %v1932
  %v2014 = vunpack.c.l.b16 %v1933
  %v2015 = vunpack.c.h.b16 %v1933
  %v2016 = vunpack.c.l.b16 %v1934
  %v2017 = vunpack.c.h.b16 %v1934
  %v2018 = vunpack.c.l.b16 %v1935
  %v2019 = vunpack.c.h.b16 %v1935
  %v2020 = vunpack.c.l.b16 %v1936
  %v2021 = vunpack.c.h.b16 %v1936
  %v2022 = vunpack.c.l.b16 %v1937
  %v2023 = vunpack.c.h.b16 %v1937
  %v2024 = vunpack.c.l.b16 %v1938
  %v2025 = vunpack.c.h.b16 %v1938
  %v2026 = vunpack.c.l.b16 %v1939
  %v2027 = vunpack.c.h.b16 %v1939
  %v2028 = vunpack.c.l.b16 %v1940
  %v2029 = vunpack.c.h.b16 %v1940
  %v2030 = vunpack.c.l.b16 %v1941
  %v2031 = vunpack.c.h.b16 %v1941
  %v2032 = vpack.c.b16 %v2008, %v2000
  %v2033 = vpack.c.b16 %v2009, %v2001
  %v2034 = vpack.c.b16 %v2010, %v2002
  %v2035 = vpack.c.b16 %v2011, %v2003
  %v2036 = vpack.c.b16 %v2012, %v2004
  %v2037 = vpack.c.b16 %v2013, %v2005
  %v2038 = vpack.c.b16 %v2014, %v2006
  %v2039 = vpack.c.b16 %v2015, %v2007
  %v2040 = vpack.c.b16 %v2024, %v2016
  %v2041 = vpack.c.b16 %v2025, %v2017
  %v2042 = vpack.c.b16 %v2026, %v2018
  %v2043 = vpack.c.b16 %v2027, %v2019
  %v2044 = vpack.c.b16 %v2028, %v2020
  %v2045 = vpack.c.b16 %v2029, %v2021
  %v2046 = vpack.c.b16 %v2030, %v2022
  %v2047 = vpack.c.b16 %v2031, %v2023
  %v2065 = vsel %vm787, %v1925, 0
  %2067 = vmatprep.subr.bf16.mxu0 %v2033
  %2068 = vmatpush1.bf16.msra.mxu0 %v2032
  %2069 = vmatprep.subr.bf16.mxu0 %v2041
  %2070 = vmatpush1.bf16.msra.mxu0 %v2040
  %2071 = vmatprep.subr.bf16.mxu0 0
  %2072 = vmatpush1.bf16.msra.mxu0 0
  %2073 = vmatprep.subr.bf16.mxu0 0
  %2074 = vmatpush1.bf16.msra.mxu0 0
  %2075 = vmatprep.subr.bf16.mxu0 0
  %2076 = vmatpush1.bf16.msra.mxu0 0
  %2077 = vmatprep.subr.bf16.mxu0 0
  %2078 = vmatpush1.bf16.msra.mxu0 0
  %2079 = vmatprep.subr.bf16.mxu0 0
  %2080 = vmatpush1.bf16.msra.mxu0 0
  %2081 = vmatprep.subr.bf16.mxu0 0
  %2082 = vmatpush1.bf16.msra.mxu0 0
  %2083 = vmatprep.subr.bf16.mxu0 0
  %2084 = vmatpush1.bf16.msra.mxu0 0
  %2085 = vmatprep.subr.bf16.mxu0 0
  %2086 = vmatpush1.bf16.msra.mxu0 0
  %2087 = vmatprep.subr.bf16.mxu0 0
  %2088 = vmatpush1.bf16.msra.mxu0 0
  %2089 = vmatprep.subr.bf16.mxu0 0
  %2090 = vmatpush1.bf16.msra.mxu0 0
  %2091 = vmatprep.subr.bf16.mxu0 0
  %2092 = vmatpush1.bf16.msra.mxu0 0
  %2093 = vmatprep.subr.bf16.mxu0 0
  %2094 = vmatpush1.bf16.msra.mxu0 0
  %2095 = vmatprep.subr.bf16.mxu0 0
  %2096 = vmatpush1.bf16.msra.mxu0 0
  %2097 = vmatprep.subr.bf16.mxu0 0
  %2098 = vmatpush1.bf16.msra.mxu0 0
  %2099 = vmatprep.mubr.bf16.mxu0 0
  %2100 = vmatmul.mubr.bf16.gmra.mrb[0].mxu0 %v2065
  %v2101 = vpop.f32.mrb[0].mxu0
  %v2102 = vadd.f32 %v1947, %v2101
  %v2103 = vpop.f32.mrb[0].mxu0
  %v2104 = vadd.f32 %v1951, %v2103
  %v2105 = vpop.f32.mrb[0].mxu0
  %v2106 = vpop.f32.mrb[0].mxu0
  %2107 = vdwg.mxu0
  %2108 = vmatprep.subr.bf16.mxu0 %v2035
  %2109 = vmatpush1.bf16.msra.mxu0 %v2034
  %2110 = vmatprep.subr.bf16.mxu0 %v2043
  %2111 = vmatpush1.bf16.msra.mxu0 %v2042
  %2112 = vmatprep.subr.bf16.mxu0 0
  %2113 = vmatpush1.bf16.msra.mxu0 0
  %2114 = vmatprep.subr.bf16.mxu0 0
  %2115 = vmatpush1.bf16.msra.mxu0 0
  %2116 = vmatprep.subr.bf16.mxu0 0
  %2117 = vmatpush1.bf16.msra.mxu0 0
  %2118 = vmatprep.subr.bf16.mxu0 0
  %2119 = vmatpush1.bf16.msra.mxu0 0
  %2120 = vmatprep.subr.bf16.mxu0 0
  %2121 = vmatpush1.bf16.msra.mxu0 0
  %2122 = vmatprep.subr.bf16.mxu0 0
  %2123 = vmatpush1.bf16.msra.mxu0 0
  %2124 = vmatprep.subr.bf16.mxu0 0
  %2125 = vmatpush1.bf16.msra.mxu0 0
  %2126 = vmatprep.subr.bf16.mxu0 0
  %2127 = vmatpush1.bf16.msra.mxu0 0
  %2128 = vmatprep.subr.bf16.mxu0 0
  %2129 = vmatpush1.bf16.msra.mxu0 0
  %2130 = vmatprep.subr.bf16.mxu0 0
  %2131 = vmatpush1.bf16.msra.mxu0 0
  %2132 = vmatprep.subr.bf16.mxu0 0
  %2133 = vmatpush1.bf16.msra.mxu0 0
  %2134 = vmatprep.subr.bf16.mxu0 0
  %2135 = vmatpush1.bf16.msra.mxu0 0
  %2136 = vmatprep.subr.bf16.mxu0 0
  %2137 = vmatpush1.bf16.msra.mxu0 0
  %2138 = vmatprep.subr.bf16.mxu0 0
  %2139 = vmatpush1.bf16.msra.mxu0 0
  %2140 = vmatprep.mubr.bf16.mxu0 0
  %2141 = vmatmul.mubr.bf16.gmra.mrb[0].mxu0 %v2065
  %v2142 = vpop.f32.mrb[0].mxu0
  %v2143 = vadd.f32 %v1955, %v2142
  %v2144 = vpop.f32.mrb[0].mxu0
  %v2145 = vadd.f32 %v1959, %v2144
  %v2146 = vpop.f32.mrb[0].mxu0
  %v2147 = vpop.f32.mrb[0].mxu0
  %2148 = vdwg.mxu0
  %2149 = vmatprep.subr.bf16.mxu0 %v2037
  %2150 = vmatpush1.bf16.msra.mxu0 %v2036
  %2151 = vmatprep.subr.bf16.mxu0 %v2045
  %2152 = vmatpush1.bf16.msra.mxu0 %v2044
  %2153 = vmatprep.subr.bf16.mxu0 0
  %2154 = vmatpush1.bf16.msra.mxu0 0
  %2155 = vmatprep.subr.bf16.mxu0 0
  %2156 = vmatpush1.bf16.msra.mxu0 0
  %2157 = vmatprep.subr.bf16.mxu0 0
  %2158 = vmatpush1.bf16.msra.mxu0 0
  %2159 = vmatprep.subr.bf16.mxu0 0
  %2160 = vmatpush1.bf16.msra.mxu0 0
  %2161 = vmatprep.subr.bf16.mxu0 0
  %2162 = vmatpush1.bf16.msra.mxu0 0
  %2163 = vmatprep.subr.bf16.mxu0 0
  %2164 = vmatpush1.bf16.msra.mxu0 0
  %2165 = vmatprep.subr.bf16.mxu0 0
  %2166 = vmatpush1.bf16.msra.mxu0 0
  %2167 = vmatprep.subr.bf16.mxu0 0
  %2168 = vmatpush1.bf16.msra.mxu0 0
  %2169 = vmatprep.subr.bf16.mxu0 0
  %2170 = vmatpush1.bf16.msra.mxu0 0
  %2171 = vmatprep.subr.bf16.mxu0 0
  %2172 = vmatpush1.bf16.msra.mxu0 0
  %2173 = vmatprep.subr.bf16.mxu0 0
  %2174 = vmatpush1.bf16.msra.mxu0 0
  %2175 = vmatprep.subr.bf16.mxu0 0
  %2176 = vmatpush1.bf16.msra.mxu0 0
  %2177 = vmatprep.subr.bf16.mxu0 0
  %2178 = vmatpush1.bf16.msra.mxu0 0
  %2179 = vmatprep.subr.bf16.mxu0 0
  %2180 = vmatpush1.bf16.msra.mxu0 0
  %2181 = vmatprep.mubr.bf16.mxu0 0
  %2182 = vmatmul.mubr.bf16.gmra.mrb[0].mxu0 %v2065
  %v2183 = vpop.f32.mrb[0].mxu0
  %v2184 = vadd.f32 %v1963, %v2183
  %v2185 = vpop.f32.mrb[0].mxu0
  %v2186 = vadd.f32 %v1967, %v2185
  %v2187 = vpop.f32.mrb[0].mxu0
  %v2188 = vpop.f32.mrb[0].mxu0
  %2189 = vdwg.mxu0
  %2190 = vmatprep.subr.bf16.mxu0 %v2039
  %2191 = vmatpush1.bf16.msra.mxu0 %v2038
  %2192 = vmatprep.subr.bf16.mxu0 %v2047
  %2193 = vmatpush1.bf16.msra.mxu0 %v2046
  %2194 = vmatprep.subr.bf16.mxu0 0
  %2195 = vmatpush1.bf16.msra.mxu0 0
  %2196 = vmatprep.subr.bf16.mxu0 0
  %2197 = vmatpush1.bf16.msra.mxu0 0
  %2198 = vmatprep.subr.bf16.mxu0 0
  %2199 = vmatpush1.bf16.msra.mxu0 0
  %2200 = vmatprep.subr.bf16.mxu0 0
  %2201 = vmatpush1.bf16.msra.mxu0 0
  %2202 = vmatprep.subr.bf16.mxu0 0
  %2203 = vmatpush1.bf16.msra.mxu0 0
  %2204 = vmatprep.subr.bf16.mxu0 0
  %2205 = vmatpush1.bf16.msra.mxu0 0
  %2206 = vmatprep.subr.bf16.mxu0 0
  %2207 = vmatpush1.bf16.msra.mxu0 0
  %2208 = vmatprep.subr.bf16.mxu0 0
  %2209 = vmatpush1.bf16.msra.mxu0 0
  %2210 = vmatprep.subr.bf16.mxu0 0
  %2211 = vmatpush1.bf16.msra.mxu0 0
  %2212 = vmatprep.subr.bf16.mxu0 0
  %2213 = vmatpush1.bf16.msra.mxu0 0
  %2214 = vmatprep.subr.bf16.mxu0 0
  %2215 = vmatpush1.bf16.msra.mxu0 0
  %2216 = vmatprep.subr.bf16.mxu0 0
  %2217 = vmatpush1.bf16.msra.mxu0 0
  %2218 = vmatprep.subr.bf16.mxu0 0
  %2219 = vmatpush1.bf16.msra.mxu0 0
  %2220 = vmatprep.subr.bf16.mxu0 0
  %2221 = vmatpush1.bf16.msra.mxu0 0
  %2222 = vmatprep.mubr.bf16.mxu0 0
  %2223 = vmatmul.mubr.bf16.gmra.mrb[0].mxu0 %v2065
  %v2224 = vpop.f32.mrb[0].mxu0
  %v2225 = vadd.f32 %v1971, %v2224
  %v2226 = vpop.f32.mrb[0].mxu0
  %v2227 = vadd.f32 %v1975, %v2226
  %v2228 = vpop.f32.mrb[0].mxu0
  %v2229 = vpop.f32.mrb[0].mxu0
  %2230 = vdwg.mxu0
  %v2231 = vtanh.pop %v2102
  %v2232 = vtanh.pop %v2104
  %v2233 = vtanh.pop %v2143
  %v2234 = vtanh.pop %v2145
  %v2235 = vtanh.pop %v2184
  %v2236 = vtanh.pop %v2186
  %v2237 = vtanh.pop %v2225
  %v2238 = vtanh.pop %v2227
  %v2247 = vcombine.low %v2231, %v2232
  %v2248 = vcombine.low %v2233, %v2234
  %v2250 = vunpack.c.l.s4 1983009808
  %v2251 = vunpack.c.0.s8 %v2250
  %v2252 = vlaneseq
  %v2253 = vshrl.u32 %v2252, 7
  %v2254 = vsub.s32 %v2251, %v2253
  %v2255 = vrot.slane %v2247, %v2254
  %v2257 = vunpack.c.l.s4 1983009808
  %v2258 = vunpack.c.0.s8 %v2257
  %v2259 = vlaneseq
  %v2260 = vshrl.u32 %v2259, 7
  %v2261 = vsub.s32 %v2258, %v2260
  %v2262 = vrot.slane %v2248, %v2261
  %v2263 = vcombine.low %v2255, %v2262
  %v2264 = vcombine.low %v2235, %v2236
  %v2265 = vcombine.low %v2237, %v2238
  %v2267 = vunpack.c.l.s4 1983009808
  %v2268 = vunpack.c.0.s8 %v2267
  %v2269 = vlaneseq
  %v2270 = vshrl.u32 %v2269, 7
  %v2271 = vsub.s32 %v2268, %v2270
  %v2272 = vrot.slane %v2264, %v2271
  %v2274 = vunpack.c.l.s4 1983009808
  %v2275 = vunpack.c.0.s8 %v2274
  %v2276 = vlaneseq
  %v2277 = vshrl.u32 %v2276, 7
  %v2278 = vsub.s32 %v2275, %v2277
  %v2279 = vrot.slane %v2265, %v2278
  %v2280 = vcombine.low %v2272, %v2279
  %2283 = vst [vmem:[%s15] sm:$0xff] %v2263
  %2284 = vst [vmem:[%s15 + $0x8] sm:$0xff] %v2280
  %v2285 = vcombine.high %v2255, %v2262
  %v2286 = vcombine.high %v2272, %v2279
  %2289 = vst [vmem:[%s14] sm:$0xff] %v2285
  %2290 = vst [vmem:[%s14 + $0x8] sm:$0xff] %v2286
  %vm2291 = vcmask 254976
  %2292 = vst.msk [vmem:[%s16] sm:$0x3] %vm2291, %v1900
  %2293 = vst.msk [vmem:[%s17] sm:$0x3] %vm2291, %v1893
  %v2294 = vpack.c.bf16 %v2231, %v2231
  %v2295 = vpack.c.bf16 %v2232, %v2232
  %v2296 = vpack.c.bf16 %v2233, %v2233
  %v2297 = vpack.c.bf16 %v2234, %v2234
  %v2298 = vpack.c.bf16 %v2235, %v2235
  %v2299 = vpack.c.bf16 %v2236, %v2236
  %v2300 = vpack.c.bf16 %v2237, %v2237
  %v2301 = vpack.c.bf16 %v2238, %v2238
  %v2302 = vld [vmem:[%s5] sm:$0xf]
  %v2303 = vld [vmem:[%s5 + $0x4] sm:$0xf]
  %v2304 = vld [vmem:[%s5 + $0x8] sm:$0xf]
  %v2305 = vld [vmem:[%s5 + $0xc] sm:$0xf]
  %v2306 = vld [vmem:[%s5 + $0x10] sm:$0xf]
  %v2307 = vld [vmem:[%s5 + $0x14] sm:$0xf]
  %v2308 = vld [vmem:[%s5 + $0x18] sm:$0xf]
  %v2309 = vld [vmem:[%s5 + $0x1c] sm:$0xf]
  %v2310 = vld [vmem:[%s5 + $0x20] sm:$0xf]
  %v2311 = vld [vmem:[%s5 + $0x24] sm:$0xf]
  %v2312 = vld [vmem:[%s5 + $0x28] sm:$0xf]
  %v2313 = vld [vmem:[%s5 + $0x2c] sm:$0xf]
  %v2314 = vld [vmem:[%s5 + $0x30] sm:$0xf]
  %v2315 = vld [vmem:[%s5 + $0x34] sm:$0xf]
  %v2316 = vld [vmem:[%s5 + $0x38] sm:$0xf]
  %v2317 = vld [vmem:[%s5 + $0x3c] sm:$0xf]
  %v2318 = vld [vmem:[%s5 + $0x40] sm:$0xf]
  %v2319 = vld [vmem:[%s5 + $0x44] sm:$0xf]
  %v2320 = vld [vmem:[%s5 + $0x48] sm:$0xf]
  %v2321 = vld [vmem:[%s5 + $0x4c] sm:$0xf]
  %v2322 = vld [vmem:[%s5 + $0x50] sm:$0xf]
  %v2323 = vld [vmem:[%s5 + $0x54] sm:$0xf]
  %v2324 = vld [vmem:[%s5 + $0x58] sm:$0xf]
  %v2325 = vld [vmem:[%s5 + $0x5c] sm:$0xf]
  %v2326 = vld [vmem:[%s5 + $0x60] sm:$0xf]
  %v2327 = vld [vmem:[%s5 + $0x64] sm:$0xf]
  %v2328 = vld [vmem:[%s5 + $0x68] sm:$0xf]
  %v2329 = vld [vmem:[%s5 + $0x6c] sm:$0xf]
  %v2330 = vld [vmem:[%s5 + $0x70] sm:$0xf]
  %v2331 = vld [vmem:[%s5 + $0x74] sm:$0xf]
  %v2332 = vld [vmem:[%s5 + $0x78] sm:$0xf]
  %v2333 = vld [vmem:[%s5 + $0x7c] sm:$0xf]
  %v2334 = vld [vmem:[%s5 + $0x80] sm:$0xf]
  %v2335 = vld [vmem:[%s5 + $0x84] sm:$0xf]
  %v2336 = vld [vmem:[%s5 + $0x88] sm:$0xf]
  %v2337 = vld [vmem:[%s5 + $0x8c] sm:$0xf]
  %v2338 = vld [vmem:[%s5 + $0x90] sm:$0xf]
  %v2339 = vld [vmem:[%s5 + $0x94] sm:$0xf]
  %v2340 = vld [vmem:[%s5 + $0x98] sm:$0xf]
  %v2341 = vld [vmem:[%s5 + $0x9c] sm:$0xf]
  %v2342 = vld [vmem:[%s5 + $0xa0] sm:$0xf]
  %v2343 = vld [vmem:[%s5 + $0xa4] sm:$0xf]
  %v2344 = vld [vmem:[%s5 + $0xa8] sm:$0xf]
  %v2345 = vld [vmem:[%s5 + $0xac] sm:$0xf]
  %v2346 = vld [vmem:[%s5 + $0xb0] sm:$0xf]
  %v2347 = vld [vmem:[%s5 + $0xb4] sm:$0xf]
  %v2348 = vld [vmem:[%s5 + $0xb8] sm:$0xf]
  %v2349 = vld [vmem:[%s5 + $0xbc] sm:$0xf]
  %v2350 = vld [vmem:[%s5 + $0xc0] sm:$0xf]
  %v2351 = vld [vmem:[%s5 + $0xc4] sm:$0xf]
  %v2352 = vld [vmem:[%s5 + $0xc8] sm:$0xf]
  %v2353 = vld [vmem:[%s5 + $0xcc] sm:$0xf]
  %v2354 = vld [vmem:[%s5 + $0xd0] sm:$0xf]
  %v2355 = vld [vmem:[%s5 + $0xd4] sm:$0xf]
  %v2356 = vld [vmem:[%s5 + $0xd8] sm:$0xf]
  %v2357 = vld [vmem:[%s5 + $0xdc] sm:$0xf]
  %v2358 = vld [vmem:[%s5 + $0xe0] sm:$0xf]
  %v2359 = vld [vmem:[%s5 + $0xe4] sm:$0xf]
  %v2360 = vld [vmem:[%s5 + $0xe8] sm:$0xf]
  %v2361 = vld [vmem:[%s5 + $0xec] sm:$0xf]
  %v2362 = vld [vmem:[%s5 + $0xf0] sm:$0xf]
  %v2363 = vld [vmem:[%s5 + $0xf4] sm:$0xf]
  %v2364 = vld [vmem:[%s5 + $0xf8] sm:$0xf]
  %v2365 = vld [vmem:[%s5 + $0xfc] sm:$0xf]
  %v2366 = vld [vmem:[%s5 + $0x100] sm:$0xf]
  %v2367 = vld [vmem:[%s5 + $0x104] sm:$0xf]
  %v2368 = vld [vmem:[%s5 + $0x108] sm:$0xf]
  %v2369 = vld [vmem:[%s5 + $0x10c] sm:$0xf]
  %v2370 = vld [vmem:[%s5 + $0x110] sm:$0xf]
  %v2371 = vld [vmem:[%s5 + $0x114] sm:$0xf]
  %v2372 = vld [vmem:[%s5 + $0x118] sm:$0xf]
  %v2373 = vld [vmem:[%s5 + $0x11c] sm:$0xf]
  %v2374 = vld [vmem:[%s5 + $0x120] sm:$0xf]
  %v2375 = vld [vmem:[%s5 + $0x124] sm:$0xf]
  %v2376 = vld [vmem:[%s5 + $0x128] sm:$0xf]
  %v2377 = vld [vmem:[%s5 + $0x12c] sm:$0xf]
  %v2378 = vld [vmem:[%s5 + $0x130] sm:$0xf]
  %v2379 = vld [vmem:[%s5 + $0x134] sm:$0xf]
  %v2380 = vld [vmem:[%s5 + $0x138] sm:$0xf]
  %v2381 = vld [vmem:[%s5 + $0x13c] sm:$0xf]
  %v2382 = vld [vmem:[%s5 + $0x140] sm:$0xf]
  %v2383 = vld [vmem:[%s5 + $0x144] sm:$0xf]
  %v2384 = vld [vmem:[%s5 + $0x148] sm:$0xf]
  %v2385 = vld [vmem:[%s5 + $0x14c] sm:$0xf]
  %v2386 = vld [vmem:[%s5 + $0x150] sm:$0xf]
  %v2387 = vld [vmem:[%s5 + $0x154] sm:$0xf]
  %v2388 = vld [vmem:[%s5 + $0x158] sm:$0xf]
  %v2389 = vld [vmem:[%s5 + $0x15c] sm:$0xf]
  %v2390 = vld [vmem:[%s5 + $0x160] sm:$0xf]
  %v2391 = vld [vmem:[%s5 + $0x164] sm:$0xf]
  %v2392 = vld [vmem:[%s5 + $0x168] sm:$0xf]
  %v2393 = vld [vmem:[%s5 + $0x16c] sm:$0xf]
  %v2394 = vld [vmem:[%s5 + $0x170] sm:$0xf]
  %v2395 = vld [vmem:[%s5 + $0x174] sm:$0xf]
  %v2396 = vld [vmem:[%s5 + $0x178] sm:$0xf]
  %v2397 = vld [vmem:[%s5 + $0x17c] sm:$0xf]
  %v2398 = vld [vmem:[%s5 + $0x180] sm:$0xf]
  %v2399 = vld [vmem:[%s5 + $0x184] sm:$0xf]
  %v2400 = vld [vmem:[%s5 + $0x188] sm:$0xf]
  %v2401 = vld [vmem:[%s5 + $0x18c] sm:$0xf]
  %v2402 = vld [vmem:[%s5 + $0x190] sm:$0xf]
  %v2403 = vld [vmem:[%s5 + $0x194] sm:$0xf]
  %v2404 = vld [vmem:[%s5 + $0x198] sm:$0xf]
  %v2405 = vld [vmem:[%s5 + $0x19c] sm:$0xf]
  %v2406 = vld [vmem:[%s5 + $0x1a0] sm:$0xf]
  %v2407 = vld [vmem:[%s5 + $0x1a4] sm:$0xf]
  %v2408 = vld [vmem:[%s5 + $0x1a8] sm:$0xf]
  %v2409 = vld [vmem:[%s5 + $0x1ac] sm:$0xf]
  %v2410 = vld [vmem:[%s5 + $0x1b0] sm:$0xf]
  %v2411 = vld [vmem:[%s5 + $0x1b4] sm:$0xf]
  %v2412 = vld [vmem:[%s5 + $0x1b8] sm:$0xf]
  %v2413 = vld [vmem:[%s5 + $0x1bc] sm:$0xf]
  %v2414 = vld [vmem:[%s5 + $0x1c0] sm:$0xf]
  %v2415 = vld [vmem:[%s5 + $0x1c4] sm:$0xf]
  %v2416 = vld [vmem:[%s5 + $0x1c8] sm:$0xf]
  %v2417 = vld [vmem:[%s5 + $0x1cc] sm:$0xf]
  %v2418 = vld [vmem:[%s5 + $0x1d0] sm:$0xf]
  %v2419 = vld [vmem:[%s5 + $0x1d4] sm:$0xf]
  %v2420 = vld [vmem:[%s5 + $0x1d8] sm:$0xf]
  %v2421 = vld [vmem:[%s5 + $0x1dc] sm:$0xf]
  %v2422 = vld [vmem:[%s5 + $0x1e0] sm:$0xf]
  %v2423 = vld [vmem:[%s5 + $0x1e4] sm:$0xf]
  %v2424 = vld [vmem:[%s5 + $0x1e8] sm:$0xf]
  %v2425 = vld [vmem:[%s5 + $0x1ec] sm:$0xf]
  %v2426 = vld [vmem:[%s5 + $0x1f0] sm:$0xf]
  %v2427 = vld [vmem:[%s5 + $0x1f4] sm:$0xf]
  %v2428 = vld [vmem:[%s5 + $0x1f8] sm:$0xf]
  %v2429 = vld [vmem:[%s5 + $0x1fc] sm:$0xf]
  %v2558 = vunpack.c.l.b16 %v2302
  %v2559 = vunpack.c.l.b16 %v2303
  %v2560 = vunpack.c.l.b16 %v2304
  %v2561 = vunpack.c.l.b16 %v2305
  %v2562 = vunpack.c.l.b16 %v2306
  %v2563 = vunpack.c.l.b16 %v2307
  %v2564 = vunpack.c.l.b16 %v2308
  %v2565 = vunpack.c.l.b16 %v2309
  %v2566 = vunpack.c.l.b16 %v2310
  %v2567 = vunpack.c.l.b16 %v2311
  %v2568 = vunpack.c.l.b16 %v2312
  %v2569 = vunpack.c.l.b16 %v2313
  %v2570 = vunpack.c.l.b16 %v2314
  %v2571 = vunpack.c.l.b16 %v2315
  %v2572 = vunpack.c.l.b16 %v2316
  %v2573 = vunpack.c.l.b16 %v2317
  %v2574 = vunpack.c.l.b16 %v2318
  %v2575 = vunpack.c.l.b16 %v2319
  %v2576 = vunpack.c.l.b16 %v2320
  %v2577 = vunpack.c.l.b16 %v2321
  %v2578 = vunpack.c.l.b16 %v2322
  %v2579 = vunpack.c.l.b16 %v2323
  %v2580 = vunpack.c.l.b16 %v2324
  %v2581 = vunpack.c.l.b16 %v2325
  %v2582 = vunpack.c.l.b16 %v2326
  %v2583 = vunpack.c.l.b16 %v2327
  %v2584 = vunpack.c.l.b16 %v2328
  %v2585 = vunpack.c.l.b16 %v2329
  %v2586 = vunpack.c.l.b16 %v2330
  %v2587 = vunpack.c.l.b16 %v2331
  %v2588 = vunpack.c.l.b16 %v2332
  %v2589 = vunpack.c.l.b16 %v2333
  %v2590 = vunpack.c.l.b16 %v2334
  %v2591 = vunpack.c.l.b16 %v2335
  %v2592 = vunpack.c.l.b16 %v2336
  %v2593 = vunpack.c.l.b16 %v2337
  %v2594 = vunpack.c.l.b16 %v2338
  %v2595 = vunpack.c.l.b16 %v2339
  %v2596 = vunpack.c.l.b16 %v2340
  %v2597 = vunpack.c.l.b16 %v2341
  %v2598 = vunpack.c.l.b16 %v2342
  %v2599 = vunpack.c.l.b16 %v2343
  %v2600 = vunpack.c.l.b16 %v2344
  %v2601 = vunpack.c.l.b16 %v2345
  %v2602 = vunpack.c.l.b16 %v2346
  %v2603 = vunpack.c.l.b16 %v2347
  %v2604 = vunpack.c.l.b16 %v2348
  %v2605 = vunpack.c.l.b16 %v2349
  %v2606 = vunpack.c.l.b16 %v2350
  %v2607 = vunpack.c.l.b16 %v2351
  %v2608 = vunpack.c.l.b16 %v2352
  %v2609 = vunpack.c.l.b16 %v2353
  %v2610 = vunpack.c.l.b16 %v2354
  %v2611 = vunpack.c.l.b16 %v2355
  %v2612 = vunpack.c.l.b16 %v2356
  %v2613 = vunpack.c.l.b16 %v2357
  %v2614 = vunpack.c.l.b16 %v2358
  %v2615 = vunpack.c.l.b16 %v2359
  %v2616 = vunpack.c.l.b16 %v2360
  %v2617 = vunpack.c.l.b16 %v2361
  %v2618 = vunpack.c.l.b16 %v2362
  %v2619 = vunpack.c.l.b16 %v2363
  %v2620 = vunpack.c.l.b16 %v2364
  %v2621 = vunpack.c.l.b16 %v2365
  %v2622 = vunpack.c.l.b16 %v2366
  %v2623 = vunpack.c.l.b16 %v2367
  %v2624 = vunpack.c.l.b16 %v2368
  %v2625 = vunpack.c.l.b16 %v2369
  %v2626 = vunpack.c.l.b16 %v2370
  %v2627 = vunpack.c.l.b16 %v2371
  %v2628 = vunpack.c.l.b16 %v2372
  %v2629 = vunpack.c.l.b16 %v2373
  %v2630 = vunpack.c.l.b16 %v2374
  %v2631 = vunpack.c.l.b16 %v2375
  %v2632 = vunpack.c.l.b16 %v2376
  %v2633 = vunpack.c.l.b16 %v2377
  %v2634 = vunpack.c.l.b16 %v2378
  %v2635 = vunpack.c.l.b16 %v2379
  %v2636 = vunpack.c.l.b16 %v2380
  %v2637 = vunpack.c.l.b16 %v2381
  %v2638 = vunpack.c.l.b16 %v2382
  %v2639 = vunpack.c.l.b16 %v2383
  %v2640 = vunpack.c.l.b16 %v2384
  %v2641 = vunpack.c.l.b16 %v2385
  %v2642 = vunpack.c.l.b16 %v2386
  %v2643 = vunpack.c.l.b16 %v2387
  %v2644 = vunpack.c.l.b16 %v2388
  %v2645 = vunpack.c.l.b16 %v2389
  %v2646 = vunpack.c.l.b16 %v2390
  %v2647 = vunpack.c.l.b16 %v2391
  %v2648 = vunpack.c.l.b16 %v2392
  %v2649 = vunpack.c.l.b16 %v2393
  %v2650 = vunpack.c.l.b16 %v2394
  %v2651 = vunpack.c.l.b16 %v2395
  %v2652 = vunpack.c.l.b16 %v2396
  %v2653 = vunpack.c.l.b16 %v2397
  %v2654 = vunpack.c.l.b16 %v2398
  %v2655 = vunpack.c.l.b16 %v2399
  %v2656 = vunpack.c.l.b16 %v2400
  %v2657 = vunpack.c.l.b16 %v2401
  %v2658 = vunpack.c.l.b16 %v2402
  %v2659 = vunpack.c.l.b16 %v2403
  %v2660 = vunpack.c.l.b16 %v2404
  %v2661 = vunpack.c.l.b16 %v2405
  %v2662 = vunpack.c.l.b16 %v2406
  %v2663 = vunpack.c.l.b16 %v2407
  %v2664 = vunpack.c.l.b16 %v2408
  %v2665 = vunpack.c.l.b16 %v2409
  %v2666 = vunpack.c.l.b16 %v2410
  %v2667 = vunpack.c.l.b16 %v2411
  %v2668 = vunpack.c.l.b16 %v2412
  %v2669 = vunpack.c.l.b16 %v2413
  %v2670 = vunpack.c.l.b16 %v2414
  %v2671 = vunpack.c.l.b16 %v2415
  %v2672 = vunpack.c.l.b16 %v2416
  %v2673 = vunpack.c.l.b16 %v2417
  %v2674 = vunpack.c.l.b16 %v2418
  %v2675 = vunpack.c.l.b16 %v2419
  %v2676 = vunpack.c.l.b16 %v2420
  %v2677 = vunpack.c.l.b16 %v2421
  %v2678 = vunpack.c.l.b16 %v2422
  %v2679 = vunpack.c.l.b16 %v2423
  %v2680 = vunpack.c.l.b16 %v2424
  %v2681 = vunpack.c.l.b16 %v2425
  %v2682 = vunpack.c.l.b16 %v2426
  %v2683 = vunpack.c.l.b16 %v2427
  %v2684 = vunpack.c.l.b16 %v2428
  %v2685 = vunpack.c.l.b16 %v2429
  %v2686 = vpack.c.b16 %v2559, %v2558
  %v2687 = vpack.c.b16 %v2561, %v2560
  %v2688 = vpack.c.b16 %v2563, %v2562
  %v2689 = vpack.c.b16 %v2565, %v2564
  %v2690 = vpack.c.b16 %v2567, %v2566
  %v2691 = vpack.c.b16 %v2569, %v2568
  %v2692 = vpack.c.b16 %v2571, %v2570
  %v2693 = vpack.c.b16 %v2573, %v2572
  %v2694 = vpack.c.b16 %v2575, %v2574
  %v2695 = vpack.c.b16 %v2577, %v2576
  %v2696 = vpack.c.b16 %v2579, %v2578
  %v2697 = vpack.c.b16 %v2581, %v2580
  %v2698 = vpack.c.b16 %v2583, %v2582
  %v2699 = vpack.c.b16 %v2585, %v2584
  %v2700 = vpack.c.b16 %v2587, %v2586
  %v2701 = vpack.c.b16 %v2589, %v2588
  %v2702 = vpack.c.b16 %v2591, %v2590
  %v2703 = vpack.c.b16 %v2593, %v2592
  %v2704 = vpack.c.b16 %v2595, %v2594
  %v2705 = vpack.c.b16 %v2597, %v2596
  %v2706 = vpack.c.b16 %v2599, %v2598
  %v2707 = vpack.c.b16 %v2601, %v2600
  %v2708 = vpack.c.b16 %v2603, %v2602
  %v2709 = vpack.c.b16 %v2605, %v2604
  %v2710 = vpack.c.b16 %v2607, %v2606
  %v2711 = vpack.c.b16 %v2609, %v2608
  %v2712 = vpack.c.b16 %v2611, %v2610
  %v2713 = vpack.c.b16 %v2613, %v2612
  %v2714 = vpack.c.b16 %v2615, %v2614
  %v2715 = vpack.c.b16 %v2617, %v2616
  %v2716 = vpack.c.b16 %v2619, %v2618
  %v2717 = vpack.c.b16 %v2621, %v2620
  %v2718 = vpack.c.b16 %v2623, %v2622
  %v2719 = vpack.c.b16 %v2625, %v2624
  %v2720 = vpack.c.b16 %v2627, %v2626
  %v2721 = vpack.c.b16 %v2629, %v2628
  %v2722 = vpack.c.b16 %v2631, %v2630
  %v2723 = vpack.c.b16 %v2633, %v2632
  %v2724 = vpack.c.b16 %v2635, %v2634
  %v2725 = vpack.c.b16 %v2637, %v2636
  %v2726 = vpack.c.b16 %v2639, %v2638
  %v2727 = vpack.c.b16 %v2641, %v2640
  %v2728 = vpack.c.b16 %v2643, %v2642
  %v2729 = vpack.c.b16 %v2645, %v2644
  %v2730 = vpack.c.b16 %v2647, %v2646
  %v2731 = vpack.c.b16 %v2649, %v2648
  %v2732 = vpack.c.b16 %v2651, %v2650
  %v2733 = vpack.c.b16 %v2653, %v2652
  %v2734 = vpack.c.b16 %v2655, %v2654
  %v2735 = vpack.c.b16 %v2657, %v2656
  %v2736 = vpack.c.b16 %v2659, %v2658
  %v2737 = vpack.c.b16 %v2661, %v2660
  %v2738 = vpack.c.b16 %v2663, %v2662
  %v2739 = vpack.c.b16 %v2665, %v2664
  %v2740 = vpack.c.b16 %v2667, %v2666
  %v2741 = vpack.c.b16 %v2669, %v2668
  %v2742 = vpack.c.b16 %v2671, %v2670
  %v2743 = vpack.c.b16 %v2673, %v2672
  %v2744 = vpack.c.b16 %v2675, %v2674
  %v2745 = vpack.c.b16 %v2677, %v2676
  %v2746 = vpack.c.b16 %v2679, %v2678
  %v2747 = vpack.c.b16 %v2681, %v2680
  %v2748 = vpack.c.b16 %v2683, %v2682
  %v2749 = vpack.c.b16 %v2685, %v2684
  %2814 = vmatprep.subr.bf16.mxu0 0
  %2815 = vmatpush1.bf16.msra.mxu0 %v2686
  %2816 = vmatprep.subr.bf16.mxu0 0
  %2817 = vmatpush1.bf16.msra.mxu0 %v2687
  %2818 = vmatprep.subr.bf16.mxu0 0
  %2819 = vmatpush1.bf16.msra.mxu0 %v2688
  %2820 = vmatprep.subr.bf16.mxu0 0
  %2821 = vmatpush1.bf16.msra.mxu0 %v2689
  %2822 = vmatprep.subr.bf16.mxu0 0
  %2823 = vmatpush1.bf16.msra.mxu0 %v2690
  %2824 = vmatprep.subr.bf16.mxu0 0
  %2825 = vmatpush1.bf16.msra.mxu0 %v2691
  %2826 = vmatprep.subr.bf16.mxu0 0
  %2827 = vmatpush1.bf16.msra.mxu0 %v2692
  %2828 = vmatprep.subr.bf16.mxu0 0
  %2829 = vmatpush1.bf16.msra.mxu0 %v2693
  %2830 = vmatprep.subr.bf16.mxu0 0
  %2831 = vmatpush1.bf16.msra.mxu0 %v2694
  %2832 = vmatprep.subr.bf16.mxu0 0
  %2833 = vmatpush1.bf16.msra.mxu0 %v2695
  %2834 = vmatprep.subr.bf16.mxu0 0
  %2835 = vmatpush1.bf16.msra.mxu0 %v2696
  %2836 = vmatprep.subr.bf16.mxu0 0
  %2837 = vmatpush1.bf16.msra.mxu0 %v2697
  %2838 = vmatprep.subr.bf16.mxu0 0
  %2839 = vmatpush1.bf16.msra.mxu0 %v2698
  %2840 = vmatprep.subr.bf16.mxu0 0
  %2841 = vmatpush1.bf16.msra.mxu0 %v2699
  %2842 = vmatprep.subr.bf16.mxu0 0
  %2843 = vmatpush1.bf16.msra.mxu0 %v2700
  %2844 = vmatprep.subr.bf16.mxu0 0
  %2845 = vmatpush1.bf16.msra.mxu0 %v2701
  %2846 = vmatprep.mubr.bf16.mxu0 %v2295
  %2847 = vmatmul.mubr.bf16.gmra.mrb[0].mxu0 %v2294
  %v2848 = vpop.f32.mrb[0].mxu0
  %v2849 = vadd.f32 0.0, %v2848
  %v2850 = vpop.f32.mrb[0].mxu0
  %v2851 = vpop.f32.mrb[0].mxu0
  %v2852 = vpop.f32.mrb[0].mxu0
  %2853 = vdwg.mxu0
  %2854 = vmatprep.subr.bf16.mxu0 0
  %2855 = vmatpush1.bf16.msra.mxu0 %v2702
  %2856 = vmatprep.subr.bf16.mxu0 0
  %2857 = vmatpush1.bf16.msra.mxu0 %v2703
  %2858 = vmatprep.subr.bf16.mxu0 0
  %2859 = vmatpush1.bf16.msra.mxu0 %v2704
  %2860 = vmatprep.subr.bf16.mxu0 0
  %2861 = vmatpush1.bf16.msra.mxu0 %v2705
  %2862 = vmatprep.subr.bf16.mxu0 0
  %2863 = vmatpush1.bf16.msra.mxu0 %v2706
  %2864 = vmatprep.subr.bf16.mxu0 0
  %2865 = vmatpush1.bf16.msra.mxu0 %v2707
  %2866 = vmatprep.subr.bf16.mxu0 0
  %2867 = vmatpush1.bf16.msra.mxu0 %v2708
  %2868 = vmatprep.subr.bf16.mxu0 0
  %2869 = vmatpush1.bf16.msra.mxu0 %v2709
  %2870 = vmatprep.subr.bf16.mxu0 0
  %2871 = vmatpush1.bf16.msra.mxu0 %v2710
  %2872 = vmatprep.subr.bf16.mxu0 0
  %2873 = vmatpush1.bf16.msra.mxu0 %v2711
  %2874 = vmatprep.subr.bf16.mxu0 0
  %2875 = vmatpush1.bf16.msra.mxu0 %v2712
  %2876 = vmatprep.subr.bf16.mxu0 0
  %2877 = vmatpush1.bf16.msra.mxu0 %v2713
  %2878 = vmatprep.subr.bf16.mxu0 0
  %2879 = vmatpush1.bf16.msra.mxu0 %v2714
  %2880 = vmatprep.subr.bf16.mxu0 0
  %2881 = vmatpush1.bf16.msra.mxu0 %v2715
  %2882 = vmatprep.subr.bf16.mxu0 0
  %2883 = vmatpush1.bf16.msra.mxu0 %v2716
  %2884 = vmatprep.subr.bf16.mxu0 0
  %2885 = vmatpush1.bf16.msra.mxu0 %v2717
  %2886 = vmatprep.mubr.bf16.mxu0 %v2297
  %2887 = vmatmul.mubr.bf16.gmra.mrb[0].mxu0 %v2296
  %v2888 = vpop.f32.mrb[0].mxu0
  %v2889 = vadd.f32 %v2849, %v2888
  %v2890 = vpop.f32.mrb[0].mxu0
  %v2891 = vpop.f32.mrb[0].mxu0
  %v2892 = vpop.f32.mrb[0].mxu0
  %2893 = vdwg.mxu0
  %2894 = vmatprep.subr.bf16.mxu0 0
  %2895 = vmatpush1.bf16.msra.mxu0 %v2718
  %2896 = vmatprep.subr.bf16.mxu0 0
  %2897 = vmatpush1.bf16.msra.mxu0 %v2719
  %2898 = vmatprep.subr.bf16.mxu0 0
  %2899 = vmatpush1.bf16.msra.mxu0 %v2720
  %2900 = vmatprep.subr.bf16.mxu0 0
  %2901 = vmatpush1.bf16.msra.mxu0 %v2721
  %2902 = vmatprep.subr.bf16.mxu0 0
  %2903 = vmatpush1.bf16.msra.mxu0 %v2722
  %2904 = vmatprep.subr.bf16.mxu0 0
  %2905 = vmatpush1.bf16.msra.mxu0 %v2723
  %2906 = vmatprep.subr.bf16.mxu0 0
  %2907 = vmatpush1.bf16.msra.mxu0 %v2724
  %2908 = vmatprep.subr.bf16.mxu0 0
  %2909 = vmatpush1.bf16.msra.mxu0 %v2725
  %2910 = vmatprep.subr.bf16.mxu0 0
  %2911 = vmatpush1.bf16.msra.mxu0 %v2726
  %2912 = vmatprep.subr.bf16.mxu0 0
  %2913 = vmatpush1.bf16.msra.mxu0 %v2727
  %2914 = vmatprep.subr.bf16.mxu0 0
  %2915 = vmatpush1.bf16.msra.mxu0 %v2728
  %2916 = vmatprep.subr.bf16.mxu0 0
  %2917 = vmatpush1.bf16.msra.mxu0 %v2729
  %2918 = vmatprep.subr.bf16.mxu0 0
  %2919 = vmatpush1.bf16.msra.mxu0 %v2730
  %2920 = vmatprep.subr.bf16.mxu0 0
  %2921 = vmatpush1.bf16.msra.mxu0 %v2731
  %2922 = vmatprep.subr.bf16.mxu0 0
  %2923 = vmatpush1.bf16.msra.mxu0 %v2732
  %2924 = vmatprep.subr.bf16.mxu0 0
  %2925 = vmatpush1.bf16.msra.mxu0 %v2733
  %2926 = vmatprep.mubr.bf16.mxu0 %v2299
  %2927 = vmatmul.mubr.bf16.gmra.mrb[0].mxu0 %v2298
  %v2928 = vpop.f32.mrb[0].mxu0
  %v2929 = vadd.f32 %v2889, %v2928
  %v2930 = vpop.f32.mrb[0].mxu0
  %v2931 = vpop.f32.mrb[0].mxu0
  %v2932 = vpop.f32.mrb[0].mxu0
  %2933 = vdwg.mxu0
  %2934 = vmatprep.subr.bf16.mxu0 0
  %2935 = vmatpush1.bf16.msra.mxu0 %v2734
  %2936 = vmatprep.subr.bf16.mxu0 0
  %2937 = vmatpush1.bf16.msra.mxu0 %v2735
  %2938 = vmatprep.subr.bf16.mxu0 0
  %2939 = vmatpush1.bf16.msra.mxu0 %v2736
  %2940 = vmatprep.subr.bf16.mxu0 0
  %2941 = vmatpush1.bf16.msra.mxu0 %v2737
  %2942 = vmatprep.subr.bf16.mxu0 0
  %2943 = vmatpush1.bf16.msra.mxu0 %v2738
  %2944 = vmatprep.subr.bf16.mxu0 0
  %2945 = vmatpush1.bf16.msra.mxu0 %v2739
  %2946 = vmatprep.subr.bf16.mxu0 0
  %2947 = vmatpush1.bf16.msra.mxu0 %v2740
  %2948 = vmatprep.subr.bf16.mxu0 0
  %2949 = vmatpush1.bf16.msra.mxu0 %v2741
  %2950 = vmatprep.subr.bf16.mxu0 0
  %2951 = vmatpush1.bf16.msra.mxu0 %v2742
  %2952 = vmatprep.subr.bf16.mxu0 0
  %2953 = vmatpush1.bf16.msra.mxu0 %v2743
  %2954 = vmatprep.subr.bf16.mxu0 0
  %2955 = vmatpush1.bf16.msra.mxu0 %v2744
  %2956 = vmatprep.subr.bf16.mxu0 0
  %2957 = vmatpush1.bf16.msra.mxu0 %v2745
  %2958 = vmatprep.subr.bf16.mxu0 0
  %2959 = vmatpush1.bf16.msra.mxu0 %v2746
  %2960 = vmatprep.subr.bf16.mxu0 0
  %2961 = vmatpush1.bf16.msra.mxu0 %v2747
  %2962 = vmatprep.subr.bf16.mxu0 0
  %2963 = vmatpush1.bf16.msra.mxu0 %v2748
  %2964 = vmatprep.subr.bf16.mxu0 0
  %2965 = vmatpush1.bf16.msra.mxu0 %v2749
  %2966 = vmatprep.mubr.bf16.mxu0 %v2301
  %2967 = vmatmul.mubr.bf16.gmra.mrb[0].mxu0 %v2300
  %v2968 = vpop.f32.mrb[0].mxu0
  %v2969 = vadd.f32 %v2929, %v2968
  %v2970 = vpop.f32.mrb[0].mxu0
  %v2971 = vpop.f32.mrb[0].mxu0
  %v2972 = vpop.f32.mrb[0].mxu0
  %2973 = vdwg.mxu0
  %v2974 = vadd.f32 %v1893, %v780
  %v2975 = vadd.f32 %v2974, %v2969
  %v2977 = vrot.slane %v2969, 2
  %2978 = vrot.lane.b32.xlu0 %v2977, 96
  %v2979 = vpop.permute.xlu0 %2978
  %v2981 = vadd.f32 %v1900, %v2979
  %v2982 = vadd.f32 %v2981, %v1049
  %v2983 = vadd.f32 %v1909, %v1193
  %2984 = vrot.lane.b32.xlu0 %v2969, 64
  %v2985 = vpop.permute.xlu0 %2984
  %v2987 = vadd.f32 %v2983, %v2985
  %2988 = vrot.lane.b32.xlu0 %v2977, 32
  %v2989 = vpop.permute.xlu0 %2988
  %v2991 = vadd.f32 %v2987, %v2989
  %v2992 = vadd.f32 %v889, %v2991
  %v2993 = vxor.u32 %v2992, 2147483648
  %v2994 = vmul.f32 %v2993, 1.442695
  %v2995 = vpow.pop %v2994
  %v2996 = vadd.f32 %v2995, 1.0
  %v2997 = vrcp.pop %v2996
  %v2998 = vmul.f32 1.0, %v2997
  %v2999 = vsub.f32 %v2975, %v2982
  %v3000 = vmul.f32 %v2998, %v2999
  %v3001 = vadd.f32 %v2982, %v3000
  %v3003 = vrot.slane %v3001, 6
  %v3005 = vsel %vm1923, %v2975, %v3003
  %v3006 = vpack.c.bf16 %v3005, %v3005
  %v3007 = vld [vmem:[%s12] sm:$0xff]
  %v3008 = vld [vmem:[%s12 + $0x8] sm:$0xff]
  %v3009 = vld [vmem:[%s12 + $0x10] sm:$0xff]
  %v3010 = vld [vmem:[%s12 + $0x18] sm:$0xff]
  %v3011 = vld [vmem:[%s12 + $0x20] sm:$0xff]
  %v3012 = vld [vmem:[%s12 + $0x28] sm:$0xff]
  %v3013 = vld [vmem:[%s12 + $0x30] sm:$0xff]
  %v3014 = vld [vmem:[%s12 + $0x38] sm:$0xff]
  %v3015 = vld [vmem:[%s12 + $0x40] sm:$0xff]
  %v3016 = vld [vmem:[%s12 + $0x48] sm:$0xff]
  %v3017 = vld [vmem:[%s12 + $0x50] sm:$0xff]
  %v3018 = vld [vmem:[%s12 + $0x58] sm:$0xff]
  %v3019 = vld [vmem:[%s12 + $0x60] sm:$0xff]
  %v3020 = vld [vmem:[%s12 + $0x68] sm:$0xff]
  %v3021 = vld [vmem:[%s12 + $0x70] sm:$0xff]
  %v3022 = vld [vmem:[%s12 + $0x78] sm:$0xff]
  %v3023 = vld [vmem:[%s13] sm:$0xff]
  %v3025 = vlaneseq
  %v3026 = vshrl.u32 %v3025, 7
  %v3027 = vsub.s32 0, %v3026
  %v3028 = vrot.slane %v3023, %v3027
  %v3029 = vlaneseq
  %v3030 = vshrl.u32 %v3029, 7
  %v3031 = vsub.s32 1, %v3030
  %v3032 = vrot.slane %v3023, %v3031
  %v3033 = vlaneseq
  %v3034 = vshrl.u32 %v3033, 7
  %v3035 = vsub.s32 2, %v3034
  %v3036 = vrot.slane %v3023, %v3035
  %v3037 = vlaneseq
  %v3038 = vshrl.u32 %v3037, 7
  %v3039 = vsub.s32 3, %v3038
  %v3040 = vrot.slane %v3023, %v3039
  %v3041 = vlaneseq
  %v3042 = vshrl.u32 %v3041, 7
  %v3043 = vsub.s32 4, %v3042
  %v3044 = vrot.slane %v3023, %v3043
  %v3045 = vlaneseq
  %v3046 = vshrl.u32 %v3045, 7
  %v3047 = vsub.s32 5, %v3046
  %v3048 = vrot.slane %v3023, %v3047
  %v3049 = vlaneseq
  %v3050 = vshrl.u32 %v3049, 7
  %v3051 = vsub.s32 6, %v3050
  %v3052 = vrot.slane %v3023, %v3051
  %v3053 = vlaneseq
  %v3054 = vshrl.u32 %v3053, 7
  %v3055 = vsub.s32 7, %v3054
  %v3056 = vrot.slane %v3023, %v3055
  %v3081 = vunpack.c.l.b16 %v3007
  %v3082 = vunpack.c.h.b16 %v3007
  %v3083 = vunpack.c.l.b16 %v3008
  %v3084 = vunpack.c.h.b16 %v3008
  %v3085 = vunpack.c.l.b16 %v3009
  %v3086 = vunpack.c.h.b16 %v3009
  %v3087 = vunpack.c.l.b16 %v3010
  %v3088 = vunpack.c.h.b16 %v3010
  %v3089 = vunpack.c.l.b16 %v3011
  %v3090 = vunpack.c.h.b16 %v3011
  %v3091 = vunpack.c.l.b16 %v3012
  %v3092 = vunpack.c.h.b16 %v3012
  %v3093 = vunpack.c.l.b16 %v3013
  %v3094 = vunpack.c.h.b16 %v3013
  %v3095 = vunpack.c.l.b16 %v3014
  %v3096 = vunpack.c.h.b16 %v3014
  %v3097 = vunpack.c.l.b16 %v3015
  %v3098 = vunpack.c.h.b16 %v3015
  %v3099 = vunpack.c.l.b16 %v3016
  %v3100 = vunpack.c.h.b16 %v3016
  %v3101 = vunpack.c.l.b16 %v3017
  %v3102 = vunpack.c.h.b16 %v3017
  %v3103 = vunpack.c.l.b16 %v3018
  %v3104 = vunpack.c.h.b16 %v3018
  %v3105 = vunpack.c.l.b16 %v3019
  %v3106 = vunpack.c.h.b16 %v3019
  %v3107 = vunpack.c.l.b16 %v3020
  %v3108 = vunpack.c.h.b16 %v3020
  %v3109 = vunpack.c.l.b16 %v3021
  %v3110 = vunpack.c.h.b16 %v3021
  %v3111 = vunpack.c.l.b16 %v3022
  %v3112 = vunpack.c.h.b16 %v3022
  %v3113 = vpack.c.b16 %v3089, %v3081
  %v3114 = vpack.c.b16 %v3090, %v3082
  %v3115 = vpack.c.b16 %v3091, %v3083
  %v3116 = vpack.c.b16 %v3092, %v3084
  %v3117 = vpack.c.b16 %v3093, %v3085
  %v3118 = vpack.c.b16 %v3094, %v3086
  %v3119 = vpack.c.b16 %v3095, %v3087
  %v3120 = vpack.c.b16 %v3096, %v3088
  %v3121 = vpack.c.b16 %v3105, %v3097
  %v3122 = vpack.c.b16 %v3106, %v3098
  %v3123 = vpack.c.b16 %v3107, %v3099
  %v3124 = vpack.c.b16 %v3108, %v3100
  %v3125 = vpack.c.b16 %v3109, %v3101
  %v3126 = vpack.c.b16 %v3110, %v3102
  %v3127 = vpack.c.b16 %v3111, %v3103
  %v3128 = vpack.c.b16 %v3112, %v3104
  %v3146 = vsel %vm787, %v3006, 0
  %3148 = vmatprep.subr.bf16.mxu0 %v3114
  %3149 = vmatpush1.bf16.msra.mxu0 %v3113
  %3150 = vmatprep.subr.bf16.mxu0 %v3122
  %3151 = vmatpush1.bf16.msra.mxu0 %v3121
  %3152 = vmatprep.subr.bf16.mxu0 0
  %3153 = vmatpush1.bf16.msra.mxu0 0
  %3154 = vmatprep.subr.bf16.mxu0 0
  %3155 = vmatpush1.bf16.msra.mxu0 0
  %3156 = vmatprep.subr.bf16.mxu0 0
  %3157 = vmatpush1.bf16.msra.mxu0 0
  %3158 = vmatprep.subr.bf16.mxu0 0
  %3159 = vmatpush1.bf16.msra.mxu0 0
  %3160 = vmatprep.subr.bf16.mxu0 0
  %3161 = vmatpush1.bf16.msra.mxu0 0
  %3162 = vmatprep.subr.bf16.mxu0 0
  %3163 = vmatpush1.bf16.msra.mxu0 0
  %3164 = vmatprep.subr.bf16.mxu0 0
  %3165 = vmatpush1.bf16.msra.mxu0 0
  %3166 = vmatprep.subr.bf16.mxu0 0
  %3167 = vmatpush1.bf16.msra.mxu0 0
  %3168 = vmatprep.subr.bf16.mxu0 0
  %3169 = vmatpush1.bf16.msra.mxu0 0
  %3170 = vmatprep.subr.bf16.mxu0 0
  %3171 = vmatpush1.bf16.msra.mxu0 0
  %3172 = vmatprep.subr.bf16.mxu0 0
  %3173 = vmatpush1.bf16.msra.mxu0 0
  %3174 = vmatprep.subr.bf16.mxu0 0
  %3175 = vmatpush1.bf16.msra.mxu0 0
  %3176 = vmatprep.subr.bf16.mxu0 0
  %3177 = vmatpush1.bf16.msra.mxu0 0
  %3178 = vmatprep.subr.bf16.mxu0 0
  %3179 = vmatpush1.bf16.msra.mxu0 0
  %3180 = vmatprep.mubr.bf16.mxu0 0
  %3181 = vmatmul.mubr.bf16.gmra.mrb[0].mxu0 %v3146
  %v3182 = vpop.f32.mrb[0].mxu0
  %v3183 = vadd.f32 %v3028, %v3182
  %v3184 = vpop.f32.mrb[0].mxu0
  %v3185 = vadd.f32 %v3032, %v3184
  %v3186 = vpop.f32.mrb[0].mxu0
  %v3187 = vpop.f32.mrb[0].mxu0
  %3188 = vdwg.mxu0
  %3189 = vmatprep.subr.bf16.mxu0 %v3116
  %3190 = vmatpush1.bf16.msra.mxu0 %v3115
  %3191 = vmatprep.subr.bf16.mxu0 %v3124
  %3192 = vmatpush1.bf16.msra.mxu0 %v3123
  %3193 = vmatprep.subr.bf16.mxu0 0
  %3194 = vmatpush1.bf16.msra.mxu0 0
  %3195 = vmatprep.subr.bf16.mxu0 0
  %3196 = vmatpush1.bf16.msra.mxu0 0
  %3197 = vmatprep.subr.bf16.mxu0 0
  %3198 = vmatpush1.bf16.msra.mxu0 0
  %3199 = vmatprep.subr.bf16.mxu0 0
  %3200 = vmatpush1.bf16.msra.mxu0 0
  %3201 = vmatprep.subr.bf16.mxu0 0
  %3202 = vmatpush1.bf16.msra.mxu0 0
  %3203 = vmatprep.subr.bf16.mxu0 0
  %3204 = vmatpush1.bf16.msra.mxu0 0
  %3205 = vmatprep.subr.bf16.mxu0 0
  %3206 = vmatpush1.bf16.msra.mxu0 0
  %3207 = vmatprep.subr.bf16.mxu0 0
  %3208 = vmatpush1.bf16.msra.mxu0 0
  %3209 = vmatprep.subr.bf16.mxu0 0
  %3210 = vmatpush1.bf16.msra.mxu0 0
  %3211 = vmatprep.subr.bf16.mxu0 0
  %3212 = vmatpush1.bf16.msra.mxu0 0
  %3213 = vmatprep.subr.bf16.mxu0 0
  %3214 = vmatpush1.bf16.msra.mxu0 0
  %3215 = vmatprep.subr.bf16.mxu0 0
  %3216 = vmatpush1.bf16.msra.mxu0 0
  %3217 = vmatprep.subr.bf16.mxu0 0
  %3218 = vmatpush1.bf16.msra.mxu0 0
  %3219 = vmatprep.subr.bf16.mxu0 0
  %3220 = vmatpush1.bf16.msra.mxu0 0
  %3221 = vmatprep.mubr.bf16.mxu0 0
  %3222 = vmatmul.mubr.bf16.gmra.mrb[0].mxu0 %v3146
  %v3223 = vpop.f32.mrb[0].mxu0
  %v3224 = vadd.f32 %v3036, %v3223
  %v3225 = vpop.f32.mrb[0].mxu0
  %v3226 = vadd.f32 %v3040, %v3225
  %v3227 = vpop.f32.mrb[0].mxu0
  %v3228 = vpop.f32.mrb[0].mxu0
  %3229 = vdwg.mxu0
  %3230 = vmatprep.subr.bf16.mxu0 %v3118
  %3231 = vmatpush1.bf16.msra.mxu0 %v3117
  %3232 = vmatprep.subr.bf16.mxu0 %v3126
  %3233 = vmatpush1.bf16.msra.mxu0 %v3125
  %3234 = vmatprep.subr.bf16.mxu0 0
  %3235 = vmatpush1.bf16.msra.mxu0 0
  %3236 = vmatprep.subr.bf16.mxu0 0
  %3237 = vmatpush1.bf16.msra.mxu0 0
  %3238 = vmatprep.subr.bf16.mxu0 0
  %3239 = vmatpush1.bf16.msra.mxu0 0
  %3240 = vmatprep.subr.bf16.mxu0 0
  %3241 = vmatpush1.bf16.msra.mxu0 0
  %3242 = vmatprep.subr.bf16.mxu0 0
  %3243 = vmatpush1.bf16.msra.mxu0 0
  %3244 = vmatprep.subr.bf16.mxu0 0
  %3245 = vmatpush1.bf16.msra.mxu0 0
  %3246 = vmatprep.subr.bf16.mxu0 0
  %3247 = vmatpush1.bf16.msra.mxu0 0
  %3248 = vmatprep.subr.bf16.mxu0 0
  %3249 = vmatpush1.bf16.msra.mxu0 0
  %3250 = vmatprep.subr.bf16.mxu0 0
  %3251 = vmatpush1.bf16.msra.mxu0 0
  %3252 = vmatprep.subr.bf16.mxu0 0
  %3253 = vmatpush1.bf16.msra.mxu0 0
  %3254 = vmatprep.subr.bf16.mxu0 0
  %3255 = vmatpush1.bf16.msra.mxu0 0
  %3256 = vmatprep.subr.bf16.mxu0 0
  %3257 = vmatpush1.bf16.msra.mxu0 0
  %3258 = vmatprep.subr.bf16.mxu0 0
  %3259 = vmatpush1.bf16.msra.mxu0 0
  %3260 = vmatprep.subr.bf16.mxu0 0
  %3261 = vmatpush1.bf16.msra.mxu0 0
  %3262 = vmatprep.mubr.bf16.mxu0 0
  %3263 = vmatmul.mubr.bf16.gmra.mrb[0].mxu0 %v3146
  %v3264 = vpop.f32.mrb[0].mxu0
  %v3265 = vadd.f32 %v3044, %v3264
  %v3266 = vpop.f32.mrb[0].mxu0
  %v3267 = vadd.f32 %v3048, %v3266
  %v3268 = vpop.f32.mrb[0].mxu0
  %v3269 = vpop.f32.mrb[0].mxu0
  %3270 = vdwg.mxu0
  %3271 = vmatprep.subr.bf16.mxu0 %v3120
  %3272 = vmatpush1.bf16.msra.mxu0 %v3119
  %3273 = vmatprep.subr.bf16.mxu0 %v3128
  %3274 = vmatpush1.bf16.msra.mxu0 %v3127
  %3275 = vmatprep.subr.bf16.mxu0 0
  %3276 = vmatpush1.bf16.msra.mxu0 0
  %3277 = vmatprep.subr.bf16.mxu0 0
  %3278 = vmatpush1.bf16.msra.mxu0 0
  %3279 = vmatprep.subr.bf16.mxu0 0
  %3280 = vmatpush1.bf16.msra.mxu0 0
  %3281 = vmatprep.subr.bf16.mxu0 0
  %3282 = vmatpush1.bf16.msra.mxu0 0
  %3283 = vmatprep.subr.bf16.mxu0 0
  %3284 = vmatpush1.bf16.msra.mxu0 0
  %3285 = vmatprep.subr.bf16.mxu0 0
  %3286 = vmatpush1.bf16.msra.mxu0 0
  %3287 = vmatprep.subr.bf16.mxu0 0
  %3288 = vmatpush1.bf16.msra.mxu0 0
  %3289 = vmatprep.subr.bf16.mxu0 0
  %3290 = vmatpush1.bf16.msra.mxu0 0
  %3291 = vmatprep.subr.bf16.mxu0 0
  %3292 = vmatpush1.bf16.msra.mxu0 0
  %3293 = vmatprep.subr.bf16.mxu0 0
  %3294 = vmatpush1.bf16.msra.mxu0 0
  %3295 = vmatprep.subr.bf16.mxu0 0
  %3296 = vmatpush1.bf16.msra.mxu0 0
  %3297 = vmatprep.subr.bf16.mxu0 0
  %3298 = vmatpush1.bf16.msra.mxu0 0
  %3299 = vmatprep.subr.bf16.mxu0 0
  %3300 = vmatpush1.bf16.msra.mxu0 0
  %3301 = vmatprep.subr.bf16.mxu0 0
  %3302 = vmatpush1.bf16.msra.mxu0 0
  %3303 = vmatprep.mubr.bf16.mxu0 0
  %3304 = vmatmul.mubr.bf16.gmra.mrb[0].mxu0 %v3146
  %v3305 = vpop.f32.mrb[0].mxu0
  %v3306 = vadd.f32 %v3052, %v3305
  %v3307 = vpop.f32.mrb[0].mxu0
  %v3308 = vadd.f32 %v3056, %v3307
  %v3309 = vpop.f32.mrb[0].mxu0
  %v3310 = vpop.f32.mrb[0].mxu0
  %3311 = vdwg.mxu0
  %v3312 = vtanh.pop %v3183
  %v3313 = vtanh.pop %v3185
  %v3314 = vtanh.pop %v3224
  %v3315 = vtanh.pop %v3226
  %v3316 = vtanh.pop %v3265
  %v3317 = vtanh.pop %v3267
  %v3318 = vtanh.pop %v3306
  %v3319 = vtanh.pop %v3308
  %v3328 = vcombine.low %v3312, %v3313
  %v3329 = vcombine.low %v3314, %v3315
  %v3331 = vunpack.c.l.s4 1983009808
  %v3332 = vunpack.c.0.s8 %v3331
  %v3333 = vlaneseq
  %v3334 = vshrl.u32 %v3333, 7
  %v3335 = vsub.s32 %v3332, %v3334
  %v3336 = vrot.slane %v3328, %v3335
  %v3338 = vunpack.c.l.s4 1983009808
  %v3339 = vunpack.c.0.s8 %v3338
  %v3340 = vlaneseq
  %v3341 = vshrl.u32 %v3340, 7
  %v3342 = vsub.s32 %v3339, %v3341
  %v3343 = vrot.slane %v3329, %v3342
  %v3344 = vcombine.low %v3336, %v3343
  %v3345 = vcombine.low %v3316, %v3317
  %v3346 = vcombine.low %v3318, %v3319
  %v3348 = vunpack.c.l.s4 1983009808
  %v3349 = vunpack.c.0.s8 %v3348
  %v3350 = vlaneseq
  %v3351 = vshrl.u32 %v3350, 7
  %v3352 = vsub.s32 %v3349, %v3351
  %v3353 = vrot.slane %v3345, %v3352
  %v3355 = vunpack.c.l.s4 1983009808
  %v3356 = vunpack.c.0.s8 %v3355
  %v3357 = vlaneseq
  %v3358 = vshrl.u32 %v3357, 7
  %v3359 = vsub.s32 %v3356, %v3358
  %v3360 = vrot.slane %v3346, %v3359
  %v3361 = vcombine.low %v3353, %v3360
  %s3364 = scalar_lea.vmem %s15, 16
  %3365 = vst [vmem:[%s3364] sm:$0xff] %v3344
  %3366 = vst [vmem:[%s3364 + $0x8] sm:$0xff] %v3361
  %v3367 = vcombine.high %v3336, %v3343
  %v3368 = vcombine.high %v3353, %v3360
  %s3371 = scalar_lea.vmem %s14, 16
  %3372 = vst [vmem:[%s3371] sm:$0xff] %v3367
  %3373 = vst [vmem:[%s3371 + $0x8] sm:$0xff] %v3368
  %s3374 = scalar_lea.vmem %s16, 2
  %3375 = vst.msk [vmem:[%s3374] sm:$0x3] %vm2291, %v2982
  %s3376 = scalar_lea.vmem %s17, 2
  %3377 = vst.msk [vmem:[%s3376] sm:$0x3] %vm2291, %v2975
  %v3378 = vpack.c.bf16 %v3312, %v3312
  %v3379 = vpack.c.bf16 %v3313, %v3313
  %v3380 = vpack.c.bf16 %v3314, %v3314
  %v3381 = vpack.c.bf16 %v3315, %v3315
  %v3382 = vpack.c.bf16 %v3316, %v3316
  %v3383 = vpack.c.bf16 %v3317, %v3317
  %v3384 = vpack.c.bf16 %v3318, %v3318
  %v3385 = vpack.c.bf16 %v3319, %v3319
  %v3386 = vld [vmem:[%s5] sm:$0xf]
  %v3387 = vld [vmem:[%s5 + $0x4] sm:$0xf]
  %v3388 = vld [vmem:[%s5 + $0x8] sm:$0xf]
  %v3389 = vld [vmem:[%s5 + $0xc] sm:$0xf]
  %v3390 = vld [vmem:[%s5 + $0x10] sm:$0xf]
  %v3391 = vld [vmem:[%s5 + $0x14] sm:$0xf]
  %v3392 = vld [vmem:[%s5 + $0x18] sm:$0xf]
  %v3393 = vld [vmem:[%s5 + $0x1c] sm:$0xf]
  %v3394 = vld [vmem:[%s5 + $0x20] sm:$0xf]
  %v3395 = vld [vmem:[%s5 + $0x24] sm:$0xf]
  %v3396 = vld [vmem:[%s5 + $0x28] sm:$0xf]
  %v3397 = vld [vmem:[%s5 + $0x2c] sm:$0xf]
  %v3398 = vld [vmem:[%s5 + $0x30] sm:$0xf]
  %v3399 = vld [vmem:[%s5 + $0x34] sm:$0xf]
  %v3400 = vld [vmem:[%s5 + $0x38] sm:$0xf]
  %v3401 = vld [vmem:[%s5 + $0x3c] sm:$0xf]
  %v3402 = vld [vmem:[%s5 + $0x40] sm:$0xf]
  %v3403 = vld [vmem:[%s5 + $0x44] sm:$0xf]
  %v3404 = vld [vmem:[%s5 + $0x48] sm:$0xf]
  %v3405 = vld [vmem:[%s5 + $0x4c] sm:$0xf]
  %v3406 = vld [vmem:[%s5 + $0x50] sm:$0xf]
  %v3407 = vld [vmem:[%s5 + $0x54] sm:$0xf]
  %v3408 = vld [vmem:[%s5 + $0x58] sm:$0xf]
  %v3409 = vld [vmem:[%s5 + $0x5c] sm:$0xf]
  %v3410 = vld [vmem:[%s5 + $0x60] sm:$0xf]
  %v3411 = vld [vmem:[%s5 + $0x64] sm:$0xf]
  %v3412 = vld [vmem:[%s5 + $0x68] sm:$0xf]
  %v3413 = vld [vmem:[%s5 + $0x6c] sm:$0xf]
  %v3414 = vld [vmem:[%s5 + $0x70] sm:$0xf]
  %v3415 = vld [vmem:[%s5 + $0x74] sm:$0xf]
  %v3416 = vld [vmem:[%s5 + $0x78] sm:$0xf]
  %v3417 = vld [vmem:[%s5 + $0x7c] sm:$0xf]
  %v3418 = vld [vmem:[%s5 + $0x80] sm:$0xf]
  %v3419 = vld [vmem:[%s5 + $0x84] sm:$0xf]
  %v3420 = vld [vmem:[%s5 + $0x88] sm:$0xf]
  %v3421 = vld [vmem:[%s5 + $0x8c] sm:$0xf]
  %v3422 = vld [vmem:[%s5 + $0x90] sm:$0xf]
  %v3423 = vld [vmem:[%s5 + $0x94] sm:$0xf]
  %v3424 = vld [vmem:[%s5 + $0x98] sm:$0xf]
  %v3425 = vld [vmem:[%s5 + $0x9c] sm:$0xf]
  %v3426 = vld [vmem:[%s5 + $0xa0] sm:$0xf]
  %v3427 = vld [vmem:[%s5 + $0xa4] sm:$0xf]
  %v3428 = vld [vmem:[%s5 + $0xa8] sm:$0xf]
  %v3429 = vld [vmem:[%s5 + $0xac] sm:$0xf]
  %v3430 = vld [vmem:[%s5 + $0xb0] sm:$0xf]
  %v3431 = vld [vmem:[%s5 + $0xb4] sm:$0xf]
  %v3432 = vld [vmem:[%s5 + $0xb8] sm:$0xf]
  %v3433 = vld [vmem:[%s5 + $0xbc] sm:$0xf]
  %v3434 = vld [vmem:[%s5 + $0xc0] sm:$0xf]
  %v3435 = vld [vmem:[%s5 + $0xc4] sm:$0xf]
  %v3436 = vld [vmem:[%s5 + $0xc8] sm:$0xf]
  %v3437 = vld [vmem:[%s5 + $0xcc] sm:$0xf]
  %v3438 = vld [vmem:[%s5 + $0xd0] sm:$0xf]
  %v3439 = vld [vmem:[%s5 + $0xd4] sm:$0xf]
  %v3440 = vld [vmem:[%s5 + $0xd8] sm:$0xf]
  %v3441 = vld [vmem:[%s5 + $0xdc] sm:$0xf]
  %v3442 = vld [vmem:[%s5 + $0xe0] sm:$0xf]
  %v3443 = vld [vmem:[%s5 + $0xe4] sm:$0xf]
  %v3444 = vld [vmem:[%s5 + $0xe8] sm:$0xf]
  %v3445 = vld [vmem:[%s5 + $0xec] sm:$0xf]
  %v3446 = vld [vmem:[%s5 + $0xf0] sm:$0xf]
  %v3447 = vld [vmem:[%s5 + $0xf4] sm:$0xf]
  %v3448 = vld [vmem:[%s5 + $0xf8] sm:$0xf]
  %v3449 = vld [vmem:[%s5 + $0xfc] sm:$0xf]
  %v3450 = vld [vmem:[%s5 + $0x100] sm:$0xf]
  %v3451 = vld [vmem:[%s5 + $0x104] sm:$0xf]
  %v3452 = vld [vmem:[%s5 + $0x108] sm:$0xf]
  %v3453 = vld [vmem:[%s5 + $0x10c] sm:$0xf]
  %v3454 = vld [vmem:[%s5 + $0x110] sm:$0xf]
  %v3455 = vld [vmem:[%s5 + $0x114] sm:$0xf]
  %v3456 = vld [vmem:[%s5 + $0x118] sm:$0xf]
  %v3457 = vld [vmem:[%s5 + $0x11c] sm:$0xf]
  %v3458 = vld [vmem:[%s5 + $0x120] sm:$0xf]
  %v3459 = vld [vmem:[%s5 + $0x124] sm:$0xf]
  %v3460 = vld [vmem:[%s5 + $0x128] sm:$0xf]
  %v3461 = vld [vmem:[%s5 + $0x12c] sm:$0xf]
  %v3462 = vld [vmem:[%s5 + $0x130] sm:$0xf]
  %v3463 = vld [vmem:[%s5 + $0x134] sm:$0xf]
  %v3464 = vld [vmem:[%s5 + $0x138] sm:$0xf]
  %v3465 = vld [vmem:[%s5 + $0x13c] sm:$0xf]
  %v3466 = vld [vmem:[%s5 + $0x140] sm:$0xf]
  %v3467 = vld [vmem:[%s5 + $0x144] sm:$0xf]
  %v3468 = vld [vmem:[%s5 + $0x148] sm:$0xf]
  %v3469 = vld [vmem:[%s5 + $0x14c] sm:$0xf]
  %v3470 = vld [vmem:[%s5 + $0x150] sm:$0xf]
  %v3471 = vld [vmem:[%s5 + $0x154] sm:$0xf]
  %v3472 = vld [vmem:[%s5 + $0x158] sm:$0xf]
  %v3473 = vld [vmem:[%s5 + $0x15c] sm:$0xf]
  %v3474 = vld [vmem:[%s5 + $0x160] sm:$0xf]
  %v3475 = vld [vmem:[%s5 + $0x164] sm:$0xf]
  %v3476 = vld [vmem:[%s5 + $0x168] sm:$0xf]
  %v3477 = vld [vmem:[%s5 + $0x16c] sm:$0xf]
  %v3478 = vld [vmem:[%s5 + $0x170] sm:$0xf]
  %v3479 = vld [vmem:[%s5 + $0x174] sm:$0xf]
  %v3480 = vld [vmem:[%s5 + $0x178] sm:$0xf]
  %v3481 = vld [vmem:[%s5 + $0x17c] sm:$0xf]
  %v3482 = vld [vmem:[%s5 + $0x180] sm:$0xf]
  %v3483 = vld [vmem:[%s5 + $0x184] sm:$0xf]
  %v3484 = vld [vmem:[%s5 + $0x188] sm:$0xf]
  %v3485 = vld [vmem:[%s5 + $0x18c] sm:$0xf]
  %v3486 = vld [vmem:[%s5 + $0x190] sm:$0xf]
  %v3487 = vld [vmem:[%s5 + $0x194] sm:$0xf]
  %v3488 = vld [vmem:[%s5 + $0x198] sm:$0xf]
  %v3489 = vld [vmem:[%s5 + $0x19c] sm:$0xf]
  %v3490 = vld [vmem:[%s5 + $0x1a0] sm:$0xf]
  %v3491 = vld [vmem:[%s5 + $0x1a4] sm:$0xf]
  %v3492 = vld [vmem:[%s5 + $0x1a8] sm:$0xf]
  %v3493 = vld [vmem:[%s5 + $0x1ac] sm:$0xf]
  %v3494 = vld [vmem:[%s5 + $0x1b0] sm:$0xf]
  %v3495 = vld [vmem:[%s5 + $0x1b4] sm:$0xf]
  %v3496 = vld [vmem:[%s5 + $0x1b8] sm:$0xf]
  %v3497 = vld [vmem:[%s5 + $0x1bc] sm:$0xf]
  %v3498 = vld [vmem:[%s5 + $0x1c0] sm:$0xf]
  %v3499 = vld [vmem:[%s5 + $0x1c4] sm:$0xf]
  %v3500 = vld [vmem:[%s5 + $0x1c8] sm:$0xf]
  %v3501 = vld [vmem:[%s5 + $0x1cc] sm:$0xf]
  %v3502 = vld [vmem:[%s5 + $0x1d0] sm:$0xf]
  %v3503 = vld [vmem:[%s5 + $0x1d4] sm:$0xf]
  %v3504 = vld [vmem:[%s5 + $0x1d8] sm:$0xf]
  %v3505 = vld [vmem:[%s5 + $0x1dc] sm:$0xf]
  %v3506 = vld [vmem:[%s5 + $0x1e0] sm:$0xf]
  %v3507 = vld [vmem:[%s5 + $0x1e4] sm:$0xf]
  %v3508 = vld [vmem:[%s5 + $0x1e8] sm:$0xf]
  %v3509 = vld [vmem:[%s5 + $0x1ec] sm:$0xf]
  %v3510 = vld [vmem:[%s5 + $0x1f0] sm:$0xf]
  %v3511 = vld [vmem:[%s5 + $0x1f4] sm:$0xf]
  %v3512 = vld [vmem:[%s5 + $0x1f8] sm:$0xf]
  %v3513 = vld [vmem:[%s5 + $0x1fc] sm:$0xf]
  %v3642 = vunpack.c.l.b16 %v3386
  %v3643 = vunpack.c.l.b16 %v3387
  %v3644 = vunpack.c.l.b16 %v3388
  %v3645 = vunpack.c.l.b16 %v3389
  %v3646 = vunpack.c.l.b16 %v3390
  %v3647 = vunpack.c.l.b16 %v3391
  %v3648 = vunpack.c.l.b16 %v3392
  %v3649 = vunpack.c.l.b16 %v3393
  %v3650 = vunpack.c.l.b16 %v3394
  %v3651 = vunpack.c.l.b16 %v3395
  %v3652 = vunpack.c.l.b16 %v3396
  %v3653 = vunpack.c.l.b16 %v3397
  %v3654 = vunpack.c.l.b16 %v3398
  %v3655 = vunpack.c.l.b16 %v3399
  %v3656 = vunpack.c.l.b16 %v3400
  %v3657 = vunpack.c.l.b16 %v3401
  %v3658 = vunpack.c.l.b16 %v3402
  %v3659 = vunpack.c.l.b16 %v3403
  %v3660 = vunpack.c.l.b16 %v3404
  %v3661 = vunpack.c.l.b16 %v3405
  %v3662 = vunpack.c.l.b16 %v3406
  %v3663 = vunpack.c.l.b16 %v3407
  %v3664 = vunpack.c.l.b16 %v3408
  %v3665 = vunpack.c.l.b16 %v3409
  %v3666 = vunpack.c.l.b16 %v3410
  %v3667 = vunpack.c.l.b16 %v3411
  %v3668 = vunpack.c.l.b16 %v3412
  %v3669 = vunpack.c.l.b16 %v3413
  %v3670 = vunpack.c.l.b16 %v3414
  %v3671 = vunpack.c.l.b16 %v3415
  %v3672 = vunpack.c.l.b16 %v3416
  %v3673 = vunpack.c.l.b16 %v3417
  %v3674 = vunpack.c.l.b16 %v3418
  %v3675 = vunpack.c.l.b16 %v3419
  %v3676 = vunpack.c.l.b16 %v3420
  %v3677 = vunpack.c.l.b16 %v3421
  %v3678 = vunpack.c.l.b16 %v3422
  %v3679 = vunpack.c.l.b16 %v3423
  %v3680 = vunpack.c.l.b16 %v3424
  %v3681 = vunpack.c.l.b16 %v3425
  %v3682 = vunpack.c.l.b16 %v3426
  %v3683 = vunpack.c.l.b16 %v3427
  %v3684 = vunpack.c.l.b16 %v3428
  %v3685 = vunpack.c.l.b16 %v3429
  %v3686 = vunpack.c.l.b16 %v3430
  %v3687 = vunpack.c.l.b16 %v3431
  %v3688 = vunpack.c.l.b16 %v3432
  %v3689 = vunpack.c.l.b16 %v3433
  %v3690 = vunpack.c.l.b16 %v3434
  %v3691 = vunpack.c.l.b16 %v3435
  %v3692 = vunpack.c.l.b16 %v3436
  %v3693 = vunpack.c.l.b16 %v3437
  %v3694 = vunpack.c.l.b16 %v3438
  %v3695 = vunpack.c.l.b16 %v3439
  %v3696 = vunpack.c.l.b16 %v3440
  %v3697 = vunpack.c.l.b16 %v3441
  %v3698 = vunpack.c.l.b16 %v3442
  %v3699 = vunpack.c.l.b16 %v3443
  %v3700 = vunpack.c.l.b16 %v3444
  %v3701 = vunpack.c.l.b16 %v3445
  %v3702 = vunpack.c.l.b16 %v3446
  %v3703 = vunpack.c.l.b16 %v3447
  %v3704 = vunpack.c.l.b16 %v3448
  %v3705 = vunpack.c.l.b16 %v3449
  %v3706 = vunpack.c.l.b16 %v3450
  %v3707 = vunpack.c.l.b16 %v3451
  %v3708 = vunpack.c.l.b16 %v3452
  %v3709 = vunpack.c.l.b16 %v3453
  %v3710 = vunpack.c.l.b16 %v3454
  %v3711 = vunpack.c.l.b16 %v3455
  %v3712 = vunpack.c.l.b16 %v3456
  %v3713 = vunpack.c.l.b16 %v3457
  %v3714 = vunpack.c.l.b16 %v3458
  %v3715 = vunpack.c.l.b16 %v3459
  %v3716 = vunpack.c.l.b16 %v3460
  %v3717 = vunpack.c.l.b16 %v3461
  %v3718 = vunpack.c.l.b16 %v3462
  %v3719 = vunpack.c.l.b16 %v3463
  %v3720 = vunpack.c.l.b16 %v3464
  %v3721 = vunpack.c.l.b16 %v3465
  %v3722 = vunpack.c.l.b16 %v3466
  %v3723 = vunpack.c.l.b16 %v3467
  %v3724 = vunpack.c.l.b16 %v3468
  %v3725 = vunpack.c.l.b16 %v3469
  %v3726 = vunpack.c.l.b16 %v3470
  %v3727 = vunpack.c.l.b16 %v3471
  %v3728 = vunpack.c.l.b16 %v3472
  %v3729 = vunpack.c.l.b16 %v3473
  %v3730 = vunpack.c.l.b16 %v3474
  %v3731 = vunpack.c.l.b16 %v3475
  %v3732 = vunpack.c.l.b16 %v3476
  %v3733 = vunpack.c.l.b16 %v3477
  %v3734 = vunpack.c.l.b16 %v3478
  %v3735 = vunpack.c.l.b16 %v3479
  %v3736 = vunpack.c.l.b16 %v3480
  %v3737 = vunpack.c.l.b16 %v3481
  %v3738 = vunpack.c.l.b16 %v3482
  %v3739 = vunpack.c.l.b16 %v3483
  %v3740 = vunpack.c.l.b16 %v3484
  %v3741 = vunpack.c.l.b16 %v3485
  %v3742 = vunpack.c.l.b16 %v3486
  %v3743 = vunpack.c.l.b16 %v3487
  %v3744 = vunpack.c.l.b16 %v3488
  %v3745 = vunpack.c.l.b16 %v3489
  %v3746 = vunpack.c.l.b16 %v3490
  %v3747 = vunpack.c.l.b16 %v3491
  %v3748 = vunpack.c.l.b16 %v3492
  %v3749 = vunpack.c.l.b16 %v3493
  %v3750 = vunpack.c.l.b16 %v3494
  %v3751 = vunpack.c.l.b16 %v3495
  %v3752 = vunpack.c.l.b16 %v3496
  %v3753 = vunpack.c.l.b16 %v3497
  %v3754 = vunpack.c.l.b16 %v3498
  %v3755 = vunpack.c.l.b16 %v3499
  %v3756 = vunpack.c.l.b16 %v3500
  %v3757 = vunpack.c.l.b16 %v3501
  %v3758 = vunpack.c.l.b16 %v3502
  %v3759 = vunpack.c.l.b16 %v3503
  %v3760 = vunpack.c.l.b16 %v3504
  %v3761 = vunpack.c.l.b16 %v3505
  %v3762 = vunpack.c.l.b16 %v3506
  %v3763 = vunpack.c.l.b16 %v3507
  %v3764 = vunpack.c.l.b16 %v3508
  %v3765 = vunpack.c.l.b16 %v3509
  %v3766 = vunpack.c.l.b16 %v3510
  %v3767 = vunpack.c.l.b16 %v3511
  %v3768 = vunpack.c.l.b16 %v3512
  %v3769 = vunpack.c.l.b16 %v3513
  %v3770 = vpack.c.b16 %v3643, %v3642
  %v3771 = vpack.c.b16 %v3645, %v3644
  %v3772 = vpack.c.b16 %v3647, %v3646
  %v3773 = vpack.c.b16 %v3649, %v3648
  %v3774 = vpack.c.b16 %v3651, %v3650
  %v3775 = vpack.c.b16 %v3653, %v3652
  %v3776 = vpack.c.b16 %v3655, %v3654
  %v3777 = vpack.c.b16 %v3657, %v3656
  %v3778 = vpack.c.b16 %v3659, %v3658
  %v3779 = vpack.c.b16 %v3661, %v3660
  %v3780 = vpack.c.b16 %v3663, %v3662
  %v3781 = vpack.c.b16 %v3665, %v3664
  %v3782 = vpack.c.b16 %v3667, %v3666
  %v3783 = vpack.c.b16 %v3669, %v3668
  %v3784 = vpack.c.b16 %v3671, %v3670
  %v3785 = vpack.c.b16 %v3673, %v3672
  %v3786 = vpack.c.b16 %v3675, %v3674
  %v3787 = vpack.c.b16 %v3677, %v3676
  %v3788 = vpack.c.b16 %v3679, %v3678
  %v3789 = vpack.c.b16 %v3681, %v3680
  %v3790 = vpack.c.b16 %v3683, %v3682
  %v3791 = vpack.c.b16 %v3685, %v3684
  %v3792 = vpack.c.b16 %v3687, %v3686
  %v3793 = vpack.c.b16 %v3689, %v3688
  %v3794 = vpack.c.b16 %v3691, %v3690
  %v3795 = vpack.c.b16 %v3693, %v3692
  %v3796 = vpack.c.b16 %v3695, %v3694
  %v3797 = vpack.c.b16 %v3697, %v3696
  %v3798 = vpack.c.b16 %v3699, %v3698
  %v3799 = vpack.c.b16 %v3701, %v3700
  %v3800 = vpack.c.b16 %v3703, %v3702
  %v3801 = vpack.c.b16 %v3705, %v3704
  %v3802 = vpack.c.b16 %v3707, %v3706
  %v3803 = vpack.c.b16 %v3709, %v3708
  %v3804 = vpack.c.b16 %v3711, %v3710
  %v3805 = vpack.c.b16 %v3713, %v3712
  %v3806 = vpack.c.b16 %v3715, %v3714
  %v3807 = vpack.c.b16 %v3717, %v3716
  %v3808 = vpack.c.b16 %v3719, %v3718
  %v3809 = vpack.c.b16 %v3721, %v3720
  %v3810 = vpack.c.b16 %v3723, %v3722
  %v3811 = vpack.c.b16 %v3725, %v3724
  %v3812 = vpack.c.b16 %v3727, %v3726
  %v3813 = vpack.c.b16 %v3729, %v3728
  %v3814 = vpack.c.b16 %v3731, %v3730
  %v3815 = vpack.c.b16 %v3733, %v3732
  %v3816 = vpack.c.b16 %v3735, %v3734
  %v3817 = vpack.c.b16 %v3737, %v3736
  %v3818 = vpack.c.b16 %v3739, %v3738
  %v3819 = vpack.c.b16 %v3741, %v3740
  %v3820 = vpack.c.b16 %v3743, %v3742
  %v3821 = vpack.c.b16 %v3745, %v3744
  %v3822 = vpack.c.b16 %v3747, %v3746
  %v3823 = vpack.c.b16 %v3749, %v3748
  %v3824 = vpack.c.b16 %v3751, %v3750
  %v3825 = vpack.c.b16 %v3753, %v3752
  %v3826 = vpack.c.b16 %v3755, %v3754
  %v3827 = vpack.c.b16 %v3757, %v3756
  %v3828 = vpack.c.b16 %v3759, %v3758
  %v3829 = vpack.c.b16 %v3761, %v3760
  %v3830 = vpack.c.b16 %v3763, %v3762
  %v3831 = vpack.c.b16 %v3765, %v3764
  %v3832 = vpack.c.b16 %v3767, %v3766
  %v3833 = vpack.c.b16 %v3769, %v3768
  %3898 = vmatprep.subr.bf16.mxu0 0
  %3899 = vmatpush1.bf16.msra.mxu0 %v3770
  %3900 = vmatprep.subr.bf16.mxu0 0
  %3901 = vmatpush1.bf16.msra.mxu0 %v3771
  %3902 = vmatprep.subr.bf16.mxu0 0
  %3903 = vmatpush1.bf16.msra.mxu0 %v3772
  %3904 = vmatprep.subr.bf16.mxu0 0
  %3905 = vmatpush1.bf16.msra.mxu0 %v3773
  %3906 = vmatprep.subr.bf16.mxu0 0
  %3907 = vmatpush1.bf16.msra.mxu0 %v3774
  %3908 = vmatprep.subr.bf16.mxu0 0
  %3909 = vmatpush1.bf16.msra.mxu0 %v3775
  %3910 = vmatprep.subr.bf16.mxu0 0
  %3911 = vmatpush1.bf16.msra.mxu0 %v3776
  %3912 = vmatprep.subr.bf16.mxu0 0
  %3913 = vmatpush1.bf16.msra.mxu0 %v3777
  %3914 = vmatprep.subr.bf16.mxu0 0
  %3915 = vmatpush1.bf16.msra.mxu0 %v3778
  %3916 = vmatprep.subr.bf16.mxu0 0
  %3917 = vmatpush1.bf16.msra.mxu0 %v3779
  %3918 = vmatprep.subr.bf16.mxu0 0
  %3919 = vmatpush1.bf16.msra.mxu0 %v3780
  %3920 = vmatprep.subr.bf16.mxu0 0
  %3921 = vmatpush1.bf16.msra.mxu0 %v3781
  %3922 = vmatprep.subr.bf16.mxu0 0
  %3923 = vmatpush1.bf16.msra.mxu0 %v3782
  %3924 = vmatprep.subr.bf16.mxu0 0
  %3925 = vmatpush1.bf16.msra.mxu0 %v3783
  %3926 = vmatprep.subr.bf16.mxu0 0
  %3927 = vmatpush1.bf16.msra.mxu0 %v3784
  %3928 = vmatprep.subr.bf16.mxu0 0
  %3929 = vmatpush1.bf16.msra.mxu0 %v3785
  %3930 = vmatprep.mubr.bf16.mxu0 %v3379
  %3931 = vmatmul.mubr.bf16.gmra.mrb[0].mxu0 %v3378
  %v3932 = vpop.f32.mrb[0].mxu0
  %v3933 = vadd.f32 0.0, %v3932
  %v3934 = vpop.f32.mrb[0].mxu0
  %v3935 = vpop.f32.mrb[0].mxu0
  %v3936 = vpop.f32.mrb[0].mxu0
  %3937 = vdwg.mxu0
  %3938 = vmatprep.subr.bf16.mxu0 0
  %3939 = vmatpush1.bf16.msra.mxu0 %v3786
  %3940 = vmatprep.subr.bf16.mxu0 0
  %3941 = vmatpush1.bf16.msra.mxu0 %v3787
  %3942 = vmatprep.subr.bf16.mxu0 0
  %3943 = vmatpush1.bf16.msra.mxu0 %v3788
  %3944 = vmatprep.subr.bf16.mxu0 0
  %3945 = vmatpush1.bf16.msra.mxu0 %v3789
  %3946 = vmatprep.subr.bf16.mxu0 0
  %3947 = vmatpush1.bf16.msra.mxu0 %v3790
  %3948 = vmatprep.subr.bf16.mxu0 0
  %3949 = vmatpush1.bf16.msra.mxu0 %v3791
  %3950 = vmatprep.subr.bf16.mxu0 0
  %3951 = vmatpush1.bf16.msra.mxu0 %v3792
  %3952 = vmatprep.subr.bf16.mxu0 0
  %3953 = vmatpush1.bf16.msra.mxu0 %v3793
  %3954 = vmatprep.subr.bf16.mxu0 0
  %3955 = vmatpush1.bf16.msra.mxu0 %v3794
  %3956 = vmatprep.subr.bf16.mxu0 0
  %3957 = vmatpush1.bf16.msra.mxu0 %v3795
  %3958 = vmatprep.subr.bf16.mxu0 0
  %3959 = vmatpush1.bf16.msra.mxu0 %v3796
  %3960 = vmatprep.subr.bf16.mxu0 0
  %3961 = vmatpush1.bf16.msra.mxu0 %v3797
  %3962 = vmatprep.subr.bf16.mxu0 0
  %3963 = vmatpush1.bf16.msra.mxu0 %v3798
  %3964 = vmatprep.subr.bf16.mxu0 0
  %3965 = vmatpush1.bf16.msra.mxu0 %v3799
  %3966 = vmatprep.subr.bf16.mxu0 0
  %3967 = vmatpush1.bf16.msra.mxu0 %v3800
  %3968 = vmatprep.subr.bf16.mxu0 0
  %3969 = vmatpush1.bf16.msra.mxu0 %v3801
  %3970 = vmatprep.mubr.bf16.mxu0 %v3381
  %3971 = vmatmul.mubr.bf16.gmra.mrb[0].mxu0 %v3380
  %v3972 = vpop.f32.mrb[0].mxu0
  %v3973 = vadd.f32 %v3933, %v3972
  %v3974 = vpop.f32.mrb[0].mxu0
  %v3975 = vpop.f32.mrb[0].mxu0
  %v3976 = vpop.f32.mrb[0].mxu0
  %3977 = vdwg.mxu0
  %3978 = vmatprep.subr.bf16.mxu0 0
  %3979 = vmatpush1.bf16.msra.mxu0 %v3802
  %3980 = vmatprep.subr.bf16.mxu0 0
  %3981 = vmatpush1.bf16.msra.mxu0 %v3803
  %3982 = vmatprep.subr.bf16.mxu0 0
  %3983 = vmatpush1.bf16.msra.mxu0 %v3804
  %3984 = vmatprep.subr.bf16.mxu0 0
  %3985 = vmatpush1.bf16.msra.mxu0 %v3805
  %3986 = vmatprep.subr.bf16.mxu0 0
  %3987 = vmatpush1.bf16.msra.mxu0 %v3806
  %3988 = vmatprep.subr.bf16.mxu0 0
  %3989 = vmatpush1.bf16.msra.mxu0 %v3807
  %3990 = vmatprep.subr.bf16.mxu0 0
  %3991 = vmatpush1.bf16.msra.mxu0 %v3808
  %3992 = vmatprep.subr.bf16.mxu0 0
  %3993 = vmatpush1.bf16.msra.mxu0 %v3809
  %3994 = vmatprep.subr.bf16.mxu0 0
  %3995 = vmatpush1.bf16.msra.mxu0 %v3810
  %3996 = vmatprep.subr.bf16.mxu0 0
  %3997 = vmatpush1.bf16.msra.mxu0 %v3811
  %3998 = vmatprep.subr.bf16.mxu0 0
  %3999 = vmatpush1.bf16.msra.mxu0 %v3812
  %4000 = vmatprep.subr.bf16.mxu0 0
  %4001 = vmatpush1.bf16.msra.mxu0 %v3813
  %4002 = vmatprep.subr.bf16.mxu0 0
  %4003 = vmatpush1.bf16.msra.mxu0 %v3814
  %4004 = vmatprep.subr.bf16.mxu0 0
  %4005 = vmatpush1.bf16.msra.mxu0 %v3815
  %4006 = vmatprep.subr.bf16.mxu0 0
  %4007 = vmatpush1.bf16.msra.mxu0 %v3816
  %4008 = vmatprep.subr.bf16.mxu0 0
  %4009 = vmatpush1.bf16.msra.mxu0 %v3817
  %4010 = vmatprep.mubr.bf16.mxu0 %v3383
  %4011 = vmatmul.mubr.bf16.gmra.mrb[0].mxu0 %v3382
  %v4012 = vpop.f32.mrb[0].mxu0
  %v4013 = vadd.f32 %v3973, %v4012
  %v4014 = vpop.f32.mrb[0].mxu0
  %v4015 = vpop.f32.mrb[0].mxu0
  %v4016 = vpop.f32.mrb[0].mxu0
  %4017 = vdwg.mxu0
  %4018 = vmatprep.subr.bf16.mxu0 0
  %4019 = vmatpush1.bf16.msra.mxu0 %v3818
  %4020 = vmatprep.subr.bf16.mxu0 0
  %4021 = vmatpush1.bf16.msra.mxu0 %v3819
  %4022 = vmatprep.subr.bf16.mxu0 0
  %4023 = vmatpush1.bf16.msra.mxu0 %v3820
  %4024 = vmatprep.subr.bf16.mxu0 0
  %4025 = vmatpush1.bf16.msra.mxu0 %v3821
  %4026 = vmatprep.subr.bf16.mxu0 0
  %4027 = vmatpush1.bf16.msra.mxu0 %v3822
  %4028 = vmatprep.subr.bf16.mxu0 0
  %4029 = vmatpush1.bf16.msra.mxu0 %v3823
  %4030 = vmatprep.subr.bf16.mxu0 0
  %4031 = vmatpush1.bf16.msra.mxu0 %v3824
  %4032 = vmatprep.subr.bf16.mxu0 0
  %4033 = vmatpush1.bf16.msra.mxu0 %v3825
  %4034 = vmatprep.subr.bf16.mxu0 0
  %4035 = vmatpush1.bf16.msra.mxu0 %v3826
  %4036 = vmatprep.subr.bf16.mxu0 0
  %4037 = vmatpush1.bf16.msra.mxu0 %v3827
  %4038 = vmatprep.subr.bf16.mxu0 0
  %4039 = vmatpush1.bf16.msra.mxu0 %v3828
  %4040 = vmatprep.subr.bf16.mxu0 0
  %4041 = vmatpush1.bf16.msra.mxu0 %v3829
  %4042 = vmatprep.subr.bf16.mxu0 0
  %4043 = vmatpush1.bf16.msra.mxu0 %v3830
  %4044 = vmatprep.subr.bf16.mxu0 0
  %4045 = vmatpush1.bf16.msra.mxu0 %v3831
  %4046 = vmatprep.subr.bf16.mxu0 0
  %4047 = vmatpush1.bf16.msra.mxu0 %v3832
  %4048 = vmatprep.subr.bf16.mxu0 0
  %4049 = vmatpush1.bf16.msra.mxu0 %v3833
  %4050 = vmatprep.mubr.bf16.mxu0 %v3385
  %4051 = vmatmul.mubr.bf16.gmra.mrb[0].mxu0 %v3384
  %v4052 = vpop.f32.mrb[0].mxu0
  %v4053 = vadd.f32 %v4013, %v4052
  %v4054 = vpop.f32.mrb[0].mxu0
  %v4055 = vpop.f32.mrb[0].mxu0
  %v4056 = vpop.f32.mrb[0].mxu0
  %4057 = vdwg.mxu0
  %v4058 = vadd.f32 %v2975, %v780
  %v4059 = vadd.f32 %v4058, %v4053
  %v4061 = vrot.slane %v4053, 2
  %4062 = vrot.lane.b32.xlu0 %v4061, 96
  %v4063 = vpop.permute.xlu0 %4062
  %v4065 = vadd.f32 %v2982, %v4063
  %v4066 = vadd.f32 %v4065, %v1049
  %v4067 = vadd.f32 %v2991, %v1193
  %4068 = vrot.lane.b32.xlu0 %v4053, 64
  %v4069 = vpop.permute.xlu0 %4068
  %v4071 = vadd.f32 %v4067, %v4069
  %4072 = vrot.lane.b32.xlu0 %v4061, 32
  %v4073 = vpop.permute.xlu0 %4072
  %v4075 = vadd.f32 %v4071, %v4073
  %v4076 = vadd.f32 %v889, %v4075
  %v4077 = vxor.u32 %v4076, 2147483648
  %v4078 = vmul.f32 %v4077, 1.442695
  %v4079 = vpow.pop %v4078
  %v4080 = vadd.f32 %v4079, 1.0
  %v4081 = vrcp.pop %v4080
  %v4082 = vmul.f32 1.0, %v4081
  %v4083 = vsub.f32 %v4059, %v4066
  %v4084 = vmul.f32 %v4082, %v4083
  %v4085 = vadd.f32 %v4066, %v4084
  %v4087 = vrot.slane %v4085, 6
  %v4089 = vsel %vm1923, %v4059, %v4087
  %v4090 = vpack.c.bf16 %v4089, %v4089
  %v4091 = vld [vmem:[%s12] sm:$0xff]
  %v4092 = vld [vmem:[%s12 + $0x8] sm:$0xff]
  %v4093 = vld [vmem:[%s12 + $0x10] sm:$0xff]
  %v4094 = vld [vmem:[%s12 + $0x18] sm:$0xff]
  %v4095 = vld [vmem:[%s12 + $0x20] sm:$0xff]
  %v4096 = vld [vmem:[%s12 + $0x28] sm:$0xff]
  %v4097 = vld [vmem:[%s12 + $0x30] sm:$0xff]
  %v4098 = vld [vmem:[%s12 + $0x38] sm:$0xff]
  %v4099 = vld [vmem:[%s12 + $0x40] sm:$0xff]
  %v4100 = vld [vmem:[%s12 + $0x48] sm:$0xff]
  %v4101 = vld [vmem:[%s12 + $0x50] sm:$0xff]
  %v4102 = vld [vmem:[%s12 + $0x58] sm:$0xff]
  %v4103 = vld [vmem:[%s12 + $0x60] sm:$0xff]
  %v4104 = vld [vmem:[%s12 + $0x68] sm:$0xff]
  %v4105 = vld [vmem:[%s12 + $0x70] sm:$0xff]
  %v4106 = vld [vmem:[%s12 + $0x78] sm:$0xff]
  %v4107 = vld [vmem:[%s13] sm:$0xff]
  %v4109 = vlaneseq
  %v4110 = vshrl.u32 %v4109, 7
  %v4111 = vsub.s32 0, %v4110
  %v4112 = vrot.slane %v4107, %v4111
  %v4113 = vlaneseq
  %v4114 = vshrl.u32 %v4113, 7
  %v4115 = vsub.s32 1, %v4114
  %v4116 = vrot.slane %v4107, %v4115
  %v4117 = vlaneseq
  %v4118 = vshrl.u32 %v4117, 7
  %v4119 = vsub.s32 2, %v4118
  %v4120 = vrot.slane %v4107, %v4119
  %v4121 = vlaneseq
  %v4122 = vshrl.u32 %v4121, 7
  %v4123 = vsub.s32 3, %v4122
  %v4124 = vrot.slane %v4107, %v4123
  %v4125 = vlaneseq
  %v4126 = vshrl.u32 %v4125, 7
  %v4127 = vsub.s32 4, %v4126
  %v4128 = vrot.slane %v4107, %v4127
  %v4129 = vlaneseq
  %v4130 = vshrl.u32 %v4129, 7
  %v4131 = vsub.s32 5, %v4130
  %v4132 = vrot.slane %v4107, %v4131
  %v4133 = vlaneseq
  %v4134 = vshrl.u32 %v4133, 7
  %v4135 = vsub.s32 6, %v4134
  %v4136 = vrot.slane %v4107, %v4135
  %v4137 = vlaneseq
  %v4138 = vshrl.u32 %v4137, 7
  %v4139 = vsub.s32 7, %v4138
  %v4140 = vrot.slane %v4107, %v4139
  %v4165 = vunpack.c.l.b16 %v4091
  %v4166 = vunpack.c.h.b16 %v4091
  %v4167 = vunpack.c.l.b16 %v4092
  %v4168 = vunpack.c.h.b16 %v4092
  %v4169 = vunpack.c.l.b16 %v4093
  %v4170 = vunpack.c.h.b16 %v4093
  %v4171 = vunpack.c.l.b16 %v4094
  %v4172 = vunpack.c.h.b16 %v4094
  %v4173 = vunpack.c.l.b16 %v4095
  %v4174 = vunpack.c.h.b16 %v4095
  %v4175 = vunpack.c.l.b16 %v4096
  %v4176 = vunpack.c.h.b16 %v4096
  %v4177 = vunpack.c.l.b16 %v4097
  %v4178 = vunpack.c.h.b16 %v4097
  %v4179 = vunpack.c.l.b16 %v4098
  %v4180 = vunpack.c.h.b16 %v4098
  %v4181 = vunpack.c.l.b16 %v4099
  %v4182 = vunpack.c.h.b16 %v4099
  %v4183 = vunpack.c.l.b16 %v4100
  %v4184 = vunpack.c.h.b16 %v4100
  %v4185 = vunpack.c.l.b16 %v4101
  %v4186 = vunpack.c.h.b16 %v4101
  %v4187 = vunpack.c.l.b16 %v4102
  %v4188 = vunpack.c.h.b16 %v4102
  %v4189 = vunpack.c.l.b16 %v4103
  %v4190 = vunpack.c.h.b16 %v4103
  %v4191 = vunpack.c.l.b16 %v4104
  %v4192 = vunpack.c.h.b16 %v4104
  %v4193 = vunpack.c.l.b16 %v4105
  %v4194 = vunpack.c.h.b16 %v4105
  %v4195 = vunpack.c.l.b16 %v4106
  %v4196 = vunpack.c.h.b16 %v4106
  %v4197 = vpack.c.b16 %v4173, %v4165
  %v4198 = vpack.c.b16 %v4174, %v4166
  %v4199 = vpack.c.b16 %v4175, %v4167
  %v4200 = vpack.c.b16 %v4176, %v4168
  %v4201 = vpack.c.b16 %v4177, %v4169
  %v4202 = vpack.c.b16 %v4178, %v4170
  %v4203 = vpack.c.b16 %v4179, %v4171
  %v4204 = vpack.c.b16 %v4180, %v4172
  %v4205 = vpack.c.b16 %v4189, %v4181
  %v4206 = vpack.c.b16 %v4190, %v4182
  %v4207 = vpack.c.b16 %v4191, %v4183
  %v4208 = vpack.c.b16 %v4192, %v4184
  %v4209 = vpack.c.b16 %v4193, %v4185
  %v4210 = vpack.c.b16 %v4194, %v4186
  %v4211 = vpack.c.b16 %v4195, %v4187
  %v4212 = vpack.c.b16 %v4196, %v4188
  %v4230 = vsel %vm787, %v4090, 0
  %4232 = vmatprep.subr.bf16.mxu0 %v4198
  %4233 = vmatpush1.bf16.msra.mxu0 %v4197
  %4234 = vmatprep.subr.bf16.mxu0 %v4206
  %4235 = vmatpush1.bf16.msra.mxu0 %v4205
  %4236 = vmatprep.subr.bf16.mxu0 0
  %4237 = vmatpush1.bf16.msra.mxu0 0
  %4238 = vmatprep.subr.bf16.mxu0 0
  %4239 = vmatpush1.bf16.msra.mxu0 0
  %4240 = vmatprep.subr.bf16.mxu0 0
  %4241 = vmatpush1.bf16.msra.mxu0 0
  %4242 = vmatprep.subr.bf16.mxu0 0
  %4243 = vmatpush1.bf16.msra.mxu0 0
  %4244 = vmatprep.subr.bf16.mxu0 0
  %4245 = vmatpush1.bf16.msra.mxu0 0
  %4246 = vmatprep.subr.bf16.mxu0 0
  %4247 = vmatpush1.bf16.msra.mxu0 0
  %4248 = vmatprep.subr.bf16.mxu0 0
  %4249 = vmatpush1.bf16.msra.mxu0 0
  %4250 = vmatprep.subr.bf16.mxu0 0
  %4251 = vmatpush1.bf16.msra.mxu0 0
  %4252 = vmatprep.subr.bf16.mxu0 0
  %4253 = vmatpush1.bf16.msra.mxu0 0
  %4254 = vmatprep.subr.bf16.mxu0 0
  %4255 = vmatpush1.bf16.msra.mxu0 0
  %4256 = vmatprep.subr.bf16.mxu0 0
  %4257 = vmatpush1.bf16.msra.mxu0 0
  %4258 = vmatprep.subr.bf16.mxu0 0
  %4259 = vmatpush1.bf16.msra.mxu0 0
  %4260 = vmatprep.subr.bf16.mxu0 0
  %4261 = vmatpush1.bf16.msra.mxu0 0
  %4262 = vmatprep.subr.bf16.mxu0 0
  %4263 = vmatpush1.bf16.msra.mxu0 0
  %4264 = vmatprep.mubr.bf16.mxu0 0
  %4265 = vmatmul.mubr.bf16.gmra.mrb[0].mxu0 %v4230
  %v4266 = vpop.f32.mrb[0].mxu0
  %v4267 = vadd.f32 %v4112, %v4266
  %v4268 = vpop.f32.mrb[0].mxu0
  %v4269 = vadd.f32 %v4116, %v4268
  %v4270 = vpop.f32.mrb[0].mxu0
  %v4271 = vpop.f32.mrb[0].mxu0
  %4272 = vdwg.mxu0
  %4273 = vmatprep.subr.bf16.mxu0 %v4200
  %4274 = vmatpush1.bf16.msra.mxu0 %v4199
  %4275 = vmatprep.subr.bf16.mxu0 %v4208
  %4276 = vmatpush1.bf16.msra.mxu0 %v4207
  %4277 = vmatprep.subr.bf16.mxu0 0
  %4278 = vmatpush1.bf16.msra.mxu0 0
  %4279 = vmatprep.subr.bf16.mxu0 0
  %4280 = vmatpush1.bf16.msra.mxu0 0
  %4281 = vmatprep.subr.bf16.mxu0 0
  %4282 = vmatpush1.bf16.msra.mxu0 0
  %4283 = vmatprep.subr.bf16.mxu0 0
  %4284 = vmatpush1.bf16.msra.mxu0 0
  %4285 = vmatprep.subr.bf16.mxu0 0
  %4286 = vmatpush1.bf16.msra.mxu0 0
  %4287 = vmatprep.subr.bf16.mxu0 0
  %4288 = vmatpush1.bf16.msra.mxu0 0
  %4289 = vmatprep.subr.bf16.mxu0 0
  %4290 = vmatpush1.bf16.msra.mxu0 0
  %4291 = vmatprep.subr.bf16.mxu0 0
  %4292 = vmatpush1.bf16.msra.mxu0 0
  %4293 = vmatprep.subr.bf16.mxu0 0
  %4294 = vmatpush1.bf16.msra.mxu0 0
  %4295 = vmatprep.subr.bf16.mxu0 0
  %4296 = vmatpush1.bf16.msra.mxu0 0
  %4297 = vmatprep.subr.bf16.mxu0 0
  %4298 = vmatpush1.bf16.msra.mxu0 0
  %4299 = vmatprep.subr.bf16.mxu0 0
  %4300 = vmatpush1.bf16.msra.mxu0 0
  %4301 = vmatprep.subr.bf16.mxu0 0
  %4302 = vmatpush1.bf16.msra.mxu0 0
  %4303 = vmatprep.subr.bf16.mxu0 0
  %4304 = vmatpush1.bf16.msra.mxu0 0
  %4305 = vmatprep.mubr.bf16.mxu0 0
  %4306 = vmatmul.mubr.bf16.gmra.mrb[0].mxu0 %v4230
  %v4307 = vpop.f32.mrb[0].mxu0
  %v4308 = vadd.f32 %v4120, %v4307
  %v4309 = vpop.f32.mrb[0].mxu0
  %v4310 = vadd.f32 %v4124, %v4309
  %v4311 = vpop.f32.mrb[0].mxu0
  %v4312 = vpop.f32.mrb[0].mxu0
  %4313 = vdwg.mxu0
  %4314 = vmatprep.subr.bf16.mxu0 %v4202
  %4315 = vmatpush1.bf16.msra.mxu0 %v4201
  %4316 = vmatprep.subr.bf16.mxu0 %v4210
  %4317 = vmatpush1.bf16.msra.mxu0 %v4209
  %4318 = vmatprep.subr.bf16.mxu0 0
  %4319 = vmatpush1.bf16.msra.mxu0 0
  %4320 = vmatprep.subr.bf16.mxu0 0
  %4321 = vmatpush1.bf16.msra.mxu0 0
  %4322 = vmatprep.subr.bf16.mxu0 0
  %4323 = vmatpush1.bf16.msra.mxu0 0
  %4324 = vmatprep.subr.bf16.mxu0 0
  %4325 = vmatpush1.bf16.msra.mxu0 0
  %4326 = vmatprep.subr.bf16.mxu0 0
  %4327 = vmatpush1.bf16.msra.mxu0 0
  %4328 = vmatprep.subr.bf16.mxu0 0
  %4329 = vmatpush1.bf16.msra.mxu0 0
  %4330 = vmatprep.subr.bf16.mxu0 0
  %4331 = vmatpush1.bf16.msra.mxu0 0
  %4332 = vmatprep.subr.bf16.mxu0 0
  %4333 = vmatpush1.bf16.msra.mxu0 0
  %4334 = vmatprep.subr.bf16.mxu0 0
  %4335 = vmatpush1.bf16.msra.mxu0 0
  %4336 = vmatprep.subr.bf16.mxu0 0
  %4337 = vmatpush1.bf16.msra.mxu0 0
  %4338 = vmatprep.subr.bf16.mxu0 0
  %4339 = vmatpush1.bf16.msra.mxu0 0
  %4340 = vmatprep.subr.bf16.mxu0 0
  %4341 = vmatpush1.bf16.msra.mxu0 0
  %4342 = vmatprep.subr.bf16.mxu0 0
  %4343 = vmatpush1.bf16.msra.mxu0 0
  %4344 = vmatprep.subr.bf16.mxu0 0
  %4345 = vmatpush1.bf16.msra.mxu0 0
  %4346 = vmatprep.mubr.bf16.mxu0 0
  %4347 = vmatmul.mubr.bf16.gmra.mrb[0].mxu0 %v4230
  %v4348 = vpop.f32.mrb[0].mxu0
  %v4349 = vadd.f32 %v4128, %v4348
  %v4350 = vpop.f32.mrb[0].mxu0
  %v4351 = vadd.f32 %v4132, %v4350
  %v4352 = vpop.f32.mrb[0].mxu0
  %v4353 = vpop.f32.mrb[0].mxu0
  %4354 = vdwg.mxu0
  %4355 = vmatprep.subr.bf16.mxu0 %v4204
  %4356 = vmatpush1.bf16.msra.mxu0 %v4203
  %4357 = vmatprep.subr.bf16.mxu0 %v4212
  %4358 = vmatpush1.bf16.msra.mxu0 %v4211
  %4359 = vmatprep.subr.bf16.mxu0 0
  %4360 = vmatpush1.bf16.msra.mxu0 0
  %4361 = vmatprep.subr.bf16.mxu0 0
  %4362 = vmatpush1.bf16.msra.mxu0 0
  %4363 = vmatprep.subr.bf16.mxu0 0
  %4364 = vmatpush1.bf16.msra.mxu0 0
  %4365 = vmatprep.subr.bf16.mxu0 0
  %4366 = vmatpush1.bf16.msra.mxu0 0
  %4367 = vmatprep.subr.bf16.mxu0 0
  %4368 = vmatpush1.bf16.msra.mxu0 0
  %4369 = vmatprep.subr.bf16.mxu0 0
  %4370 = vmatpush1.bf16.msra.mxu0 0
  %4371 = vmatprep.subr.bf16.mxu0 0
  %4372 = vmatpush1.bf16.msra.mxu0 0
  %4373 = vmatprep.subr.bf16.mxu0 0
  %4374 = vmatpush1.bf16.msra.mxu0 0
  %4375 = vmatprep.subr.bf16.mxu0 0
  %4376 = vmatpush1.bf16.msra.mxu0 0
  %4377 = vmatprep.subr.bf16.mxu0 0
  %4378 = vmatpush1.bf16.msra.mxu0 0
  %4379 = vmatprep.subr.bf16.mxu0 0
  %4380 = vmatpush1.bf16.msra.mxu0 0
  %4381 = vmatprep.subr.bf16.mxu0 0
  %4382 = vmatpush1.bf16.msra.mxu0 0
  %4383 = vmatprep.subr.bf16.mxu0 0
  %4384 = vmatpush1.bf16.msra.mxu0 0
  %4385 = vmatprep.subr.bf16.mxu0 0
  %4386 = vmatpush1.bf16.msra.mxu0 0
  %4387 = vmatprep.mubr.bf16.mxu0 0
  %4388 = vmatmul.mubr.bf16.gmra.mrb[0].mxu0 %v4230
  %v4389 = vpop.f32.mrb[0].mxu0
  %v4390 = vadd.f32 %v4136, %v4389
  %v4391 = vpop.f32.mrb[0].mxu0
  %v4392 = vadd.f32 %v4140, %v4391
  %v4393 = vpop.f32.mrb[0].mxu0
  %v4394 = vpop.f32.mrb[0].mxu0
  %4395 = vdwg.mxu0
  %v4396 = vtanh.pop %v4267
  %v4397 = vtanh.pop %v4269
  %v4398 = vtanh.pop %v4308
  %v4399 = vtanh.pop %v4310
  %v4400 = vtanh.pop %v4349
  %v4401 = vtanh.pop %v4351
  %v4402 = vtanh.pop %v4390
  %v4403 = vtanh.pop %v4392
  %v4412 = vcombine.low %v4396, %v4397
  %v4413 = vcombine.low %v4398, %v4399
  %v4415 = vunpack.c.l.s4 1983009808
  %v4416 = vunpack.c.0.s8 %v4415
  %v4417 = vlaneseq
  %v4418 = vshrl.u32 %v4417, 7
  %v4419 = vsub.s32 %v4416, %v4418
  %v4420 = vrot.slane %v4412, %v4419
  %v4422 = vunpack.c.l.s4 1983009808
  %v4423 = vunpack.c.0.s8 %v4422
  %v4424 = vlaneseq
  %v4425 = vshrl.u32 %v4424, 7
  %v4426 = vsub.s32 %v4423, %v4425
  %v4427 = vrot.slane %v4413, %v4426
  %v4428 = vcombine.low %v4420, %v4427
  %v4429 = vcombine.low %v4400, %v4401
  %v4430 = vcombine.low %v4402, %v4403
  %v4432 = vunpack.c.l.s4 1983009808
  %v4433 = vunpack.c.0.s8 %v4432
  %v4434 = vlaneseq
  %v4435 = vshrl.u32 %v4434, 7
  %v4436 = vsub.s32 %v4433, %v4435
  %v4437 = vrot.slane %v4429, %v4436
  %v4439 = vunpack.c.l.s4 1983009808
  %v4440 = vunpack.c.0.s8 %v4439
  %v4441 = vlaneseq
  %v4442 = vshrl.u32 %v4441, 7
  %v4443 = vsub.s32 %v4440, %v4442
  %v4444 = vrot.slane %v4430, %v4443
  %v4445 = vcombine.low %v4437, %v4444
  %s4448 = scalar_lea.vmem %s15, 32
  %4449 = vst [vmem:[%s4448] sm:$0xff] %v4428
  %4450 = vst [vmem:[%s4448 + $0x8] sm:$0xff] %v4445
  %v4451 = vcombine.high %v4420, %v4427
  %v4452 = vcombine.high %v4437, %v4444
  %s4455 = scalar_lea.vmem %s14, 32
  %4456 = vst [vmem:[%s4455] sm:$0xff] %v4451
  %4457 = vst [vmem:[%s4455 + $0x8] sm:$0xff] %v4452
  %s4458 = scalar_lea.vmem %s16, 4
  %4459 = vst.msk [vmem:[%s4458] sm:$0x3] %vm2291, %v4066
  %s4460 = scalar_lea.vmem %s17, 4
  %4461 = vst.msk [vmem:[%s4460] sm:$0x3] %vm2291, %v4059
  // Predicated region
  $region58: #{_forward.1} parent=0 // pred_check
    _
  $region59: #{_forward.1} parent=0 // pred_check_branch
    %4463 = sbr.rel (0) target = $region61
  $region60: #{_forward.1} parent=0 // pred_region
    _
  $region61: #{_forward.1} parent=0 // pred_fallthru
    _
  // Predicated region
  $region62: #{_forward.1} parent=0 // pred_check
    _
  $region63: #{_forward.1} parent=0 // pred_check_branch
    %4465 = sbr.rel (0) target = $region65
  $region64: #{_forward.1} parent=0 // pred_region
    _
  $region65: #{_forward.1} parent=0 // pred_fallthru
    _
  // Predicated region
  $region66: #{_forward.1} parent=0 // pred_check
    _
  $region67: #{_forward.1} parent=0 // pred_check_branch
    %4467 = sbr.rel (0) target = $region69
  $region68: #{_forward.1} parent=0 // pred_region
    _
  $region69: #{_forward.1} parent=0 // pred_fallthru
    _
  // Predicated region
  $region70: #{_forward.1} parent=0 // pred_check
    _
  $region71: #{_forward.1} parent=0 // pred_check_branch
    %4469 = sbr.rel (0) target = $region73
  $region72: #{_forward.1} parent=0 // pred_region
    _
  $region73: #{_forward.1} parent=0 // pred_fallthru
    _
  // Predicated region
  $region74: #{_forward.1} parent=0 // pred_check
    _
  $region75: #{_forward.1} parent=0 // pred_check_branch
    %4471 = sbr.rel (0) target = $region77
  $region76: #{_forward.1} parent=0 // pred_region
    _
  $region77: #{_forward.1} parent=0 // pred_fallthru
    _
  // Predicated region
  $region78: #{_forward.1} parent=0 // pred_check
    _
  $region79: #{_forward.1} parent=0 // pred_check_branch
    %4473 = sbr.rel (0) target = $region81
  $region80: #{_forward.1} parent=0 // pred_region
    _
  $region81: #{_forward.1} parent=0 // pred_fallthru
    _
  // Predicated region
  $region82: #{_forward.1} parent=0 // pred_check
    _
  $region83: #{_forward.1} parent=0 // pred_check_branch
    %4475 = sbr.rel (0) target = $region85
  $region84: #{_forward.1} parent=0 // pred_region
    _
  $region85: #{_forward.1} parent=0 // pred_fallthru
    _
  // Predicated region
  $region86: #{_forward.1} parent=0 // pred_check
    _
  $region87: #{_forward.1} parent=0 // pred_check_branch
    %4477 = sbr.rel (0) target = $region89
  $region88: #{_forward.1} parent=0 // pred_region
    _
  $region89: #{_forward.1} parent=0 // pred_fallthru
    _

</llo_original>
